<compile_context>
chip_gen: v7x
topology: tpu7x:2x2x1
jax: 0.10.0
libtpu: 0.0.40
codegen_flags: <defaults>
</compile_context>

<pallas_src>
import jax
import jax.numpy as jnp
import numpy as np
from jax.experimental import pallas as pl
from jax.experimental.pallas import tpu as pltpu


# --------------------------------------------------------------------------- #
# Kernel                                                                       #
# --------------------------------------------------------------------------- #
def _lstm_kernel(x_ref, w0_ref, b0_ref, w1_ref, b1_ref, wfc_ref, bfc_ref, out_ref):
    T, BB, _ = x_ref.shape                 # (T, BB, Fp) time-major, bf16
    Hp = b0_ref.shape[1] // 4              # padded hidden (multiple of 128)

    w0 = w0_ref[...]                       # (Fp+Hp, 4Hp) bf16  -- fused [Wih;Whh] layer 0
    w1 = w1_ref[...]                       # (2Hp,  4Hp) bf16   -- fused [Wih;Whh] layer 1
    # Hoist bias broadcasts out of the time loop.
    b0 = jnp.broadcast_to(b0_ref[...], (BB, 4 * Hp))
    b1 = jnp.broadcast_to(b1_ref[...], (BB, 4 * Hp))

    def cell(gates, c_prev):
        # PyTorch gate order [i, f, g, o]; slices are lane-aligned (Hp % 128 == 0).
        i = jax.nn.sigmoid(gates[:, 0 * Hp:1 * Hp])
        f = jax.nn.sigmoid(gates[:, 1 * Hp:2 * Hp])
        g = jnp.tanh(gates[:, 2 * Hp:3 * Hp])
        o = jax.nn.sigmoid(gates[:, 3 * Hp:4 * Hp])
        c_new = f * c_prev + i * g
        h_new = o * jnp.tanh(c_new)
        return h_new, c_new

    def step(t, carry):
        h0, c0, h1, c1 = carry
        x_t = x_ref[t]                                            # (BB, Fp) bf16
        g0 = jnp.dot(jnp.concatenate([x_t, h0.astype(jnp.bfloat16)], axis=-1),
                     w0, preferred_element_type=jnp.float32) + b0
        h0, c0 = cell(g0, c0)
        g1 = jnp.dot(jnp.concatenate([h0.astype(jnp.bfloat16),
                                      h1.astype(jnp.bfloat16)], axis=-1),
                     w1, preferred_element_type=jnp.float32) + b1
        h1, c1 = cell(g1, c1)
        return h0, c0, h1, c1

    z = jnp.zeros((BB, Hp), jnp.float32)
    _, _, h1, _ = jax.lax.fori_loop(0, T, step, (z, z, z, z), unroll=True)

    # fc on the last time step's layer-1 hidden state: fc(out[:, -1, :]).
    out_ref[...] = (jnp.dot(h1.astype(jnp.bfloat16), wfc_ref[...],
                            preferred_element_type=jnp.float32)
                    + bfc_ref[...])


# --------------------------------------------------------------------------- #
# Host-side wrapper (padding, weight fusion, pallas_call)                      #
# --------------------------------------------------------------------------- #
def _round_up(n, m):
    return ((n + m - 1) // m) * m


def _pad_axis(a, target, axis):
    pad = target - a.shape[axis]
    if pad <= 0:
        return a
    widths = [(0, 0)] * a.ndim
    widths[axis] = (0, pad)
    return jnp.pad(a, widths)


def _pad_gates(w, hp):
    """(4H, ...) -> (4*hp, ...): zero-pad each PyTorch gate block [i, f, g, o]."""
    h = w.shape[0] // 4
    w4 = w.reshape(4, h, *w.shape[1:])
    w4 = _pad_axis(w4, hp, 1)
    return w4.reshape(4 * hp, *w.shape[1:])


def lstm_model_forward(x, params):
    """x: (B, T, F) float32 (batch_first, like PyTorch). Returns (B, output_size)."""
    B, T, F = x.shape
    H = params["whh0"].shape[1]          # (4H, H)
    OUT = params["wfc"].shape[0]         # (OUT, H)

    LANE = 128
    Hp = _round_up(H, LANE)
    Fp = _round_up(F, LANE)
    OUTp = _round_up(OUT, LANE)

    if B <= 128:                          # pad batch to sublane multiple
        Bp = _round_up(B, 8)
        BB = Bp
    else:                                 # tile large batches in 128-row blocks
        Bp = _round_up(B, 128)
        BB = 128
    NB = Bp // BB

    f32, bf16 = jnp.float32, jnp.bfloat16

    # x: batch_first -> time-major, pad batch & feature dims, bf16 MXU operand.
    x_tm = jnp.transpose(x, (1, 0, 2)).astype(f32)                      # (T, B, F)
    x_tm = _pad_axis(_pad_axis(x_tm, Bp, 1), Fp, 2).astype(bf16)        # (T, Bp, Fp)

    def fused_layer_weight(wih, whh, in_p):
        wih_p = _pad_axis(_pad_gates(wih, Hp), in_p, 1)   # (4Hp, in_p)
        whh_p = _pad_axis(_pad_gates(whh, Hp), Hp, 1)     # (4Hp, Hp)
        w = jnp.concatenate([wih_p, whh_p], axis=1)       # (4Hp, in_p + Hp)
        return jnp.transpose(w).astype(bf16)              # (in_p + Hp, 4Hp)

    w0 = fused_layer_weight(params["wih0"], params["whh0"], Fp)         # (Fp+Hp, 4Hp)
    w1 = fused_layer_weight(params["wih1"], params["whh1"], Hp)         # (2Hp, 4Hp)
    b0 = _pad_gates(params["bih0"] + params["bhh0"], Hp).reshape(1, 4 * Hp).astype(f32)
    b1 = _pad_gates(params["bih1"] + params["bhh1"], Hp).reshape(1, 4 * Hp).astype(f32)

    wfc = _pad_axis(_pad_axis(params["wfc"], OUTp, 0), Hp, 1)
    wfc = jnp.transpose(wfc).astype(bf16)                               # (Hp, OUTp)
    bfc = _pad_axis(params["bfc"], OUTp, 0).reshape(1, OUTp).astype(f32)

    # NOTE: for production sizes (e.g. H ~ 1024, long T) set
    # pltpu.CompilerParams(vmem_limit_bytes=...) per generation and chunk T.
    grid_spec = pltpu.PrefetchScalarGridSpec(
        num_scalar_prefetch=0,
        grid=(NB,),                                          # independent batch blocks
        in_specs=[
            pl.BlockSpec((T, BB, Fp), lambda i: (0, i, 0)),        # x, time-major
            pl.BlockSpec((Fp + Hp, 4 * Hp), lambda i: (0, 0)),     # fused W layer 0
            pl.BlockSpec((1, 4 * Hp), lambda i: (0, 0)),           # bias layer 0
            pl.BlockSpec((2 * Hp, 4 * Hp), lambda i: (0, 0)),      # fused W layer 1
            pl.BlockSpec((1, 4 * Hp), lambda i: (0, 0)),           # bias layer 1
            pl.BlockSpec((Hp, OUTp), lambda i: (0, 0)),            # fc weight
            pl.BlockSpec((1, OUTp), lambda i: (0, 0)),             # fc bias
        ],
        out_specs=pl.BlockSpec((BB, OUTp), lambda i: (i, 0)),
    )

    out_p = pl.pallas_call(
        _lstm_kernel,
        out_shape=jax.ShapeDtypeStruct((Bp, OUTp), jnp.float32),
        grid_spec=grid_spec,
        compiler_params=pltpu.CompilerParams(
            dimension_semantics=("parallel",)),   # batch blocks -> both TCs on v7x
    )(x_tm, w0, b0, w1, b1, wfc, bfc)

    return out_p[:B, :OUT]


# --------------------------------------------------------------------------- #
# Pure-JAX reference (matches PyTorch nn.LSTM eval + Linear semantics)         #
# --------------------------------------------------------------------------- #
def lstm_model_ref(x, params):
    B, T, F = x.shape

    def run_layer(inputs, wih, whh, bih, bhh):
        H = whh.shape[1]

        def step(carry, x_t):
            h, c = carry
            gates = x_t @ wih.T + bih + h @ whh.T + bhh
            i = jax.nn.sigmoid(gates[:, 0 * H:1 * H])
            f = jax.nn.sigmoid(gates[:, 1 * H:2 * H])
            g = jnp.tanh(gates[:, 2 * H:3 * H])
            o = jax.nn.sigmoid(gates[:, 3 * H:4 * H])
            c = f * c + i * g
            h = o * jnp.tanh(c)
            return (h, c), h

        init = (jnp.zeros((B, H), jnp.float32), jnp.zeros((B, H), jnp.float32))
        _, hs = jax.lax.scan(step, init, jnp.transpose(inputs, (1, 0, 2)))
        return jnp.transpose(hs, (1, 0, 2))

    h0_seq = run_layer(x, params["wih0"], params["whh0"],
                       params["bih0"], params["bhh0"])
    h1_seq = run_layer(h0_seq, params["wih1"], params["whh1"],
                       params["bih1"], params["bhh1"])
    return h1_seq[:, -1, :] @ params["wfc"].T + params["bfc"]


def init_params(key, input_size, hidden_size, output_size):
    H = hidden_size
    bound = 1.0 / np.sqrt(H)
    keys = jax.random.split(key, 10)
    u = lambda k, shape: jax.random.uniform(k, shape, jnp.float32, -bound, bound)
    return {
        "wih0": u(keys[0], (4 * H, input_size)),
        "whh0": u(keys[1], (4 * H, H)),
        "bih0": u(keys[2], (4 * H,)),
        "bhh0": u(keys[3], (4 * H,)),
        "wih1": u(keys[4], (4 * H, H)),
        "whh1": u(keys[5], (4 * H, H)),
        "bih1": u(keys[6], (4 * H,)),
        "bhh1": u(keys[7], (4 * H,)),
        "wfc":  u(keys[8], (output_size, H)),
        "bfc":  u(keys[9], (output_size,)),
    }


if __name__ == "__main__":
    B, T, F, H, OUT = 2, 8, 4, 32, 2   # batch, seq, input_size, hidden, output

    key = jax.random.PRNGKey(0)
    k_x, k_p = jax.random.split(key)
    x = jax.random.normal(k_x, (B, T, F), jnp.float32)
    params = init_params(k_p, F, H, OUT)

    out = jax.block_until_ready(lstm_model_forward(x, params))
    ref = jax.block_until_ready(lstm_model_ref(x, params))

    # Matmul operands are bf16 (MXU-native); tolerance loosened vs f32 reference.
    np.testing.assert_allclose(np.asarray(out), np.asarray(ref),
                               rtol=2e-2, atol=2e-2)

    print("KERNEL_OK")
</pallas_src>

<mosaic_0001>
module attributes {stable_mosaic.version = 11 : i64} {
  func.func @_lstm_kernel(%arg0: i32, %arg1: memref<8x8x128xbf16, #tpu.memory_space<vmem>>, %arg2: memref<256x512xbf16, #tpu.memory_space<vmem>>, %arg3: memref<1x512xf32, #tpu.memory_space<vmem>>, %arg4: memref<256x512xbf16, #tpu.memory_space<vmem>>, %arg5: memref<1x512xf32, #tpu.memory_space<vmem>>, %arg6: memref<128x128xbf16, #tpu.memory_space<vmem>>, %arg7: memref<1x128xf32, #tpu.memory_space<vmem>>, %arg8: memref<8x128xf32, #tpu.memory_space<vmem>>) attributes {dimension_semantics = [#tpu.dimension_semantics<parallel>], iteration_bounds = array<i64: 1>, scalar_prefetch = 0 : i64, scratch_operands = 0 : i64, tpu.core_type = #tpu.core_type<tc>, window_params = [{transform_indices = @transform_0, window_bounds = array<i64: 8, 8, 128>}, {pipeline_mode = #tpu.pipeline_mode<synchronous>, transform_indices = @transform_1, window_bounds = array<i64: 256, 512>}, {pipeline_mode = #tpu.pipeline_mode<synchronous>, transform_indices = @transform_2, window_bounds = array<i64: 1, 512>}, {pipeline_mode = #tpu.pipeline_mode<synchronous>, transform_indices = @transform_3, window_bounds = array<i64: 256, 512>}, {pipeline_mode = #tpu.pipeline_mode<synchronous>, transform_indices = @transform_4, window_bounds = array<i64: 1, 512>}, {pipeline_mode = #tpu.pipeline_mode<synchronous>, transform_indices = @transform_5, window_bounds = array<i64: 128, 128>}, {pipeline_mode = #tpu.pipeline_mode<synchronous>, transform_indices = @transform_6, window_bounds = array<i64: 1, 128>}, {transform_indices = @transform_7, window_bounds = array<i64: 8, 128>}]} {
    %c0 = arith.constant 0 : index
    %c0_0 = arith.constant 0 : index
    %0 = vector.load %arg2[%c0, %c0_0] : memref<256x512xbf16, #tpu.memory_space<vmem>>, vector<256x512xbf16>
    %c0_1 = arith.constant 0 : index
    %c0_2 = arith.constant 0 : index
    %1 = vector.load %arg4[%c0_1, %c0_2] : memref<256x512xbf16, #tpu.memory_space<vmem>>, vector<256x512xbf16>
    %c0_3 = arith.constant 0 : index
    %c0_4 = arith.constant 0 : index
    %2 = vector.load %arg3[%c0_3, %c0_4] : memref<1x512xf32, #tpu.memory_space<vmem>>, vector<1x512xf32>
    %3 = vector.shape_cast %2 : vector<1x512xf32> to vector<1x512xf32>
    %4 = vector.broadcast %3 : vector<1x512xf32> to vector<8x512xf32>
    %c0_5 = arith.constant 0 : index
    %c0_6 = arith.constant 0 : index
    %5 = vector.load %arg5[%c0_5, %c0_6] : memref<1x512xf32, #tpu.memory_space<vmem>>, vector<1x512xf32>
    %6 = vector.shape_cast %5 : vector<1x512xf32> to vector<1x512xf32>
    %7 = vector.broadcast %6 : vector<1x512xf32> to vector<8x512xf32>
    %cst = arith.constant 0.000000e+00 : f32
    %8 = vector.broadcast %cst : f32 to vector<8x128xf32>
    %c0_i32 = arith.constant 0 : i32
    %9 = arith.index_cast %c0_i32 : i32 to index
    %c0_7 = arith.constant 0 : index
    %c0_8 = arith.constant 0 : index
    %10 = vector.load %arg1[%9, %c0_7, %c0_8] : memref<8x8x128xbf16, #tpu.memory_space<vmem>>, vector<1x8x128xbf16>
    %11 = vector.shape_cast %10 : vector<1x8x128xbf16> to vector<8x128xbf16>
    %12 = arith.truncf %8 : vector<8x128xf32> to vector<8x128xbf16>
    %13 = tpu.concatenate %11, %12 in 1 : vector<8x128xbf16>, vector<8x128xbf16> -> vector<8x256xbf16>
    %cst_9 = arith.constant dense<0.000000e+00> : vector<8x512xf32>
    %14 = tpu.matmul %13, %0, %cst_9 {dimension_numbers = #tpu.dot_dimension_numbers<[1], [0], [0], [1], [0, 0, 1, 1], [], []>} : vector<8x256xbf16>, vector<256x512xbf16>, vector<8x512xf32> -> vector<8x512xf32>
    %15 = arith.addf %14, %4 : vector<8x512xf32>
    %16 = vector.extract_strided_slice %15 {offsets = [0, 0], sizes = [8, 128], strides = [1, 1]} : vector<8x512xf32> to vector<8x128xf32>
    %17 = arith.negf %16 : vector<8x128xf32>
    %18 = math.exp %17 : vector<8x128xf32>
    %cst_10 = arith.constant 1.000000e+00 : f32
    %19 = vector.broadcast %cst_10 : f32 to vector<8x128xf32>
    %20 = arith.addf %19, %18 : vector<8x128xf32>
    %21 = arith.divf %19, %20 : vector<8x128xf32>
    %22 = vector.extract_strided_slice %15 {offsets = [0, 128], sizes = [8, 128], strides = [1, 1]} : vector<8x512xf32> to vector<8x128xf32>
    %23 = arith.negf %22 : vector<8x128xf32>
    %24 = math.exp %23 : vector<8x128xf32>
    %cst_11 = arith.constant 1.000000e+00 : f32
    %25 = vector.broadcast %cst_11 : f32 to vector<8x128xf32>
    %26 = arith.addf %25, %24 : vector<8x128xf32>
    %27 = arith.divf %25, %26 : vector<8x128xf32>
    %28 = vector.extract_strided_slice %15 {offsets = [0, 256], sizes = [8, 128], strides = [1, 1]} : vector<8x512xf32> to vector<8x128xf32>
    %29 = math.tanh %28 : vector<8x128xf32>
    %30 = vector.extract_strided_slice %15 {offsets = [0, 384], sizes = [8, 128], strides = [1, 1]} : vector<8x512xf32> to vector<8x128xf32>
    %31 = arith.negf %30 : vector<8x128xf32>
    %32 = math.exp %31 : vector<8x128xf32>
    %cst_12 = arith.constant 1.000000e+00 : f32
    %33 = vector.broadcast %cst_12 : f32 to vector<8x128xf32>
    %34 = arith.addf %33, %32 : vector<8x128xf32>
    %35 = arith.divf %33, %34 : vector<8x128xf32>
    %36 = arith.mulf %27, %8 : vector<8x128xf32>
    %37 = arith.mulf %21, %29 : vector<8x128xf32>
    %38 = arith.addf %36, %37 : vector<8x128xf32>
    %39 = math.tanh %38 : vector<8x128xf32>
    %40 = arith.mulf %35, %39 : vector<8x128xf32>
    %41 = arith.truncf %40 : vector<8x128xf32> to vector<8x128xbf16>
    %42 = arith.truncf %8 : vector<8x128xf32> to vector<8x128xbf16>
    %43 = tpu.concatenate %41, %42 in 1 : vector<8x128xbf16>, vector<8x128xbf16> -> vector<8x256xbf16>
    %cst_13 = arith.constant dense<0.000000e+00> : vector<8x512xf32>
    %44 = tpu.matmul %43, %1, %cst_13 {dimension_numbers = #tpu.dot_dimension_numbers<[1], [0], [0], [1], [0, 0, 1, 1], [], []>} : vector<8x256xbf16>, vector<256x512xbf16>, vector<8x512xf32> -> vector<8x512xf32>
    %45 = arith.addf %44, %7 : vector<8x512xf32>
    %46 = vector.extract_strided_slice %45 {offsets = [0, 0], sizes = [8, 128], strides = [1, 1]} : vector<8x512xf32> to vector<8x128xf32>
    %47 = arith.negf %46 : vector<8x128xf32>
    %48 = math.exp %47 : vector<8x128xf32>
    %cst_14 = arith.constant 1.000000e+00 : f32
    %49 = vector.broadcast %cst_14 : f32 to vector<8x128xf32>
    %50 = arith.addf %49, %48 : vector<8x128xf32>
    %51 = arith.divf %49, %50 : vector<8x128xf32>
    %52 = vector.extract_strided_slice %45 {offsets = [0, 128], sizes = [8, 128], strides = [1, 1]} : vector<8x512xf32> to vector<8x128xf32>
    %53 = arith.negf %52 : vector<8x128xf32>
    %54 = math.exp %53 : vector<8x128xf32>
    %cst_15 = arith.constant 1.000000e+00 : f32
    %55 = vector.broadcast %cst_15 : f32 to vector<8x128xf32>
    %56 = arith.addf %55, %54 : vector<8x128xf32>
    %57 = arith.divf %55, %56 : vector<8x128xf32>
    %58 = vector.extract_strided_slice %45 {offsets = [0, 256], sizes = [8, 128], strides = [1, 1]} : vector<8x512xf32> to vector<8x128xf32>
    %59 = math.tanh %58 : vector<8x128xf32>
    %60 = vector.extract_strided_slice %45 {offsets = [0, 384], sizes = [8, 128], strides = [1, 1]} : vector<8x512xf32> to vector<8x128xf32>
    %61 = arith.negf %60 : vector<8x128xf32>
    %62 = math.exp %61 : vector<8x128xf32>
    %cst_16 = arith.constant 1.000000e+00 : f32
    %63 = vector.broadcast %cst_16 : f32 to vector<8x128xf32>
    %64 = arith.addf %63, %62 : vector<8x128xf32>
    %65 = arith.divf %63, %64 : vector<8x128xf32>
    %66 = arith.mulf %57, %8 : vector<8x128xf32>
    %67 = arith.mulf %51, %59 : vector<8x128xf32>
    %68 = arith.addf %66, %67 : vector<8x128xf32>
    %69 = math.tanh %68 : vector<8x128xf32>
    %70 = arith.mulf %65, %69 : vector<8x128xf32>
    %c1_i32 = arith.constant 1 : i32
    %71 = arith.index_cast %c1_i32 : i32 to index
    %c0_17 = arith.constant 0 : index
    %c0_18 = arith.constant 0 : index
    %72 = vector.load %arg1[%71, %c0_17, %c0_18] : memref<8x8x128xbf16, #tpu.memory_space<vmem>>, vector<1x8x128xbf16>
    %73 = vector.shape_cast %72 : vector<1x8x128xbf16> to vector<8x128xbf16>
    %74 = arith.truncf %40 : vector<8x128xf32> to vector<8x128xbf16>
    %75 = tpu.concatenate %73, %74 in 1 : vector<8x128xbf16>, vector<8x128xbf16> -> vector<8x256xbf16>
    %cst_19 = arith.constant dense<0.000000e+00> : vector<8x512xf32>
    %76 = tpu.matmul %75, %0, %cst_19 {dimension_numbers = #tpu.dot_dimension_numbers<[1], [0], [0], [1], [0, 0, 1, 1], [], []>} : vector<8x256xbf16>, vector<256x512xbf16>, vector<8x512xf32> -> vector<8x512xf32>
    %77 = arith.addf %76, %4 : vector<8x512xf32>
    %78 = vector.extract_strided_slice %77 {offsets = [0, 0], sizes = [8, 128], strides = [1, 1]} : vector<8x512xf32> to vector<8x128xf32>
    %79 = arith.negf %78 : vector<8x128xf32>
    %80 = math.exp %79 : vector<8x128xf32>
    %cst_20 = arith.constant 1.000000e+00 : f32
    %81 = vector.broadcast %cst_20 : f32 to vector<8x128xf32>
    %82 = arith.addf %81, %80 : vector<8x128xf32>
    %83 = arith.divf %81, %82 : vector<8x128xf32>
    %84 = vector.extract_strided_slice %77 {offsets = [0, 128], sizes = [8, 128], strides = [1, 1]} : vector<8x512xf32> to vector<8x128xf32>
    %85 = arith.negf %84 : vector<8x128xf32>
    %86 = math.exp %85 : vector<8x128xf32>
    %cst_21 = arith.constant 1.000000e+00 : f32
    %87 = vector.broadcast %cst_21 : f32 to vector<8x128xf32>
    %88 = arith.addf %87, %86 : vector<8x128xf32>
    %89 = arith.divf %87, %88 : vector<8x128xf32>
    %90 = vector.extract_strided_slice %77 {offsets = [0, 256], sizes = [8, 128], strides = [1, 1]} : vector<8x512xf32> to vector<8x128xf32>
    %91 = math.tanh %90 : vector<8x128xf32>
    %92 = vector.extract_strided_slice %77 {offsets = [0, 384], sizes = [8, 128], strides = [1, 1]} : vector<8x512xf32> to vector<8x128xf32>
    %93 = arith.negf %92 : vector<8x128xf32>
    %94 = math.exp %93 : vector<8x128xf32>
    %cst_22 = arith.constant 1.000000e+00 : f32
    %95 = vector.broadcast %cst_22 : f32 to vector<8x128xf32>
    %96 = arith.addf %95, %94 : vector<8x128xf32>
    %97 = arith.divf %95, %96 : vector<8x128xf32>
    %98 = arith.mulf %89, %38 : vector<8x128xf32>
    %99 = arith.mulf %83, %91 : vector<8x128xf32>
    %100 = arith.addf %98, %99 : vector<8x128xf32>
    %101 = math.tanh %100 : vector<8x128xf32>
    %102 = arith.mulf %97, %101 : vector<8x128xf32>
    %103 = arith.truncf %102 : vector<8x128xf32> to vector<8x128xbf16>
    %104 = arith.truncf %70 : vector<8x128xf32> to vector<8x128xbf16>
    %105 = tpu.concatenate %103, %104 in 1 : vector<8x128xbf16>, vector<8x128xbf16> -> vector<8x256xbf16>
    %cst_23 = arith.constant dense<0.000000e+00> : vector<8x512xf32>
    %106 = tpu.matmul %105, %1, %cst_23 {dimension_numbers = #tpu.dot_dimension_numbers<[1], [0], [0], [1], [0, 0, 1, 1], [], []>} : vector<8x256xbf16>, vector<256x512xbf16>, vector<8x512xf32> -> vector<8x512xf32>
    %107 = arith.addf %106, %7 : vector<8x512xf32>
    %108 = vector.extract_strided_slice %107 {offsets = [0, 0], sizes = [8, 128], strides = [1, 1]} : vector<8x512xf32> to vector<8x128xf32>
    %109 = arith.negf %108 : vector<8x128xf32>
    %110 = math.exp %109 : vector<8x128xf32>
    %cst_24 = arith.constant 1.000000e+00 : f32
    %111 = vector.broadcast %cst_24 : f32 to vector<8x128xf32>
    %112 = arith.addf %111, %110 : vector<8x128xf32>
    %113 = arith.divf %111, %112 : vector<8x128xf32>
    %114 = vector.extract_strided_slice %107 {offsets = [0, 128], sizes = [8, 128], strides = [1, 1]} : vector<8x512xf32> to vector<8x128xf32>
    %115 = arith.negf %114 : vector<8x128xf32>
    %116 = math.exp %115 : vector<8x128xf32>
    %cst_25 = arith.constant 1.000000e+00 : f32
    %117 = vector.broadcast %cst_25 : f32 to vector<8x128xf32>
    %118 = arith.addf %117, %116 : vector<8x128xf32>
    %119 = arith.divf %117, %118 : vector<8x128xf32>
    %120 = vector.extract_strided_slice %107 {offsets = [0, 256], sizes = [8, 128], strides = [1, 1]} : vector<8x512xf32> to vector<8x128xf32>
    %121 = math.tanh %120 : vector<8x128xf32>
    %122 = vector.extract_strided_slice %107 {offsets = [0, 384], sizes = [8, 128], strides = [1, 1]} : vector<8x512xf32> to vector<8x128xf32>
    %123 = arith.negf %122 : vector<8x128xf32>
    %124 = math.exp %123 : vector<8x128xf32>
    %cst_26 = arith.constant 1.000000e+00 : f32
    %125 = vector.broadcast %cst_26 : f32 to vector<8x128xf32>
    %126 = arith.addf %125, %124 : vector<8x128xf32>
    %127 = arith.divf %125, %126 : vector<8x128xf32>
    %128 = arith.mulf %119, %68 : vector<8x128xf32>
    %129 = arith.mulf %113, %121 : vector<8x128xf32>
    %130 = arith.addf %128, %129 : vector<8x128xf32>
    %131 = math.tanh %130 : vector<8x128xf32>
    %132 = arith.mulf %127, %131 : vector<8x128xf32>
    %c2_i32 = arith.constant 2 : i32
    %133 = arith.index_cast %c2_i32 : i32 to index
    %c0_27 = arith.constant 0 : index
    %c0_28 = arith.constant 0 : index
    %134 = vector.load %arg1[%133, %c0_27, %c0_28] : memref<8x8x128xbf16, #tpu.memory_space<vmem>>, vector<1x8x128xbf16>
    %135 = vector.shape_cast %134 : vector<1x8x128xbf16> to vector<8x128xbf16>
    %136 = arith.truncf %102 : vector<8x128xf32> to vector<8x128xbf16>
    %137 = tpu.concatenate %135, %136 in 1 : vector<8x128xbf16>, vector<8x128xbf16> -> vector<8x256xbf16>
    %cst_29 = arith.constant dense<0.000000e+00> : vector<8x512xf32>
    %138 = tpu.matmul %137, %0, %cst_29 {dimension_numbers = #tpu.dot_dimension_numbers<[1], [0], [0], [1], [0, 0, 1, 1], [], []>} : vector<8x256xbf16>, vector<256x512xbf16>, vector<8x512xf32> -> vector<8x512xf32>
    %139 = arith.addf %138, %4 : vector<8x512xf32>
    %140 = vector.extract_strided_slice %139 {offsets = [0, 0], sizes = [8, 128], strides = [1, 1]} : vector<8x512xf32> to vector<8x128xf32>
    %141 = arith.negf %140 : vector<8x128xf32>
    %142 = math.exp %141 : vector<8x128xf32>
    %cst_30 = arith.constant 1.000000e+00 : f32
    %143 = vector.broadcast %cst_30 : f32 to vector<8x128xf32>
    %144 = arith.addf %143, %142 : vector<8x128xf32>
    %145 = arith.divf %143, %144 : vector<8x128xf32>
    %146 = vector.extract_strided_slice %139 {offsets = [0, 128], sizes = [8, 128], strides = [1, 1]} : vector<8x512xf32> to vector<8x128xf32>
    %147 = arith.negf %146 : vector<8x128xf32>
    %148 = math.exp %147 : vector<8x128xf32>
    %cst_31 = arith.constant 1.000000e+00 : f32
    %149 = vector.broadcast %cst_31 : f32 to vector<8x128xf32>
    %150 = arith.addf %149, %148 : vector<8x128xf32>
    %151 = arith.divf %149, %150 : vector<8x128xf32>
    %152 = vector.extract_strided_slice %139 {offsets = [0, 256], sizes = [8, 128], strides = [1, 1]} : vector<8x512xf32> to vector<8x128xf32>
    %153 = math.tanh %152 : vector<8x128xf32>
    %154 = vector.extract_strided_slice %139 {offsets = [0, 384], sizes = [8, 128], strides = [1, 1]} : vector<8x512xf32> to vector<8x128xf32>
    %155 = arith.negf %154 : vector<8x128xf32>
    %156 = math.exp %155 : vector<8x128xf32>
    %cst_32 = arith.constant 1.000000e+00 : f32
    %157 = vector.broadcast %cst_32 : f32 to vector<8x128xf32>
    %158 = arith.addf %157, %156 : vector<8x128xf32>
    %159 = arith.divf %157, %158 : vector<8x128xf32>
    %160 = arith.mulf %151, %100 : vector<8x128xf32>
    %161 = arith.mulf %145, %153 : vector<8x128xf32>
    %162 = arith.addf %160, %161 : vector<8x128xf32>
    %163 = math.tanh %162 : vector<8x128xf32>
    %164 = arith.mulf %159, %163 : vector<8x128xf32>
    %165 = arith.truncf %164 : vector<8x128xf32> to vector<8x128xbf16>
    %166 = arith.truncf %132 : vector<8x128xf32> to vector<8x128xbf16>
    %167 = tpu.concatenate %165, %166 in 1 : vector<8x128xbf16>, vector<8x128xbf16> -> vector<8x256xbf16>
    %cst_33 = arith.constant dense<0.000000e+00> : vector<8x512xf32>
    %168 = tpu.matmul %167, %1, %cst_33 {dimension_numbers = #tpu.dot_dimension_numbers<[1], [0], [0], [1], [0, 0, 1, 1], [], []>} : vector<8x256xbf16>, vector<256x512xbf16>, vector<8x512xf32> -> vector<8x512xf32>
    %169 = arith.addf %168, %7 : vector<8x512xf32>
    %170 = vector.extract_strided_slice %169 {offsets = [0, 0], sizes = [8, 128], strides = [1, 1]} : vector<8x512xf32> to vector<8x128xf32>
    %171 = arith.negf %170 : vector<8x128xf32>
    %172 = math.exp %171 : vector<8x128xf32>
    %cst_34 = arith.constant 1.000000e+00 : f32
    %173 = vector.broadcast %cst_34 : f32 to vector<8x128xf32>
    %174 = arith.addf %173, %172 : vector<8x128xf32>
    %175 = arith.divf %173, %174 : vector<8x128xf32>
    %176 = vector.extract_strided_slice %169 {offsets = [0, 128], sizes = [8, 128], strides = [1, 1]} : vector<8x512xf32> to vector<8x128xf32>
    %177 = arith.negf %176 : vector<8x128xf32>
    %178 = math.exp %177 : vector<8x128xf32>
    %cst_35 = arith.constant 1.000000e+00 : f32
    %179 = vector.broadcast %cst_35 : f32 to vector<8x128xf32>
    %180 = arith.addf %179, %178 : vector<8x128xf32>
    %181 = arith.divf %179, %180 : vector<8x128xf32>
    %182 = vector.extract_strided_slice %169 {offsets = [0, 256], sizes = [8, 128], strides = [1, 1]} : vector<8x512xf32> to vector<8x128xf32>
    %183 = math.tanh %182 : vector<8x128xf32>
    %184 = vector.extract_strided_slice %169 {offsets = [0, 384], sizes = [8, 128], strides = [1, 1]} : vector<8x512xf32> to vector<8x128xf32>
    %185 = arith.negf %184 : vector<8x128xf32>
    %186 = math.exp %185 : vector<8x128xf32>
    %cst_36 = arith.constant 1.000000e+00 : f32
    %187 = vector.broadcast %cst_36 : f32 to vector<8x128xf32>
    %188 = arith.addf %187, %186 : vector<8x128xf32>
    %189 = arith.divf %187, %188 : vector<8x128xf32>
    %190 = arith.mulf %181, %130 : vector<8x128xf32>
    %191 = arith.mulf %175, %183 : vector<8x128xf32>
    %192 = arith.addf %190, %191 : vector<8x128xf32>
    %193 = math.tanh %192 : vector<8x128xf32>
    %194 = arith.mulf %189, %193 : vector<8x128xf32>
    %c3_i32 = arith.constant 3 : i32
    %195 = arith.index_cast %c3_i32 : i32 to index
    %c0_37 = arith.constant 0 : index
    %c0_38 = arith.constant 0 : index
    %196 = vector.load %arg1[%195, %c0_37, %c0_38] : memref<8x8x128xbf16, #tpu.memory_space<vmem>>, vector<1x8x128xbf16>
    %197 = vector.shape_cast %196 : vector<1x8x128xbf16> to vector<8x128xbf16>
    %198 = arith.truncf %164 : vector<8x128xf32> to vector<8x128xbf16>
    %199 = tpu.concatenate %197, %198 in 1 : vector<8x128xbf16>, vector<8x128xbf16> -> vector<8x256xbf16>
    %cst_39 = arith.constant dense<0.000000e+00> : vector<8x512xf32>
    %200 = tpu.matmul %199, %0, %cst_39 {dimension_numbers = #tpu.dot_dimension_numbers<[1], [0], [0], [1], [0, 0, 1, 1], [], []>} : vector<8x256xbf16>, vector<256x512xbf16>, vector<8x512xf32> -> vector<8x512xf32>
    %201 = arith.addf %200, %4 : vector<8x512xf32>
    %202 = vector.extract_strided_slice %201 {offsets = [0, 0], sizes = [8, 128], strides = [1, 1]} : vector<8x512xf32> to vector<8x128xf32>
    %203 = arith.negf %202 : vector<8x128xf32>
    %204 = math.exp %203 : vector<8x128xf32>
    %cst_40 = arith.constant 1.000000e+00 : f32
    %205 = vector.broadcast %cst_40 : f32 to vector<8x128xf32>
    %206 = arith.addf %205, %204 : vector<8x128xf32>
    %207 = arith.divf %205, %206 : vector<8x128xf32>
    %208 = vector.extract_strided_slice %201 {offsets = [0, 128], sizes = [8, 128], strides = [1, 1]} : vector<8x512xf32> to vector<8x128xf32>
    %209 = arith.negf %208 : vector<8x128xf32>
    %210 = math.exp %209 : vector<8x128xf32>
    %cst_41 = arith.constant 1.000000e+00 : f32
    %211 = vector.broadcast %cst_41 : f32 to vector<8x128xf32>
    %212 = arith.addf %211, %210 : vector<8x128xf32>
    %213 = arith.divf %211, %212 : vector<8x128xf32>
    %214 = vector.extract_strided_slice %201 {offsets = [0, 256], sizes = [8, 128], strides = [1, 1]} : vector<8x512xf32> to vector<8x128xf32>
    %215 = math.tanh %214 : vector<8x128xf32>
    %216 = vector.extract_strided_slice %201 {offsets = [0, 384], sizes = [8, 128], strides = [1, 1]} : vector<8x512xf32> to vector<8x128xf32>
    %217 = arith.negf %216 : vector<8x128xf32>
    %218 = math.exp %217 : vector<8x128xf32>
    %cst_42 = arith.constant 1.000000e+00 : f32
    %219 = vector.broadcast %cst_42 : f32 to vector<8x128xf32>
    %220 = arith.addf %219, %218 : vector<8x128xf32>
    %221 = arith.divf %219, %220 : vector<8x128xf32>
    %222 = arith.mulf %213, %162 : vector<8x128xf32>
    %223 = arith.mulf %207, %215 : vector<8x128xf32>
    %224 = arith.addf %222, %223 : vector<8x128xf32>
    %225 = math.tanh %224 : vector<8x128xf32>
    %226 = arith.mulf %221, %225 : vector<8x128xf32>
    %227 = arith.truncf %226 : vector<8x128xf32> to vector<8x128xbf16>
    %228 = arith.truncf %194 : vector<8x128xf32> to vector<8x128xbf16>
    %229 = tpu.concatenate %227, %228 in 1 : vector<8x128xbf16>, vector<8x128xbf16> -> vector<8x256xbf16>
    %cst_43 = arith.constant dense<0.000000e+00> : vector<8x512xf32>
    %230 = tpu.matmul %229, %1, %cst_43 {dimension_numbers = #tpu.dot_dimension_numbers<[1], [0], [0], [1], [0, 0, 1, 1], [], []>} : vector<8x256xbf16>, vector<256x512xbf16>, vector<8x512xf32> -> vector<8x512xf32>
    %231 = arith.addf %230, %7 : vector<8x512xf32>
    %232 = vector.extract_strided_slice %231 {offsets = [0, 0], sizes = [8, 128], strides = [1, 1]} : vector<8x512xf32> to vector<8x128xf32>
    %233 = arith.negf %232 : vector<8x128xf32>
    %234 = math.exp %233 : vector<8x128xf32>
    %cst_44 = arith.constant 1.000000e+00 : f32
    %235 = vector.broadcast %cst_44 : f32 to vector<8x128xf32>
    %236 = arith.addf %235, %234 : vector<8x128xf32>
    %237 = arith.divf %235, %236 : vector<8x128xf32>
    %238 = vector.extract_strided_slice %231 {offsets = [0, 128], sizes = [8, 128], strides = [1, 1]} : vector<8x512xf32> to vector<8x128xf32>
    %239 = arith.negf %238 : vector<8x128xf32>
    %240 = math.exp %239 : vector<8x128xf32>
    %cst_45 = arith.constant 1.000000e+00 : f32
    %241 = vector.broadcast %cst_45 : f32 to vector<8x128xf32>
    %242 = arith.addf %241, %240 : vector<8x128xf32>
    %243 = arith.divf %241, %242 : vector<8x128xf32>
    %244 = vector.extract_strided_slice %231 {offsets = [0, 256], sizes = [8, 128], strides = [1, 1]} : vector<8x512xf32> to vector<8x128xf32>
    %245 = math.tanh %244 : vector<8x128xf32>
    %246 = vector.extract_strided_slice %231 {offsets = [0, 384], sizes = [8, 128], strides = [1, 1]} : vector<8x512xf32> to vector<8x128xf32>
    %247 = arith.negf %246 : vector<8x128xf32>
    %248 = math.exp %247 : vector<8x128xf32>
    %cst_46 = arith.constant 1.000000e+00 : f32
    %249 = vector.broadcast %cst_46 : f32 to vector<8x128xf32>
    %250 = arith.addf %249, %248 : vector<8x128xf32>
    %251 = arith.divf %249, %250 : vector<8x128xf32>
    %252 = arith.mulf %243, %192 : vector<8x128xf32>
    %253 = arith.mulf %237, %245 : vector<8x128xf32>
    %254 = arith.addf %252, %253 : vector<8x128xf32>
    %255 = math.tanh %254 : vector<8x128xf32>
    %256 = arith.mulf %251, %255 : vector<8x128xf32>
    %c4_i32 = arith.constant 4 : i32
    %257 = arith.index_cast %c4_i32 : i32 to index
    %c0_47 = arith.constant 0 : index
    %c0_48 = arith.constant 0 : index
    %258 = vector.load %arg1[%257, %c0_47, %c0_48] : memref<8x8x128xbf16, #tpu.memory_space<vmem>>, vector<1x8x128xbf16>
    %259 = vector.shape_cast %258 : vector<1x8x128xbf16> to vector<8x128xbf16>
    %260 = arith.truncf %226 : vector<8x128xf32> to vector<8x128xbf16>
    %261 = tpu.concatenate %259, %260 in 1 : vector<8x128xbf16>, vector<8x128xbf16> -> vector<8x256xbf16>
    %cst_49 = arith.constant dense<0.000000e+00> : vector<8x512xf32>
    %262 = tpu.matmul %261, %0, %cst_49 {dimension_numbers = #tpu.dot_dimension_numbers<[1], [0], [0], [1], [0, 0, 1, 1], [], []>} : vector<8x256xbf16>, vector<256x512xbf16>, vector<8x512xf32> -> vector<8x512xf32>
    %263 = arith.addf %262, %4 : vector<8x512xf32>
    %264 = vector.extract_strided_slice %263 {offsets = [0, 0], sizes = [8, 128], strides = [1, 1]} : vector<8x512xf32> to vector<8x128xf32>
    %265 = arith.negf %264 : vector<8x128xf32>
    %266 = math.exp %265 : vector<8x128xf32>
    %cst_50 = arith.constant 1.000000e+00 : f32
    %267 = vector.broadcast %cst_50 : f32 to vector<8x128xf32>
    %268 = arith.addf %267, %266 : vector<8x128xf32>
    %269 = arith.divf %267, %268 : vector<8x128xf32>
    %270 = vector.extract_strided_slice %263 {offsets = [0, 128], sizes = [8, 128], strides = [1, 1]} : vector<8x512xf32> to vector<8x128xf32>
    %271 = arith.negf %270 : vector<8x128xf32>
    %272 = math.exp %271 : vector<8x128xf32>
    %cst_51 = arith.constant 1.000000e+00 : f32
    %273 = vector.broadcast %cst_51 : f32 to vector<8x128xf32>
    %274 = arith.addf %273, %272 : vector<8x128xf32>
    %275 = arith.divf %273, %274 : vector<8x128xf32>
    %276 = vector.extract_strided_slice %263 {offsets = [0, 256], sizes = [8, 128], strides = [1, 1]} : vector<8x512xf32> to vector<8x128xf32>
    %277 = math.tanh %276 : vector<8x128xf32>
    %278 = vector.extract_strided_slice %263 {offsets = [0, 384], sizes = [8, 128], strides = [1, 1]} : vector<8x512xf32> to vector<8x128xf32>
    %279 = arith.negf %278 : vector<8x128xf32>
    %280 = math.exp %279 : vector<8x128xf32>
    %cst_52 = arith.constant 1.000000e+00 : f32
    %281 = vector.broadcast %cst_52 : f32 to vector<8x128xf32>
    %282 = arith.addf %281, %280 : vector<8x128xf32>
    %283 = arith.divf %281, %282 : vector<8x128xf32>
    %284 = arith.mulf %275, %224 : vector<8x128xf32>
    %285 = arith.mulf %269, %277 : vector<8x128xf32>
    %286 = arith.addf %284, %285 : vector<8x128xf32>
    %287 = math.tanh %286 : vector<8x128xf32>
    %288 = arith.mulf %283, %287 : vector<8x128xf32>
    %289 = arith.truncf %288 : vector<8x128xf32> to vector<8x128xbf16>
    %290 = arith.truncf %256 : vector<8x128xf32> to vector<8x128xbf16>
    %291 = tpu.concatenate %289, %290 in 1 : vector<8x128xbf16>, vector<8x128xbf16> -> vector<8x256xbf16>
    %cst_53 = arith.constant dense<0.000000e+00> : vector<8x512xf32>
    %292 = tpu.matmul %291, %1, %cst_53 {dimension_numbers = #tpu.dot_dimension_numbers<[1], [0], [0], [1], [0, 0, 1, 1], [], []>} : vector<8x256xbf16>, vector<256x512xbf16>, vector<8x512xf32> -> vector<8x512xf32>
    %293 = arith.addf %292, %7 : vector<8x512xf32>
    %294 = vector.extract_strided_slice %293 {offsets = [0, 0], sizes = [8, 128], strides = [1, 1]} : vector<8x512xf32> to vector<8x128xf32>
    %295 = arith.negf %294 : vector<8x128xf32>
    %296 = math.exp %295 : vector<8x128xf32>
    %cst_54 = arith.constant 1.000000e+00 : f32
    %297 = vector.broadcast %cst_54 : f32 to vector<8x128xf32>
    %298 = arith.addf %297, %296 : vector<8x128xf32>
    %299 = arith.divf %297, %298 : vector<8x128xf32>
    %300 = vector.extract_strided_slice %293 {offsets = [0, 128], sizes = [8, 128], strides = [1, 1]} : vector<8x512xf32> to vector<8x128xf32>
    %301 = arith.negf %300 : vector<8x128xf32>
    %302 = math.exp %301 : vector<8x128xf32>
    %cst_55 = arith.constant 1.000000e+00 : f32
    %303 = vector.broadcast %cst_55 : f32 to vector<8x128xf32>
    %304 = arith.addf %303, %302 : vector<8x128xf32>
    %305 = arith.divf %303, %304 : vector<8x128xf32>
    %306 = vector.extract_strided_slice %293 {offsets = [0, 256], sizes = [8, 128], strides = [1, 1]} : vector<8x512xf32> to vector<8x128xf32>
    %307 = math.tanh %306 : vector<8x128xf32>
    %308 = vector.extract_strided_slice %293 {offsets = [0, 384], sizes = [8, 128], strides = [1, 1]} : vector<8x512xf32> to vector<8x128xf32>
    %309 = arith.negf %308 : vector<8x128xf32>
    %310 = math.exp %309 : vector<8x128xf32>
    %cst_56 = arith.constant 1.000000e+00 : f32
    %311 = vector.broadcast %cst_56 : f32 to vector<8x128xf32>
    %312 = arith.addf %311, %310 : vector<8x128xf32>
    %313 = arith.divf %311, %312 : vector<8x128xf32>
    %314 = arith.mulf %305, %254 : vector<8x128xf32>
    %315 = arith.mulf %299, %307 : vector<8x128xf32>
    %316 = arith.addf %314, %315 : vector<8x128xf32>
    %317 = math.tanh %316 : vector<8x128xf32>
    %318 = arith.mulf %313, %317 : vector<8x128xf32>
    %c5_i32 = arith.constant 5 : i32
    %319 = arith.index_cast %c5_i32 : i32 to index
    %c0_57 = arith.constant 0 : index
    %c0_58 = arith.constant 0 : index
    %320 = vector.load %arg1[%319, %c0_57, %c0_58] : memref<8x8x128xbf16, #tpu.memory_space<vmem>>, vector<1x8x128xbf16>
    %321 = vector.shape_cast %320 : vector<1x8x128xbf16> to vector<8x128xbf16>
    %322 = arith.truncf %288 : vector<8x128xf32> to vector<8x128xbf16>
    %323 = tpu.concatenate %321, %322 in 1 : vector<8x128xbf16>, vector<8x128xbf16> -> vector<8x256xbf16>
    %cst_59 = arith.constant dense<0.000000e+00> : vector<8x512xf32>
    %324 = tpu.matmul %323, %0, %cst_59 {dimension_numbers = #tpu.dot_dimension_numbers<[1], [0], [0], [1], [0, 0, 1, 1], [], []>} : vector<8x256xbf16>, vector<256x512xbf16>, vector<8x512xf32> -> vector<8x512xf32>
    %325 = arith.addf %324, %4 : vector<8x512xf32>
    %326 = vector.extract_strided_slice %325 {offsets = [0, 0], sizes = [8, 128], strides = [1, 1]} : vector<8x512xf32> to vector<8x128xf32>
    %327 = arith.negf %326 : vector<8x128xf32>
    %328 = math.exp %327 : vector<8x128xf32>
    %cst_60 = arith.constant 1.000000e+00 : f32
    %329 = vector.broadcast %cst_60 : f32 to vector<8x128xf32>
    %330 = arith.addf %329, %328 : vector<8x128xf32>
    %331 = arith.divf %329, %330 : vector<8x128xf32>
    %332 = vector.extract_strided_slice %325 {offsets = [0, 128], sizes = [8, 128], strides = [1, 1]} : vector<8x512xf32> to vector<8x128xf32>
    %333 = arith.negf %332 : vector<8x128xf32>
    %334 = math.exp %333 : vector<8x128xf32>
    %cst_61 = arith.constant 1.000000e+00 : f32
    %335 = vector.broadcast %cst_61 : f32 to vector<8x128xf32>
    %336 = arith.addf %335, %334 : vector<8x128xf32>
    %337 = arith.divf %335, %336 : vector<8x128xf32>
    %338 = vector.extract_strided_slice %325 {offsets = [0, 256], sizes = [8, 128], strides = [1, 1]} : vector<8x512xf32> to vector<8x128xf32>
    %339 = math.tanh %338 : vector<8x128xf32>
    %340 = vector.extract_strided_slice %325 {offsets = [0, 384], sizes = [8, 128], strides = [1, 1]} : vector<8x512xf32> to vector<8x128xf32>
    %341 = arith.negf %340 : vector<8x128xf32>
    %342 = math.exp %341 : vector<8x128xf32>
    %cst_62 = arith.constant 1.000000e+00 : f32
    %343 = vector.broadcast %cst_62 : f32 to vector<8x128xf32>
    %344 = arith.addf %343, %342 : vector<8x128xf32>
    %345 = arith.divf %343, %344 : vector<8x128xf32>
    %346 = arith.mulf %337, %286 : vector<8x128xf32>
    %347 = arith.mulf %331, %339 : vector<8x128xf32>
    %348 = arith.addf %346, %347 : vector<8x128xf32>
    %349 = math.tanh %348 : vector<8x128xf32>
    %350 = arith.mulf %345, %349 : vector<8x128xf32>
    %351 = arith.truncf %350 : vector<8x128xf32> to vector<8x128xbf16>
    %352 = arith.truncf %318 : vector<8x128xf32> to vector<8x128xbf16>
    %353 = tpu.concatenate %351, %352 in 1 : vector<8x128xbf16>, vector<8x128xbf16> -> vector<8x256xbf16>
    %cst_63 = arith.constant dense<0.000000e+00> : vector<8x512xf32>
    %354 = tpu.matmul %353, %1, %cst_63 {dimension_numbers = #tpu.dot_dimension_numbers<[1], [0], [0], [1], [0, 0, 1, 1], [], []>} : vector<8x256xbf16>, vector<256x512xbf16>, vector<8x512xf32> -> vector<8x512xf32>
    %355 = arith.addf %354, %7 : vector<8x512xf32>
    %356 = vector.extract_strided_slice %355 {offsets = [0, 0], sizes = [8, 128], strides = [1, 1]} : vector<8x512xf32> to vector<8x128xf32>
    %357 = arith.negf %356 : vector<8x128xf32>
    %358 = math.exp %357 : vector<8x128xf32>
    %cst_64 = arith.constant 1.000000e+00 : f32
    %359 = vector.broadcast %cst_64 : f32 to vector<8x128xf32>
    %360 = arith.addf %359, %358 : vector<8x128xf32>
    %361 = arith.divf %359, %360 : vector<8x128xf32>
    %362 = vector.extract_strided_slice %355 {offsets = [0, 128], sizes = [8, 128], strides = [1, 1]} : vector<8x512xf32> to vector<8x128xf32>
    %363 = arith.negf %362 : vector<8x128xf32>
    %364 = math.exp %363 : vector<8x128xf32>
    %cst_65 = arith.constant 1.000000e+00 : f32
    %365 = vector.broadcast %cst_65 : f32 to vector<8x128xf32>
    %366 = arith.addf %365, %364 : vector<8x128xf32>
    %367 = arith.divf %365, %366 : vector<8x128xf32>
    %368 = vector.extract_strided_slice %355 {offsets = [0, 256], sizes = [8, 128], strides = [1, 1]} : vector<8x512xf32> to vector<8x128xf32>
    %369 = math.tanh %368 : vector<8x128xf32>
    %370 = vector.extract_strided_slice %355 {offsets = [0, 384], sizes = [8, 128], strides = [1, 1]} : vector<8x512xf32> to vector<8x128xf32>
    %371 = arith.negf %370 : vector<8x128xf32>
    %372 = math.exp %371 : vector<8x128xf32>
    %cst_66 = arith.constant 1.000000e+00 : f32
    %373 = vector.broadcast %cst_66 : f32 to vector<8x128xf32>
    %374 = arith.addf %373, %372 : vector<8x128xf32>
    %375 = arith.divf %373, %374 : vector<8x128xf32>
    %376 = arith.mulf %367, %316 : vector<8x128xf32>
    %377 = arith.mulf %361, %369 : vector<8x128xf32>
    %378 = arith.addf %376, %377 : vector<8x128xf32>
    %379 = math.tanh %378 : vector<8x128xf32>
    %380 = arith.mulf %375, %379 : vector<8x128xf32>
    %c6_i32 = arith.constant 6 : i32
    %381 = arith.index_cast %c6_i32 : i32 to index
    %c0_67 = arith.constant 0 : index
    %c0_68 = arith.constant 0 : index
    %382 = vector.load %arg1[%381, %c0_67, %c0_68] : memref<8x8x128xbf16, #tpu.memory_space<vmem>>, vector<1x8x128xbf16>
    %383 = vector.shape_cast %382 : vector<1x8x128xbf16> to vector<8x128xbf16>
    %384 = arith.truncf %350 : vector<8x128xf32> to vector<8x128xbf16>
    %385 = tpu.concatenate %383, %384 in 1 : vector<8x128xbf16>, vector<8x128xbf16> -> vector<8x256xbf16>
    %cst_69 = arith.constant dense<0.000000e+00> : vector<8x512xf32>
    %386 = tpu.matmul %385, %0, %cst_69 {dimension_numbers = #tpu.dot_dimension_numbers<[1], [0], [0], [1], [0, 0, 1, 1], [], []>} : vector<8x256xbf16>, vector<256x512xbf16>, vector<8x512xf32> -> vector<8x512xf32>
    %387 = arith.addf %386, %4 : vector<8x512xf32>
    %388 = vector.extract_strided_slice %387 {offsets = [0, 0], sizes = [8, 128], strides = [1, 1]} : vector<8x512xf32> to vector<8x128xf32>
    %389 = arith.negf %388 : vector<8x128xf32>
    %390 = math.exp %389 : vector<8x128xf32>
    %cst_70 = arith.constant 1.000000e+00 : f32
    %391 = vector.broadcast %cst_70 : f32 to vector<8x128xf32>
    %392 = arith.addf %391, %390 : vector<8x128xf32>
    %393 = arith.divf %391, %392 : vector<8x128xf32>
    %394 = vector.extract_strided_slice %387 {offsets = [0, 128], sizes = [8, 128], strides = [1, 1]} : vector<8x512xf32> to vector<8x128xf32>
    %395 = arith.negf %394 : vector<8x128xf32>
    %396 = math.exp %395 : vector<8x128xf32>
    %cst_71 = arith.constant 1.000000e+00 : f32
    %397 = vector.broadcast %cst_71 : f32 to vector<8x128xf32>
    %398 = arith.addf %397, %396 : vector<8x128xf32>
    %399 = arith.divf %397, %398 : vector<8x128xf32>
    %400 = vector.extract_strided_slice %387 {offsets = [0, 256], sizes = [8, 128], strides = [1, 1]} : vector<8x512xf32> to vector<8x128xf32>
    %401 = math.tanh %400 : vector<8x128xf32>
    %402 = vector.extract_strided_slice %387 {offsets = [0, 384], sizes = [8, 128], strides = [1, 1]} : vector<8x512xf32> to vector<8x128xf32>
    %403 = arith.negf %402 : vector<8x128xf32>
    %404 = math.exp %403 : vector<8x128xf32>
    %cst_72 = arith.constant 1.000000e+00 : f32
    %405 = vector.broadcast %cst_72 : f32 to vector<8x128xf32>
    %406 = arith.addf %405, %404 : vector<8x128xf32>
    %407 = arith.divf %405, %406 : vector<8x128xf32>
    %408 = arith.mulf %399, %348 : vector<8x128xf32>
    %409 = arith.mulf %393, %401 : vector<8x128xf32>
    %410 = arith.addf %408, %409 : vector<8x128xf32>
    %411 = math.tanh %410 : vector<8x128xf32>
    %412 = arith.mulf %407, %411 : vector<8x128xf32>
    %413 = arith.truncf %412 : vector<8x128xf32> to vector<8x128xbf16>
    %414 = arith.truncf %380 : vector<8x128xf32> to vector<8x128xbf16>
    %415 = tpu.concatenate %413, %414 in 1 : vector<8x128xbf16>, vector<8x128xbf16> -> vector<8x256xbf16>
    %cst_73 = arith.constant dense<0.000000e+00> : vector<8x512xf32>
    %416 = tpu.matmul %415, %1, %cst_73 {dimension_numbers = #tpu.dot_dimension_numbers<[1], [0], [0], [1], [0, 0, 1, 1], [], []>} : vector<8x256xbf16>, vector<256x512xbf16>, vector<8x512xf32> -> vector<8x512xf32>
    %417 = arith.addf %416, %7 : vector<8x512xf32>
    %418 = vector.extract_strided_slice %417 {offsets = [0, 0], sizes = [8, 128], strides = [1, 1]} : vector<8x512xf32> to vector<8x128xf32>
    %419 = arith.negf %418 : vector<8x128xf32>
    %420 = math.exp %419 : vector<8x128xf32>
    %cst_74 = arith.constant 1.000000e+00 : f32
    %421 = vector.broadcast %cst_74 : f32 to vector<8x128xf32>
    %422 = arith.addf %421, %420 : vector<8x128xf32>
    %423 = arith.divf %421, %422 : vector<8x128xf32>
    %424 = vector.extract_strided_slice %417 {offsets = [0, 128], sizes = [8, 128], strides = [1, 1]} : vector<8x512xf32> to vector<8x128xf32>
    %425 = arith.negf %424 : vector<8x128xf32>
    %426 = math.exp %425 : vector<8x128xf32>
    %cst_75 = arith.constant 1.000000e+00 : f32
    %427 = vector.broadcast %cst_75 : f32 to vector<8x128xf32>
    %428 = arith.addf %427, %426 : vector<8x128xf32>
    %429 = arith.divf %427, %428 : vector<8x128xf32>
    %430 = vector.extract_strided_slice %417 {offsets = [0, 256], sizes = [8, 128], strides = [1, 1]} : vector<8x512xf32> to vector<8x128xf32>
    %431 = math.tanh %430 : vector<8x128xf32>
    %432 = vector.extract_strided_slice %417 {offsets = [0, 384], sizes = [8, 128], strides = [1, 1]} : vector<8x512xf32> to vector<8x128xf32>
    %433 = arith.negf %432 : vector<8x128xf32>
    %434 = math.exp %433 : vector<8x128xf32>
    %cst_76 = arith.constant 1.000000e+00 : f32
    %435 = vector.broadcast %cst_76 : f32 to vector<8x128xf32>
    %436 = arith.addf %435, %434 : vector<8x128xf32>
    %437 = arith.divf %435, %436 : vector<8x128xf32>
    %438 = arith.mulf %429, %378 : vector<8x128xf32>
    %439 = arith.mulf %423, %431 : vector<8x128xf32>
    %440 = arith.addf %438, %439 : vector<8x128xf32>
    %441 = math.tanh %440 : vector<8x128xf32>
    %442 = arith.mulf %437, %441 : vector<8x128xf32>
    %c7_i32 = arith.constant 7 : i32
    %443 = arith.index_cast %c7_i32 : i32 to index
    %c0_77 = arith.constant 0 : index
    %c0_78 = arith.constant 0 : index
    %444 = vector.load %arg1[%443, %c0_77, %c0_78] : memref<8x8x128xbf16, #tpu.memory_space<vmem>>, vector<1x8x128xbf16>
    %445 = vector.shape_cast %444 : vector<1x8x128xbf16> to vector<8x128xbf16>
    %446 = arith.truncf %412 : vector<8x128xf32> to vector<8x128xbf16>
    %447 = tpu.concatenate %445, %446 in 1 : vector<8x128xbf16>, vector<8x128xbf16> -> vector<8x256xbf16>
    %cst_79 = arith.constant dense<0.000000e+00> : vector<8x512xf32>
    %448 = tpu.matmul %447, %0, %cst_79 {dimension_numbers = #tpu.dot_dimension_numbers<[1], [0], [0], [1], [0, 0, 1, 1], [], []>} : vector<8x256xbf16>, vector<256x512xbf16>, vector<8x512xf32> -> vector<8x512xf32>
    %449 = arith.addf %448, %4 : vector<8x512xf32>
    %450 = vector.extract_strided_slice %449 {offsets = [0, 0], sizes = [8, 128], strides = [1, 1]} : vector<8x512xf32> to vector<8x128xf32>
    %451 = arith.negf %450 : vector<8x128xf32>
    %452 = math.exp %451 : vector<8x128xf32>
    %cst_80 = arith.constant 1.000000e+00 : f32
    %453 = vector.broadcast %cst_80 : f32 to vector<8x128xf32>
    %454 = arith.addf %453, %452 : vector<8x128xf32>
    %455 = arith.divf %453, %454 : vector<8x128xf32>
    %456 = vector.extract_strided_slice %449 {offsets = [0, 128], sizes = [8, 128], strides = [1, 1]} : vector<8x512xf32> to vector<8x128xf32>
    %457 = arith.negf %456 : vector<8x128xf32>
    %458 = math.exp %457 : vector<8x128xf32>
    %cst_81 = arith.constant 1.000000e+00 : f32
    %459 = vector.broadcast %cst_81 : f32 to vector<8x128xf32>
    %460 = arith.addf %459, %458 : vector<8x128xf32>
    %461 = arith.divf %459, %460 : vector<8x128xf32>
    %462 = vector.extract_strided_slice %449 {offsets = [0, 256], sizes = [8, 128], strides = [1, 1]} : vector<8x512xf32> to vector<8x128xf32>
    %463 = math.tanh %462 : vector<8x128xf32>
    %464 = vector.extract_strided_slice %449 {offsets = [0, 384], sizes = [8, 128], strides = [1, 1]} : vector<8x512xf32> to vector<8x128xf32>
    %465 = arith.negf %464 : vector<8x128xf32>
    %466 = math.exp %465 : vector<8x128xf32>
    %cst_82 = arith.constant 1.000000e+00 : f32
    %467 = vector.broadcast %cst_82 : f32 to vector<8x128xf32>
    %468 = arith.addf %467, %466 : vector<8x128xf32>
    %469 = arith.divf %467, %468 : vector<8x128xf32>
    %470 = arith.mulf %461, %410 : vector<8x128xf32>
    %471 = arith.mulf %455, %463 : vector<8x128xf32>
    %472 = arith.addf %470, %471 : vector<8x128xf32>
    %473 = math.tanh %472 : vector<8x128xf32>
    %474 = arith.mulf %469, %473 : vector<8x128xf32>
    %475 = arith.truncf %474 : vector<8x128xf32> to vector<8x128xbf16>
    %476 = arith.truncf %442 : vector<8x128xf32> to vector<8x128xbf16>
    %477 = tpu.concatenate %475, %476 in 1 : vector<8x128xbf16>, vector<8x128xbf16> -> vector<8x256xbf16>
    %cst_83 = arith.constant dense<0.000000e+00> : vector<8x512xf32>
    %478 = tpu.matmul %477, %1, %cst_83 {dimension_numbers = #tpu.dot_dimension_numbers<[1], [0], [0], [1], [0, 0, 1, 1], [], []>} : vector<8x256xbf16>, vector<256x512xbf16>, vector<8x512xf32> -> vector<8x512xf32>
    %479 = arith.addf %478, %7 : vector<8x512xf32>
    %480 = vector.extract_strided_slice %479 {offsets = [0, 0], sizes = [8, 128], strides = [1, 1]} : vector<8x512xf32> to vector<8x128xf32>
    %481 = arith.negf %480 : vector<8x128xf32>
    %482 = math.exp %481 : vector<8x128xf32>
    %cst_84 = arith.constant 1.000000e+00 : f32
    %483 = vector.broadcast %cst_84 : f32 to vector<8x128xf32>
    %484 = arith.addf %483, %482 : vector<8x128xf32>
    %485 = arith.divf %483, %484 : vector<8x128xf32>
    %486 = vector.extract_strided_slice %479 {offsets = [0, 128], sizes = [8, 128], strides = [1, 1]} : vector<8x512xf32> to vector<8x128xf32>
    %487 = arith.negf %486 : vector<8x128xf32>
    %488 = math.exp %487 : vector<8x128xf32>
    %cst_85 = arith.constant 1.000000e+00 : f32
    %489 = vector.broadcast %cst_85 : f32 to vector<8x128xf32>
    %490 = arith.addf %489, %488 : vector<8x128xf32>
    %491 = arith.divf %489, %490 : vector<8x128xf32>
    %492 = vector.extract_strided_slice %479 {offsets = [0, 256], sizes = [8, 128], strides = [1, 1]} : vector<8x512xf32> to vector<8x128xf32>
    %493 = math.tanh %492 : vector<8x128xf32>
    %494 = vector.extract_strided_slice %479 {offsets = [0, 384], sizes = [8, 128], strides = [1, 1]} : vector<8x512xf32> to vector<8x128xf32>
    %495 = arith.negf %494 : vector<8x128xf32>
    %496 = math.exp %495 : vector<8x128xf32>
    %cst_86 = arith.constant 1.000000e+00 : f32
    %497 = vector.broadcast %cst_86 : f32 to vector<8x128xf32>
    %498 = arith.addf %497, %496 : vector<8x128xf32>
    %499 = arith.divf %497, %498 : vector<8x128xf32>
    %500 = arith.mulf %491, %440 : vector<8x128xf32>
    %501 = arith.mulf %485, %493 : vector<8x128xf32>
    %502 = arith.addf %500, %501 : vector<8x128xf32>
    %503 = math.tanh %502 : vector<8x128xf32>
    %504 = arith.mulf %499, %503 : vector<8x128xf32>
    %c8_i32 = arith.constant 8 : i32
    %505 = arith.truncf %504 : vector<8x128xf32> to vector<8x128xbf16>
    %c0_87 = arith.constant 0 : index
    %c0_88 = arith.constant 0 : index
    %506 = vector.load %arg6[%c0_87, %c0_88] : memref<128x128xbf16, #tpu.memory_space<vmem>>, vector<128x128xbf16>
    %cst_89 = arith.constant dense<0.000000e+00> : vector<8x128xf32>
    %507 = tpu.matmul %505, %506, %cst_89 {dimension_numbers = #tpu.dot_dimension_numbers<[1], [0], [0], [1], [0, 0, 1, 1], [], []>} : vector<8x128xbf16>, vector<128x128xbf16>, vector<8x128xf32> -> vector<8x128xf32>
    %c0_90 = arith.constant 0 : index
    %c0_91 = arith.constant 0 : index
    %508 = vector.load %arg7[%c0_90, %c0_91] : memref<1x128xf32, #tpu.memory_space<vmem>>, vector<1x128xf32>
    %509 = vector.broadcast %508 : vector<1x128xf32> to vector<8x128xf32>
    %510 = arith.addf %507, %509 : vector<8x128xf32>
    %c0_92 = arith.constant 0 : index
    %c0_93 = arith.constant 0 : index
    %511 = vector.load %arg8[%c0_92, %c0_93] : memref<8x128xf32, #tpu.memory_space<vmem>>, vector<8x128xf32>
    tpu.vector_store %arg8[%c0_92, %c0_93], %510 {strides = array<i32>} : memref<8x128xf32, #tpu.memory_space<vmem>>, vector<8x128xf32>,
    return
  }
  func.func @transform_0(%arg0: i32) -> (i32, i32, i32) {
    %c0_i32 = arith.constant 0 : i32
    %c0_i32_0 = arith.constant 0 : i32
    %c0_i32_1 = arith.constant 0 : i32
    return %c0_i32, %arg0, %c0_i32_0 : i32, i32, i32
  }
  func.func @transform_1(%arg0: i32) -> (i32, i32) {
    %c0_i32 = arith.constant 0 : i32
    %c0_i32_0 = arith.constant 0 : i32
    %c0_i32_1 = arith.constant 0 : i32
    return %c0_i32, %c0_i32_0 : i32, i32
  }
  func.func @transform_2(%arg0: i32) -> (i32, i32) {
    %c0_i32 = arith.constant 0 : i32
    %c0_i32_0 = arith.constant 0 : i32
    %c0_i32_1 = arith.constant 0 : i32
    return %c0_i32, %c0_i32_0 : i32, i32
  }
  func.func @transform_3(%arg0: i32) -> (i32, i32) {
    %c0_i32 = arith.constant 0 : i32
    %c0_i32_0 = arith.constant 0 : i32
    %c0_i32_1 = arith.constant 0 : i32
    return %c0_i32, %c0_i32_0 : i32, i32
  }
  func.func @transform_4(%arg0: i32) -> (i32, i32) {
    %c0_i32 = arith.constant 0 : i32
    %c0_i32_0 = arith.constant 0 : i32
    %c0_i32_1 = arith.constant 0 : i32
    return %c0_i32, %c0_i32_0 : i32, i32
  }
  func.func @transform_5(%arg0: i32) -> (i32, i32) {
    %c0_i32 = arith.constant 0 : i32
    %c0_i32_0 = arith.constant 0 : i32
    %c0_i32_1 = arith.constant 0 : i32
    return %c0_i32, %c0_i32_0 : i32, i32
  }
  func.func @transform_6(%arg0: i32) -> (i32, i32) {
    %c0_i32 = arith.constant 0 : i32
    %c0_i32_0 = arith.constant 0 : i32
    %c0_i32_1 = arith.constant 0 : i32
    return %c0_i32, %c0_i32_0 : i32, i32
  }
  func.func @transform_7(%arg0: i32) -> (i32, i32) {
    %c0_i32 = arith.constant 0 : i32
    %c0_i32_0 = arith.constant 0 : i32
    return %arg0, %c0_i32 : i32, i32
  }
}

</mosaic_0001>

<llo_original>
// kernel: tpu_custom_call.1
$region0: #{tpu_custom_call.1}
  #allocation0 [shape = 'u32[]', space=smem, size = 0x4, offset = 0x4, fixed_abs, tag = 'smem constant byte address 0x4 - core index']
  #allocation1 [shape = 'u32[144,128]{1,0:T(1,128)}', space=vmem, size = 0x12000, scoped, tag = 'internal scratch']
  %s0 = inlined_call_operand.hbm [shape: bf16[8,8,128], index: 0, kind: input, shape index: {}]
  %s1 = inlined_call_operand.hbm [shape: bf16[256,512], index: 1, kind: input, shape index: {}]
  %s2 = inlined_call_operand.vmem [shape: f32[1,512], index: 2, kind: input, shape index: {}]
  %s3 = inlined_call_operand.hbm [shape: bf16[256,512], index: 3, kind: input, shape index: {}]
  %s4 = inlined_call_operand.vmem [shape: f32[1,512], index: 4, kind: input, shape index: {}]
  %s5 = inlined_call_operand.hbm [shape: bf16[128,128], index: 5, kind: input, shape index: {}]
  %s6 = inlined_call_operand.vmem [shape: f32[1,128], index: 6, kind: input, shape index: {}]
  %s7 = inlined_call_operand.hbm [shape: f32[8,128], index: 7, kind: output, shape index: {}]
  %s8 = sld [smem:[#allocation0]]
  $region54: #{tpu_custom_call.1} parent=0
    _
  %s10 = ssub.s32 1, %s8
  %s11 = scalar_select 0, %s10, %s8
  $region1: #{tpu_custom_call.1} parent=0
    #allocation2 [shape = 'u8[16384]{0}', space=vmem, size = 0x4000, scoped, tag = 'input window, operand 0, single buffered']
    #allocation3 [shape = 's32[1]{0}', space=sflag, size = 0x4, scoped, tag = 'scoped memory for tpu_custom_call.1']
    #allocation4 [shape = 's32[1]{0}', space=sflag, size = 0x4, scoped, tag = 'scoped memory for tpu_custom_call.1']
    #allocation5 [shape = 'u8[262144]{0}', space=vmem, size = 0x40000, scoped, tag = 'input window, operand 1, single buffered']
    #allocation6 [shape = 's32[1]{0}', space=sflag, size = 0x4, scoped, tag = 'scoped memory for tpu_custom_call.1']
    #allocation7 [shape = 'u8[262144]{0}', space=vmem, size = 0x40000, scoped, tag = 'input window, operand 3, single buffered']
    #allocation8 [shape = 'u8[32768]{0}', space=vmem, size = 0x8000, scoped, tag = 'input window, operand 5, single buffered']
    #allocation9 [shape = 's32[1]{0}', space=sflag, size = 0x4, scoped, tag = 'scoped memory for tpu_custom_call.1']
    #allocation10 [shape = 'u8[4096]{0}', space=vmem, size = 0x1000, scoped, tag = 'output window, operand 0, single buffered']
    %12 = vsyncpa [#allocation3], 0
    %13 = vsyncpa [#allocation6], 0
    %14 = vsyncpa [#allocation9], 0
    %15 = vsyncpa [#allocation4], 0
    // Predicated region
    $region2: #{tpu_custom_call.1} parent=1 // pred_check
      _
    $region3: #{tpu_custom_call.1} parent=1 // pred_check_branch
      %17 = sbr.rel (0) target = $region5
    $region4: #{tpu_custom_call.1} parent=1 // pred_region
      %s19 = ssub.s32 512, 512
      %20 = vsyncadd [#allocation3], %s19
      %s21 = sshll.u32 [#allocation2], 4
      %s22 = int_to_ptr.vmem [resolvable:$true] %s21
      %27 = dma.hbm_to_vmem [thread:$0]  %s0, 512, %s22, [#allocation3], 64, 64, 4
    $region5: #{tpu_custom_call.1} parent=1 // pred_fallthru
      _
    // Predicated region
    $region6: #{tpu_custom_call.1} parent=1 // pred_check
      _
    $region7: #{tpu_custom_call.1} parent=1 // pred_check_branch
      %29 = sbr.rel (0) target = $region9
    $region8: #{tpu_custom_call.1} parent=1 // pred_region
      %s31 = ssub.s32 8192, 8192
      %32 = vsyncadd [#allocation6], %s31
      %s33 = sshll.u32 [#allocation5], 4
      %s34 = int_to_ptr.vmem [resolvable:$true] %s33
      %39 = dma.hbm_to_vmem [thread:$0]  %s1, 8192, %s34, [#allocation6], 256, 256, 16
    $region9: #{tpu_custom_call.1} parent=1 // pred_fallthru
      _
    // Predicated region
    $region10: #{tpu_custom_call.1} parent=1 // pred_check
      _
    $region11: #{tpu_custom_call.1} parent=1 // pred_check_branch
      %41 = sbr.rel (0) target = $region13
    $region12: #{tpu_custom_call.1} parent=1 // pred_region
      _
    $region13: #{tpu_custom_call.1} parent=1 // pred_fallthru
      _
    // Predicated region
    $region14: #{tpu_custom_call.1} parent=1 // pred_check
      _
    $region15: #{tpu_custom_call.1} parent=1 // pred_check_branch
      %43 = sbr.rel (0) target = $region17
    $region16: #{tpu_custom_call.1} parent=1 // pred_region
      %s45 = ssub.s32 8192, 8192
      %46 = vsyncadd [#allocation6], %s45
      %s47 = sshll.u32 [#allocation7], 4
      %s48 = int_to_ptr.vmem [resolvable:$true] %s47
      %53 = dma.hbm_to_vmem [thread:$0]  %s3, 8192, %s48, [#allocation6], 256, 256, 16
    $region17: #{tpu_custom_call.1} parent=1 // pred_fallthru
      _
    // Predicated region
    $region18: #{tpu_custom_call.1} parent=1 // pred_check
      _
    $region19: #{tpu_custom_call.1} parent=1 // pred_check_branch
      %55 = sbr.rel (0) target = $region21
    $region20: #{tpu_custom_call.1} parent=1 // pred_region
      _
    $region21: #{tpu_custom_call.1} parent=1 // pred_fallthru
      _
    // Predicated region
    $region22: #{tpu_custom_call.1} parent=1 // pred_check
      _
    $region23: #{tpu_custom_call.1} parent=1 // pred_check_branch
      %57 = sbr.rel (0) target = $region25
    $region24: #{tpu_custom_call.1} parent=1 // pred_region
      %s59 = ssub.s32 1024, 1024
      %60 = vsyncadd [#allocation9], %s59
      %s61 = sshll.u32 [#allocation8], 4
      %s62 = int_to_ptr.vmem [resolvable:$true] %s61
      %67 = dma.hbm_to_vmem [thread:$0]  %s5, 1024, %s62, [#allocation9], 64, 64, 4
    $region25: #{tpu_custom_call.1} parent=1 // pred_fallthru
      _
    // Predicated region
    $region26: #{tpu_custom_call.1} parent=1 // pred_check
      _
    $region27: #{tpu_custom_call.1} parent=1 // pred_check_branch
      %69 = sbr.rel (0) target = $region29
    $region28: #{tpu_custom_call.1} parent=1 // pred_region
      _
    $region29: #{tpu_custom_call.1} parent=1 // pred_fallthru
      _
    // Predicated region
    $region30: #{tpu_custom_call.1} parent=1 // pred_check
      _
    $region31: #{tpu_custom_call.1} parent=1 // pred_check_branch
      %71 = sbr.rel (0) target = $region33
    $region32: #{tpu_custom_call.1} parent=1 // pred_region
      %72 = dma.done [#allocation3], 512
    $region33: #{tpu_custom_call.1} parent=1 // pred_fallthru
      _
    // Predicated region
    $region34: #{tpu_custom_call.1} parent=1 // pred_check
      _
    $region35: #{tpu_custom_call.1} parent=1 // pred_check_branch
      %74 = sbr.rel (0) target = $region37
    $region36: #{tpu_custom_call.1} parent=1 // pred_region
      %75 = dma.done [#allocation6], 8192
    $region37: #{tpu_custom_call.1} parent=1 // pred_fallthru
      _
    // Predicated region
    $region38: #{tpu_custom_call.1} parent=1 // pred_check
      _
    $region39: #{tpu_custom_call.1} parent=1 // pred_check_branch
      %77 = sbr.rel (0) target = $region41
    $region40: #{tpu_custom_call.1} parent=1 // pred_region
      %78 = dma.done [#allocation6], 8192
    $region41: #{tpu_custom_call.1} parent=1 // pred_fallthru
      _
    // Predicated region
    $region42: #{tpu_custom_call.1} parent=1 // pred_check
      _
    $region43: #{tpu_custom_call.1} parent=1 // pred_check_branch
      %80 = sbr.rel (0) target = $region45
    $region44: #{tpu_custom_call.1} parent=1 // pred_region
      %81 = dma.done [#allocation9], 1024
    $region45: #{tpu_custom_call.1} parent=1 // pred_fallthru
      _
    %v83 = vld [vmem:[#allocation5] sm:$0xff]
    %v84 = vld [vmem:[#allocation5 + $0x8] sm:$0xff]
    %v85 = vld [vmem:[#allocation5 + $0x10] sm:$0xff]
    %v86 = vld [vmem:[#allocation5 + $0x18] sm:$0xff]
    %v87 = vld [vmem:[#allocation5 + $0x20] sm:$0xff]
    %v88 = vld [vmem:[#allocation5 + $0x28] sm:$0xff]
    %v89 = vld [vmem:[#allocation5 + $0x30] sm:$0xff]
    %v90 = vld [vmem:[#allocation5 + $0x38] sm:$0xff]
    %v91 = vld [vmem:[#allocation5 + $0x40] sm:$0xff]
    %v92 = vld [vmem:[#allocation5 + $0x48] sm:$0xff]
    %v93 = vld [vmem:[#allocation5 + $0x50] sm:$0xff]
    %v94 = vld [vmem:[#allocation5 + $0x58] sm:$0xff]
    %v95 = vld [vmem:[#allocation5 + $0x60] sm:$0xff]
    %v96 = vld [vmem:[#allocation5 + $0x68] sm:$0xff]
    %v97 = vld [vmem:[#allocation5 + $0x70] sm:$0xff]
    %v98 = vld [vmem:[#allocation5 + $0x78] sm:$0xff]
    %v99 = vld [vmem:[#allocation5 + $0x80] sm:$0xff]
    %v100 = vld [vmem:[#allocation5 + $0x88] sm:$0xff]
    %v101 = vld [vmem:[#allocation5 + $0x90] sm:$0xff]
    %v102 = vld [vmem:[#allocation5 + $0x98] sm:$0xff]
    %v103 = vld [vmem:[#allocation5 + $0xa0] sm:$0xff]
    %v104 = vld [vmem:[#allocation5 + $0xa8] sm:$0xff]
    %v105 = vld [vmem:[#allocation5 + $0xb0] sm:$0xff]
    %v106 = vld [vmem:[#allocation5 + $0xb8] sm:$0xff]
    %v107 = vld [vmem:[#allocation5 + $0xc0] sm:$0xff]
    %v108 = vld [vmem:[#allocation5 + $0xc8] sm:$0xff]
    %v109 = vld [vmem:[#allocation5 + $0xd0] sm:$0xff]
    %v110 = vld [vmem:[#allocation5 + $0xd8] sm:$0xff]
    %v111 = vld [vmem:[#allocation5 + $0xe0] sm:$0xff]
    %v112 = vld [vmem:[#allocation5 + $0xe8] sm:$0xff]
    %v113 = vld [vmem:[#allocation5 + $0xf0] sm:$0xff]
    %v114 = vld [vmem:[#allocation5 + $0xf8] sm:$0xff]
    %v115 = vld [vmem:[#allocation5 + $0x100] sm:$0xff]
    %v116 = vld [vmem:[#allocation5 + $0x108] sm:$0xff]
    %v117 = vld [vmem:[#allocation5 + $0x110] sm:$0xff]
    %v118 = vld [vmem:[#allocation5 + $0x118] sm:$0xff]
    %v119 = vld [vmem:[#allocation5 + $0x120] sm:$0xff]
    %v120 = vld [vmem:[#allocation5 + $0x128] sm:$0xff]
    %v121 = vld [vmem:[#allocation5 + $0x130] sm:$0xff]
    %v122 = vld [vmem:[#allocation5 + $0x138] sm:$0xff]
    %v123 = vld [vmem:[#allocation5 + $0x140] sm:$0xff]
    %v124 = vld [vmem:[#allocation5 + $0x148] sm:$0xff]
    %v125 = vld [vmem:[#allocation5 + $0x150] sm:$0xff]
    %v126 = vld [vmem:[#allocation5 + $0x158] sm:$0xff]
    %v127 = vld [vmem:[#allocation5 + $0x160] sm:$0xff]
    %v128 = vld [vmem:[#allocation5 + $0x168] sm:$0xff]
    %v129 = vld [vmem:[#allocation5 + $0x170] sm:$0xff]
    %v130 = vld [vmem:[#allocation5 + $0x178] sm:$0xff]
    %v131 = vld [vmem:[#allocation5 + $0x180] sm:$0xff]
    %v132 = vld [vmem:[#allocation5 + $0x188] sm:$0xff]
    %v133 = vld [vmem:[#allocation5 + $0x190] sm:$0xff]
    %v134 = vld [vmem:[#allocation5 + $0x198] sm:$0xff]
    %v135 = vld [vmem:[#allocation5 + $0x1a0] sm:$0xff]
    %v136 = vld [vmem:[#allocation5 + $0x1a8] sm:$0xff]
    %v137 = vld [vmem:[#allocation5 + $0x1b0] sm:$0xff]
    %v138 = vld [vmem:[#allocation5 + $0x1b8] sm:$0xff]
    %v139 = vld [vmem:[#allocation5 + $0x1c0] sm:$0xff]
    %v140 = vld [vmem:[#allocation5 + $0x1c8] sm:$0xff]
    %v141 = vld [vmem:[#allocation5 + $0x1d0] sm:$0xff]
    %v142 = vld [vmem:[#allocation5 + $0x1d8] sm:$0xff]
    %v143 = vld [vmem:[#allocation5 + $0x1e0] sm:$0xff]
    %v144 = vld [vmem:[#allocation5 + $0x1e8] sm:$0xff]
    %v145 = vld [vmem:[#allocation5 + $0x1f0] sm:$0xff]
    %v146 = vld [vmem:[#allocation5 + $0x1f8] sm:$0xff]
    %v147 = vld [vmem:[#allocation7] sm:$0xff]
    %v148 = vld [vmem:[#allocation7 + $0x8] sm:$0xff]
    %v149 = vld [vmem:[#allocation7 + $0x10] sm:$0xff]
    %v150 = vld [vmem:[#allocation7 + $0x18] sm:$0xff]
    %v151 = vld [vmem:[#allocation7 + $0x20] sm:$0xff]
    %v152 = vld [vmem:[#allocation7 + $0x28] sm:$0xff]
    %v153 = vld [vmem:[#allocation7 + $0x30] sm:$0xff]
    %v154 = vld [vmem:[#allocation7 + $0x38] sm:$0xff]
    %v155 = vld [vmem:[#allocation7 + $0x40] sm:$0xff]
    %v156 = vld [vmem:[#allocation7 + $0x48] sm:$0xff]
    %v157 = vld [vmem:[#allocation7 + $0x50] sm:$0xff]
    %v158 = vld [vmem:[#allocation7 + $0x58] sm:$0xff]
    %v159 = vld [vmem:[#allocation7 + $0x60] sm:$0xff]
    %v160 = vld [vmem:[#allocation7 + $0x68] sm:$0xff]
    %v161 = vld [vmem:[#allocation7 + $0x70] sm:$0xff]
    %v162 = vld [vmem:[#allocation7 + $0x78] sm:$0xff]
    %v163 = vld [vmem:[#allocation7 + $0x80] sm:$0xff]
    %v164 = vld [vmem:[#allocation7 + $0x88] sm:$0xff]
    %v165 = vld [vmem:[#allocation7 + $0x90] sm:$0xff]
    %v166 = vld [vmem:[#allocation7 + $0x98] sm:$0xff]
    %v167 = vld [vmem:[#allocation7 + $0xa0] sm:$0xff]
    %v168 = vld [vmem:[#allocation7 + $0xa8] sm:$0xff]
    %v169 = vld [vmem:[#allocation7 + $0xb0] sm:$0xff]
    %v170 = vld [vmem:[#allocation7 + $0xb8] sm:$0xff]
    %v171 = vld [vmem:[#allocation7 + $0xc0] sm:$0xff]
    %v172 = vld [vmem:[#allocation7 + $0xc8] sm:$0xff]
    %v173 = vld [vmem:[#allocation7 + $0xd0] sm:$0xff]
    %v174 = vld [vmem:[#allocation7 + $0xd8] sm:$0xff]
    %v175 = vld [vmem:[#allocation7 + $0xe0] sm:$0xff]
    %v176 = vld [vmem:[#allocation7 + $0xe8] sm:$0xff]
    %v177 = vld [vmem:[#allocation7 + $0xf0] sm:$0xff]
    %v178 = vld [vmem:[#allocation7 + $0xf8] sm:$0xff]
    %v179 = vld [vmem:[#allocation7 + $0x100] sm:$0xff]
    %v180 = vld [vmem:[#allocation7 + $0x108] sm:$0xff]
    %v181 = vld [vmem:[#allocation7 + $0x110] sm:$0xff]
    %v182 = vld [vmem:[#allocation7 + $0x118] sm:$0xff]
    %v183 = vld [vmem:[#allocation7 + $0x120] sm:$0xff]
    %v184 = vld [vmem:[#allocation7 + $0x128] sm:$0xff]
    %v185 = vld [vmem:[#allocation7 + $0x130] sm:$0xff]
    %v186 = vld [vmem:[#allocation7 + $0x138] sm:$0xff]
    %v187 = vld [vmem:[#allocation7 + $0x140] sm:$0xff]
    %v188 = vld [vmem:[#allocation7 + $0x148] sm:$0xff]
    %v189 = vld [vmem:[#allocation7 + $0x150] sm:$0xff]
    %v190 = vld [vmem:[#allocation7 + $0x158] sm:$0xff]
    %v191 = vld [vmem:[#allocation7 + $0x160] sm:$0xff]
    %v192 = vld [vmem:[#allocation7 + $0x168] sm:$0xff]
    %v193 = vld [vmem:[#allocation7 + $0x170] sm:$0xff]
    %v194 = vld [vmem:[#allocation7 + $0x178] sm:$0xff]
    %v195 = vld [vmem:[#allocation7 + $0x180] sm:$0xff]
    %v196 = vld [vmem:[#allocation7 + $0x188] sm:$0xff]
    %v197 = vld [vmem:[#allocation7 + $0x190] sm:$0xff]
    %v198 = vld [vmem:[#allocation7 + $0x198] sm:$0xff]
    %v199 = vld [vmem:[#allocation7 + $0x1a0] sm:$0xff]
    %v200 = vld [vmem:[#allocation7 + $0x1a8] sm:$0xff]
    %v201 = vld [vmem:[#allocation7 + $0x1b0] sm:$0xff]
    %v202 = vld [vmem:[#allocation7 + $0x1b8] sm:$0xff]
    %v203 = vld [vmem:[#allocation7 + $0x1c0] sm:$0xff]
    %v204 = vld [vmem:[#allocation7 + $0x1c8] sm:$0xff]
    %v205 = vld [vmem:[#allocation7 + $0x1d0] sm:$0xff]
    %v206 = vld [vmem:[#allocation7 + $0x1d8] sm:$0xff]
    %v207 = vld [vmem:[#allocation7 + $0x1e0] sm:$0xff]
    %v208 = vld [vmem:[#allocation7 + $0x1e8] sm:$0xff]
    %v209 = vld [vmem:[#allocation7 + $0x1f0] sm:$0xff]
    %v210 = vld [vmem:[#allocation7 + $0x1f8] sm:$0xff]
    %v211 = vld [vmem:[%s2] sm:$0xf]
    %v213 = vlaneseq
    %v214 = vshrl.u32 %v213, 7
    %v215 = vsub.s32 0, %v214
    %v216 = vrot.slane %v211, %v215
    %v217 = vlaneseq
    %v218 = vshrl.u32 %v217, 7
    %v219 = vsub.s32 1, %v218
    %v220 = vrot.slane %v211, %v219
    %v221 = vlaneseq
    %v222 = vshrl.u32 %v221, 7
    %v223 = vsub.s32 2, %v222
    %v224 = vrot.slane %v211, %v223
    %v225 = vlaneseq
    %v226 = vshrl.u32 %v225, 7
    %v227 = vsub.s32 3, %v226
    %v228 = vrot.slane %v211, %v227
    %v233 = vld [vmem:[%s4] sm:$0xf]
    %v235 = vlaneseq
    %v236 = vshrl.u32 %v235, 7
    %v237 = vsub.s32 0, %v236
    %v238 = vrot.slane %v233, %v237
    %v239 = vlaneseq
    %v240 = vshrl.u32 %v239, 7
    %v241 = vsub.s32 1, %v240
    %v242 = vrot.slane %v233, %v241
    %v243 = vlaneseq
    %v244 = vshrl.u32 %v243, 7
    %v245 = vsub.s32 2, %v244
    %v246 = vrot.slane %v233, %v245
    %v247 = vlaneseq
    %v248 = vshrl.u32 %v247, 7
    %v249 = vsub.s32 3, %v248
    %v250 = vrot.slane %v233, %v249
    %v255 = vld [vmem:[#allocation2] sm:$0xf]
    %v320 = vunpack.c.l.b16 %v83
    %v321 = vunpack.c.h.b16 %v83
    %v322 = vunpack.c.l.b16 %v84
    %v323 = vunpack.c.h.b16 %v84
    %v324 = vunpack.c.l.b16 %v85
    %v325 = vunpack.c.h.b16 %v85
    %v326 = vunpack.c.l.b16 %v86
    %v327 = vunpack.c.h.b16 %v86
    %v328 = vunpack.c.l.b16 %v87
    %v329 = vunpack.c.h.b16 %v87
    %v330 = vunpack.c.l.b16 %v88
    %v331 = vunpack.c.h.b16 %v88
    %v332 = vunpack.c.l.b16 %v89
    %v333 = vunpack.c.h.b16 %v89
    %v334 = vunpack.c.l.b16 %v90
    %v335 = vunpack.c.h.b16 %v90
    %v336 = vunpack.c.l.b16 %v91
    %v337 = vunpack.c.h.b16 %v91
    %v338 = vunpack.c.l.b16 %v92
    %v339 = vunpack.c.h.b16 %v92
    %v340 = vunpack.c.l.b16 %v93
    %v341 = vunpack.c.h.b16 %v93
    %v342 = vunpack.c.l.b16 %v94
    %v343 = vunpack.c.h.b16 %v94
    %v344 = vunpack.c.l.b16 %v95
    %v345 = vunpack.c.h.b16 %v95
    %v346 = vunpack.c.l.b16 %v96
    %v347 = vunpack.c.h.b16 %v96
    %v348 = vunpack.c.l.b16 %v97
    %v349 = vunpack.c.h.b16 %v97
    %v350 = vunpack.c.l.b16 %v98
    %v351 = vunpack.c.h.b16 %v98
    %v352 = vunpack.c.l.b16 %v99
    %v353 = vunpack.c.h.b16 %v99
    %v354 = vunpack.c.l.b16 %v100
    %v355 = vunpack.c.h.b16 %v100
    %v356 = vunpack.c.l.b16 %v101
    %v357 = vunpack.c.h.b16 %v101
    %v358 = vunpack.c.l.b16 %v102
    %v359 = vunpack.c.h.b16 %v102
    %v360 = vunpack.c.l.b16 %v103
    %v361 = vunpack.c.h.b16 %v103
    %v362 = vunpack.c.l.b16 %v104
    %v363 = vunpack.c.h.b16 %v104
    %v364 = vunpack.c.l.b16 %v105
    %v365 = vunpack.c.h.b16 %v105
    %v366 = vunpack.c.l.b16 %v106
    %v367 = vunpack.c.h.b16 %v106
    %v368 = vunpack.c.l.b16 %v107
    %v369 = vunpack.c.h.b16 %v107
    %v370 = vunpack.c.l.b16 %v108
    %v371 = vunpack.c.h.b16 %v108
    %v372 = vunpack.c.l.b16 %v109
    %v373 = vunpack.c.h.b16 %v109
    %v374 = vunpack.c.l.b16 %v110
    %v375 = vunpack.c.h.b16 %v110
    %v376 = vunpack.c.l.b16 %v111
    %v377 = vunpack.c.h.b16 %v111
    %v378 = vunpack.c.l.b16 %v112
    %v379 = vunpack.c.h.b16 %v112
    %v380 = vunpack.c.l.b16 %v113
    %v381 = vunpack.c.h.b16 %v113
    %v382 = vunpack.c.l.b16 %v114
    %v383 = vunpack.c.h.b16 %v114
    %v384 = vunpack.c.l.b16 %v115
    %v385 = vunpack.c.h.b16 %v115
    %v386 = vunpack.c.l.b16 %v116
    %v387 = vunpack.c.h.b16 %v116
    %v388 = vunpack.c.l.b16 %v117
    %v389 = vunpack.c.h.b16 %v117
    %v390 = vunpack.c.l.b16 %v118
    %v391 = vunpack.c.h.b16 %v118
    %v392 = vunpack.c.l.b16 %v119
    %v393 = vunpack.c.h.b16 %v119
    %v394 = vunpack.c.l.b16 %v120
    %v395 = vunpack.c.h.b16 %v120
    %v396 = vunpack.c.l.b16 %v121
    %v397 = vunpack.c.h.b16 %v121
    %v398 = vunpack.c.l.b16 %v122
    %v399 = vunpack.c.h.b16 %v122
    %v400 = vunpack.c.l.b16 %v123
    %v401 = vunpack.c.h.b16 %v123
    %v402 = vunpack.c.l.b16 %v124
    %v403 = vunpack.c.h.b16 %v124
    %v404 = vunpack.c.l.b16 %v125
    %v405 = vunpack.c.h.b16 %v125
    %v406 = vunpack.c.l.b16 %v126
    %v407 = vunpack.c.h.b16 %v126
    %v408 = vunpack.c.l.b16 %v127
    %v409 = vunpack.c.h.b16 %v127
    %v410 = vunpack.c.l.b16 %v128
    %v411 = vunpack.c.h.b16 %v128
    %v412 = vunpack.c.l.b16 %v129
    %v413 = vunpack.c.h.b16 %v129
    %v414 = vunpack.c.l.b16 %v130
    %v415 = vunpack.c.h.b16 %v130
    %v416 = vunpack.c.l.b16 %v131
    %v417 = vunpack.c.h.b16 %v131
    %v418 = vunpack.c.l.b16 %v132
    %v419 = vunpack.c.h.b16 %v132
    %v420 = vunpack.c.l.b16 %v133
    %v421 = vunpack.c.h.b16 %v133
    %v422 = vunpack.c.l.b16 %v134
    %v423 = vunpack.c.h.b16 %v134
    %v424 = vunpack.c.l.b16 %v135
    %v425 = vunpack.c.h.b16 %v135
    %v426 = vunpack.c.l.b16 %v136
    %v427 = vunpack.c.h.b16 %v136
    %v428 = vunpack.c.l.b16 %v137
    %v429 = vunpack.c.h.b16 %v137
    %v430 = vunpack.c.l.b16 %v138
    %v431 = vunpack.c.h.b16 %v138
    %v432 = vunpack.c.l.b16 %v139
    %v433 = vunpack.c.h.b16 %v139
    %v434 = vunpack.c.l.b16 %v140
    %v435 = vunpack.c.h.b16 %v140
    %v436 = vunpack.c.l.b16 %v141
    %v437 = vunpack.c.h.b16 %v141
    %v438 = vunpack.c.l.b16 %v142
    %v439 = vunpack.c.h.b16 %v142
    %v440 = vunpack.c.l.b16 %v143
    %v441 = vunpack.c.h.b16 %v143
    %v442 = vunpack.c.l.b16 %v144
    %v443 = vunpack.c.h.b16 %v144
    %v444 = vunpack.c.l.b16 %v145
    %v445 = vunpack.c.h.b16 %v145
    %v446 = vunpack.c.l.b16 %v146
    %v447 = vunpack.c.h.b16 %v146
    %v448 = vpack.c.b16 %v324, %v320
    %v449 = vpack.c.b16 %v325, %v321
    %v450 = vpack.c.b16 %v326, %v322
    %v451 = vpack.c.b16 %v327, %v323
    %v452 = vpack.c.b16 %v332, %v328
    %v453 = vpack.c.b16 %v333, %v329
    %v454 = vpack.c.b16 %v334, %v330
    %v455 = vpack.c.b16 %v335, %v331
    %v456 = vpack.c.b16 %v340, %v336
    %v457 = vpack.c.b16 %v341, %v337
    %v458 = vpack.c.b16 %v342, %v338
    %v459 = vpack.c.b16 %v343, %v339
    %v460 = vpack.c.b16 %v348, %v344
    %v461 = vpack.c.b16 %v349, %v345
    %v462 = vpack.c.b16 %v350, %v346
    %v463 = vpack.c.b16 %v351, %v347
    %v464 = vpack.c.b16 %v356, %v352
    %v465 = vpack.c.b16 %v357, %v353
    %v466 = vpack.c.b16 %v358, %v354
    %v467 = vpack.c.b16 %v359, %v355
    %v468 = vpack.c.b16 %v364, %v360
    %v469 = vpack.c.b16 %v365, %v361
    %v470 = vpack.c.b16 %v366, %v362
    %v471 = vpack.c.b16 %v367, %v363
    %v472 = vpack.c.b16 %v372, %v368
    %v473 = vpack.c.b16 %v373, %v369
    %v474 = vpack.c.b16 %v374, %v370
    %v475 = vpack.c.b16 %v375, %v371
    %v476 = vpack.c.b16 %v380, %v376
    %v477 = vpack.c.b16 %v381, %v377
    %v478 = vpack.c.b16 %v382, %v378
    %v479 = vpack.c.b16 %v383, %v379
    %v480 = vpack.c.b16 %v388, %v384
    %v481 = vpack.c.b16 %v389, %v385
    %v482 = vpack.c.b16 %v390, %v386
    %v483 = vpack.c.b16 %v391, %v387
    %v484 = vpack.c.b16 %v396, %v392
    %v485 = vpack.c.b16 %v397, %v393
    %v486 = vpack.c.b16 %v398, %v394
    %v487 = vpack.c.b16 %v399, %v395
    %v488 = vpack.c.b16 %v404, %v400
    %v489 = vpack.c.b16 %v405, %v401
    %v490 = vpack.c.b16 %v406, %v402
    %v491 = vpack.c.b16 %v407, %v403
    %v492 = vpack.c.b16 %v412, %v408
    %v493 = vpack.c.b16 %v413, %v409
    %v494 = vpack.c.b16 %v414, %v410
    %v495 = vpack.c.b16 %v415, %v411
    %v496 = vpack.c.b16 %v420, %v416
    %v497 = vpack.c.b16 %v421, %v417
    %v498 = vpack.c.b16 %v422, %v418
    %v499 = vpack.c.b16 %v423, %v419
    %v500 = vpack.c.b16 %v428, %v424
    %v501 = vpack.c.b16 %v429, %v425
    %v502 = vpack.c.b16 %v430, %v426
    %v503 = vpack.c.b16 %v431, %v427
    %v504 = vpack.c.b16 %v436, %v432
    %v505 = vpack.c.b16 %v437, %v433
    %v506 = vpack.c.b16 %v438, %v434
    %v507 = vpack.c.b16 %v439, %v435
    %v508 = vpack.c.b16 %v444, %v440
    %v509 = vpack.c.b16 %v445, %v441
    %v510 = vpack.c.b16 %v446, %v442
    %v511 = vpack.c.b16 %v447, %v443
    %576 = vmatprep.subr.bf16.mxu0 %v449
    %577 = vmatpush1.bf16.msra.mxu0 %v448
    %578 = vmatprep.subr.bf16.mxu0 %v453
    %579 = vmatpush1.bf16.msra.mxu0 %v452
    %580 = vmatprep.subr.bf16.mxu0 %v457
    %581 = vmatpush1.bf16.msra.mxu0 %v456
    %582 = vmatprep.subr.bf16.mxu0 %v461
    %583 = vmatpush1.bf16.msra.mxu0 %v460
    %584 = vmatprep.subr.bf16.mxu0 %v465
    %585 = vmatpush1.bf16.msra.mxu0 %v464
    %586 = vmatprep.subr.bf16.mxu0 %v469
    %587 = vmatpush1.bf16.msra.mxu0 %v468
    %588 = vmatprep.subr.bf16.mxu0 %v473
    %589 = vmatpush1.bf16.msra.mxu0 %v472
    %590 = vmatprep.subr.bf16.mxu0 %v477
    %591 = vmatpush1.bf16.msra.mxu0 %v476
    %592 = vmatprep.subr.bf16.mxu0 %v481
    %593 = vmatpush1.bf16.msra.mxu0 %v480
    %594 = vmatprep.subr.bf16.mxu0 %v485
    %595 = vmatpush1.bf16.msra.mxu0 %v484
    %596 = vmatprep.subr.bf16.mxu0 %v489
    %597 = vmatpush1.bf16.msra.mxu0 %v488
    %598 = vmatprep.subr.bf16.mxu0 %v493
    %599 = vmatpush1.bf16.msra.mxu0 %v492
    %600 = vmatprep.subr.bf16.mxu0 %v497
    %601 = vmatpush1.bf16.msra.mxu0 %v496
    %602 = vmatprep.subr.bf16.mxu0 %v501
    %603 = vmatpush1.bf16.msra.mxu0 %v500
    %604 = vmatprep.subr.bf16.mxu0 %v505
    %605 = vmatpush1.bf16.msra.mxu0 %v504
    %606 = vmatprep.subr.bf16.mxu0 %v509
    %607 = vmatpush1.bf16.msra.mxu0 %v508
    %608 = vmatprep.mubr.bf16.mxu0 0
    %609 = vmatmul.mubr.bf16.gmra.mrb[0].mxu0 %v255
    %v610 = vpop.f32.mrb[0].mxu0
    %v611 = vadd.f32 %v216, %v610
    %v612 = vpop.f32.mrb[0].mxu0
    %v613 = vadd.f32 %v220, %v612
    %v614 = vpop.f32.mrb[0].mxu0
    %v615 = vpop.f32.mrb[0].mxu0
    %616 = vdwg.mxu0
    %617 = vmatprep.subr.bf16.mxu0 %v451
    %618 = vmatpush1.bf16.msra.mxu0 %v450
    %619 = vmatprep.subr.bf16.mxu0 %v455
    %620 = vmatpush1.bf16.msra.mxu0 %v454
    %621 = vmatprep.subr.bf16.mxu0 %v459
    %622 = vmatpush1.bf16.msra.mxu0 %v458
    %623 = vmatprep.subr.bf16.mxu0 %v463
    %624 = vmatpush1.bf16.msra.mxu0 %v462
    %625 = vmatprep.subr.bf16.mxu0 %v467
    %626 = vmatpush1.bf16.msra.mxu0 %v466
    %627 = vmatprep.subr.bf16.mxu0 %v471
    %628 = vmatpush1.bf16.msra.mxu0 %v470
    %629 = vmatprep.subr.bf16.mxu0 %v475
    %630 = vmatpush1.bf16.msra.mxu0 %v474
    %631 = vmatprep.subr.bf16.mxu0 %v479
    %632 = vmatpush1.bf16.msra.mxu0 %v478
    %633 = vmatprep.subr.bf16.mxu0 %v483
    %634 = vmatpush1.bf16.msra.mxu0 %v482
    %635 = vmatprep.subr.bf16.mxu0 %v487
    %636 = vmatpush1.bf16.msra.mxu0 %v486
    %637 = vmatprep.subr.bf16.mxu0 %v491
    %638 = vmatpush1.bf16.msra.mxu0 %v490
    %639 = vmatprep.subr.bf16.mxu0 %v495
    %640 = vmatpush1.bf16.msra.mxu0 %v494
    %641 = vmatprep.subr.bf16.mxu0 %v499
    %642 = vmatpush1.bf16.msra.mxu0 %v498
    %643 = vmatprep.subr.bf16.mxu0 %v503
    %644 = vmatpush1.bf16.msra.mxu0 %v502
    %645 = vmatprep.subr.bf16.mxu0 %v507
    %646 = vmatpush1.bf16.msra.mxu0 %v506
    %647 = vmatprep.subr.bf16.mxu0 %v511
    %648 = vmatpush1.bf16.msra.mxu0 %v510
    %649 = vmatprep.mubr.bf16.mxu0 0
    %650 = vmatmul.mubr.bf16.gmra.mrb[0].mxu0 %v255
    %v651 = vpop.f32.mrb[0].mxu0
    %v652 = vadd.f32 %v224, %v651
    %v653 = vpop.f32.mrb[0].mxu0
    %v654 = vadd.f32 %v228, %v653
    %v655 = vpop.f32.mrb[0].mxu0
    %v656 = vpop.f32.mrb[0].mxu0
    %657 = vdwg.mxu0
    %v658 = vxor.u32 %v611, 2147483648
    %v659 = vmul.f32 %v658, 1.442695
    %v660 = vpow.pop %v659
    %v661 = vadd.f32 %v660, 1.0
    %v662 = vrcp.pop %v661
    %v663 = vmul.f32 1.0, %v662
    %v664 = vxor.u32 %v613, 2147483648
    %v665 = vmul.f32 %v664, 1.442695
    %v666 = vpow.pop %v665
    %v667 = vadd.f32 %v666, 1.0
    %v668 = vrcp.pop %v667
    %v669 = vmul.f32 1.0, %v668
    %v670 = vtanh.pop %v652
    %v671 = vxor.u32 %v654, 2147483648
    %v672 = vmul.f32 %v671, 1.442695
    %v673 = vpow.pop %v672
    %v674 = vadd.f32 %v673, 1.0
    %v675 = vrcp.pop %v674
    %v676 = vmul.f32 1.0, %v675
    %v677 = vmul.f32 %v669, 0.0
    %v678 = vmul.f32 %v663, %v670
    %v679 = vadd.f32 %v677, %v678
    %v680 = vtanh.pop %v679
    %v681 = vmul.f32 %v676, %v680
    %v682 = vpack.c.bf16 %v681, %v681
    %v747 = vunpack.c.l.b16 %v147
    %v748 = vunpack.c.h.b16 %v147
    %v749 = vunpack.c.l.b16 %v148
    %v750 = vunpack.c.h.b16 %v148
    %v751 = vunpack.c.l.b16 %v149
    %v752 = vunpack.c.h.b16 %v149
    %v753 = vunpack.c.l.b16 %v150
    %v754 = vunpack.c.h.b16 %v150
    %v755 = vunpack.c.l.b16 %v151
    %v756 = vunpack.c.h.b16 %v151
    %v757 = vunpack.c.l.b16 %v152
    %v758 = vunpack.c.h.b16 %v152
    %v759 = vunpack.c.l.b16 %v153
    %v760 = vunpack.c.h.b16 %v153
    %v761 = vunpack.c.l.b16 %v154
    %v762 = vunpack.c.h.b16 %v154
    %v763 = vunpack.c.l.b16 %v155
    %v764 = vunpack.c.h.b16 %v155
    %v765 = vunpack.c.l.b16 %v156
    %v766 = vunpack.c.h.b16 %v156
    %v767 = vunpack.c.l.b16 %v157
    %v768 = vunpack.c.h.b16 %v157
    %v769 = vunpack.c.l.b16 %v158
    %v770 = vunpack.c.h.b16 %v158
    %v771 = vunpack.c.l.b16 %v159
    %v772 = vunpack.c.h.b16 %v159
    %v773 = vunpack.c.l.b16 %v160
    %v774 = vunpack.c.h.b16 %v160
    %v775 = vunpack.c.l.b16 %v161
    %v776 = vunpack.c.h.b16 %v161
    %v777 = vunpack.c.l.b16 %v162
    %v778 = vunpack.c.h.b16 %v162
    %v779 = vunpack.c.l.b16 %v163
    %v780 = vunpack.c.h.b16 %v163
    %v781 = vunpack.c.l.b16 %v164
    %v782 = vunpack.c.h.b16 %v164
    %v783 = vunpack.c.l.b16 %v165
    %v784 = vunpack.c.h.b16 %v165
    %v785 = vunpack.c.l.b16 %v166
    %v786 = vunpack.c.h.b16 %v166
    %v787 = vunpack.c.l.b16 %v167
    %v788 = vunpack.c.h.b16 %v167
    %v789 = vunpack.c.l.b16 %v168
    %v790 = vunpack.c.h.b16 %v168
    %v791 = vunpack.c.l.b16 %v169
    %v792 = vunpack.c.h.b16 %v169
    %v793 = vunpack.c.l.b16 %v170
    %v794 = vunpack.c.h.b16 %v170
    %v795 = vunpack.c.l.b16 %v171
    %v796 = vunpack.c.h.b16 %v171
    %v797 = vunpack.c.l.b16 %v172
    %v798 = vunpack.c.h.b16 %v172
    %v799 = vunpack.c.l.b16 %v173
    %v800 = vunpack.c.h.b16 %v173
    %v801 = vunpack.c.l.b16 %v174
    %v802 = vunpack.c.h.b16 %v174
    %v803 = vunpack.c.l.b16 %v175
    %v804 = vunpack.c.h.b16 %v175
    %v805 = vunpack.c.l.b16 %v176
    %v806 = vunpack.c.h.b16 %v176
    %v807 = vunpack.c.l.b16 %v177
    %v808 = vunpack.c.h.b16 %v177
    %v809 = vunpack.c.l.b16 %v178
    %v810 = vunpack.c.h.b16 %v178
    %v811 = vunpack.c.l.b16 %v179
    %v812 = vunpack.c.h.b16 %v179
    %v813 = vunpack.c.l.b16 %v180
    %v814 = vunpack.c.h.b16 %v180
    %v815 = vunpack.c.l.b16 %v181
    %v816 = vunpack.c.h.b16 %v181
    %v817 = vunpack.c.l.b16 %v182
    %v818 = vunpack.c.h.b16 %v182
    %v819 = vunpack.c.l.b16 %v183
    %v820 = vunpack.c.h.b16 %v183
    %v821 = vunpack.c.l.b16 %v184
    %v822 = vunpack.c.h.b16 %v184
    %v823 = vunpack.c.l.b16 %v185
    %v824 = vunpack.c.h.b16 %v185
    %v825 = vunpack.c.l.b16 %v186
    %v826 = vunpack.c.h.b16 %v186
    %v827 = vunpack.c.l.b16 %v187
    %v828 = vunpack.c.h.b16 %v187
    %v829 = vunpack.c.l.b16 %v188
    %v830 = vunpack.c.h.b16 %v188
    %v831 = vunpack.c.l.b16 %v189
    %v832 = vunpack.c.h.b16 %v189
    %v833 = vunpack.c.l.b16 %v190
    %v834 = vunpack.c.h.b16 %v190
    %v835 = vunpack.c.l.b16 %v191
    %v836 = vunpack.c.h.b16 %v191
    %v837 = vunpack.c.l.b16 %v192
    %v838 = vunpack.c.h.b16 %v192
    %v839 = vunpack.c.l.b16 %v193
    %v840 = vunpack.c.h.b16 %v193
    %v841 = vunpack.c.l.b16 %v194
    %v842 = vunpack.c.h.b16 %v194
    %v843 = vunpack.c.l.b16 %v195
    %v844 = vunpack.c.h.b16 %v195
    %v845 = vunpack.c.l.b16 %v196
    %v846 = vunpack.c.h.b16 %v196
    %v847 = vunpack.c.l.b16 %v197
    %v848 = vunpack.c.h.b16 %v197
    %v849 = vunpack.c.l.b16 %v198
    %v850 = vunpack.c.h.b16 %v198
    %v851 = vunpack.c.l.b16 %v199
    %v852 = vunpack.c.h.b16 %v199
    %v853 = vunpack.c.l.b16 %v200
    %v854 = vunpack.c.h.b16 %v200
    %v855 = vunpack.c.l.b16 %v201
    %v856 = vunpack.c.h.b16 %v201
    %v857 = vunpack.c.l.b16 %v202
    %v858 = vunpack.c.h.b16 %v202
    %v859 = vunpack.c.l.b16 %v203
    %v860 = vunpack.c.h.b16 %v203
    %v861 = vunpack.c.l.b16 %v204
    %v862 = vunpack.c.h.b16 %v204
    %v863 = vunpack.c.l.b16 %v205
    %v864 = vunpack.c.h.b16 %v205
    %v865 = vunpack.c.l.b16 %v206
    %v866 = vunpack.c.h.b16 %v206
    %v867 = vunpack.c.l.b16 %v207
    %v868 = vunpack.c.h.b16 %v207
    %v869 = vunpack.c.l.b16 %v208
    %v870 = vunpack.c.h.b16 %v208
    %v871 = vunpack.c.l.b16 %v209
    %v872 = vunpack.c.h.b16 %v209
    %v873 = vunpack.c.l.b16 %v210
    %v874 = vunpack.c.h.b16 %v210
    %v875 = vpack.c.b16 %v751, %v747
    %v876 = vpack.c.b16 %v752, %v748
    %v877 = vpack.c.b16 %v753, %v749
    %v878 = vpack.c.b16 %v754, %v750
    %v879 = vpack.c.b16 %v759, %v755
    %v880 = vpack.c.b16 %v760, %v756
    %v881 = vpack.c.b16 %v761, %v757
    %v882 = vpack.c.b16 %v762, %v758
    %v883 = vpack.c.b16 %v767, %v763
    %v884 = vpack.c.b16 %v768, %v764
    %v885 = vpack.c.b16 %v769, %v765
    %v886 = vpack.c.b16 %v770, %v766
    %v887 = vpack.c.b16 %v775, %v771
    %v888 = vpack.c.b16 %v776, %v772
    %v889 = vpack.c.b16 %v777, %v773
    %v890 = vpack.c.b16 %v778, %v774
    %v891 = vpack.c.b16 %v783, %v779
    %v892 = vpack.c.b16 %v784, %v780
    %v893 = vpack.c.b16 %v785, %v781
    %v894 = vpack.c.b16 %v786, %v782
    %v895 = vpack.c.b16 %v791, %v787
    %v896 = vpack.c.b16 %v792, %v788
    %v897 = vpack.c.b16 %v793, %v789
    %v898 = vpack.c.b16 %v794, %v790
    %v899 = vpack.c.b16 %v799, %v795
    %v900 = vpack.c.b16 %v800, %v796
    %v901 = vpack.c.b16 %v801, %v797
    %v902 = vpack.c.b16 %v802, %v798
    %v903 = vpack.c.b16 %v807, %v803
    %v904 = vpack.c.b16 %v808, %v804
    %v905 = vpack.c.b16 %v809, %v805
    %v906 = vpack.c.b16 %v810, %v806
    %v907 = vpack.c.b16 %v815, %v811
    %v908 = vpack.c.b16 %v816, %v812
    %v909 = vpack.c.b16 %v817, %v813
    %v910 = vpack.c.b16 %v818, %v814
    %v911 = vpack.c.b16 %v823, %v819
    %v912 = vpack.c.b16 %v824, %v820
    %v913 = vpack.c.b16 %v825, %v821
    %v914 = vpack.c.b16 %v826, %v822
    %v915 = vpack.c.b16 %v831, %v827
    %v916 = vpack.c.b16 %v832, %v828
    %v917 = vpack.c.b16 %v833, %v829
    %v918 = vpack.c.b16 %v834, %v830
    %v919 = vpack.c.b16 %v839, %v835
    %v920 = vpack.c.b16 %v840, %v836
    %v921 = vpack.c.b16 %v841, %v837
    %v922 = vpack.c.b16 %v842, %v838
    %v923 = vpack.c.b16 %v847, %v843
    %v924 = vpack.c.b16 %v848, %v844
    %v925 = vpack.c.b16 %v849, %v845
    %v926 = vpack.c.b16 %v850, %v846
    %v927 = vpack.c.b16 %v855, %v851
    %v928 = vpack.c.b16 %v856, %v852
    %v929 = vpack.c.b16 %v857, %v853
    %v930 = vpack.c.b16 %v858, %v854
    %v931 = vpack.c.b16 %v863, %v859
    %v932 = vpack.c.b16 %v864, %v860
    %v933 = vpack.c.b16 %v865, %v861
    %v934 = vpack.c.b16 %v866, %v862
    %v935 = vpack.c.b16 %v871, %v867
    %v936 = vpack.c.b16 %v872, %v868
    %v937 = vpack.c.b16 %v873, %v869
    %v938 = vpack.c.b16 %v874, %v870
    %1003 = vmatprep.subr.bf16.mxu0 %v876
    %1004 = vmatpush1.bf16.msra.mxu0 %v875
    %1005 = vmatprep.subr.bf16.mxu0 %v880
    %1006 = vmatpush1.bf16.msra.mxu0 %v879
    %1007 = vmatprep.subr.bf16.mxu0 %v884
    %1008 = vmatpush1.bf16.msra.mxu0 %v883
    %1009 = vmatprep.subr.bf16.mxu0 %v888
    %1010 = vmatpush1.bf16.msra.mxu0 %v887
    %1011 = vmatprep.subr.bf16.mxu0 %v892
    %1012 = vmatpush1.bf16.msra.mxu0 %v891
    %1013 = vmatprep.subr.bf16.mxu0 %v896
    %1014 = vmatpush1.bf16.msra.mxu0 %v895
    %1015 = vmatprep.subr.bf16.mxu0 %v900
    %1016 = vmatpush1.bf16.msra.mxu0 %v899
    %1017 = vmatprep.subr.bf16.mxu0 %v904
    %1018 = vmatpush1.bf16.msra.mxu0 %v903
    %1019 = vmatprep.subr.bf16.mxu0 %v908
    %1020 = vmatpush1.bf16.msra.mxu0 %v907
    %1021 = vmatprep.subr.bf16.mxu0 %v912
    %1022 = vmatpush1.bf16.msra.mxu0 %v911
    %1023 = vmatprep.subr.bf16.mxu0 %v916
    %1024 = vmatpush1.bf16.msra.mxu0 %v915
    %1025 = vmatprep.subr.bf16.mxu0 %v920
    %1026 = vmatpush1.bf16.msra.mxu0 %v919
    %1027 = vmatprep.subr.bf16.mxu0 %v924
    %1028 = vmatpush1.bf16.msra.mxu0 %v923
    %1029 = vmatprep.subr.bf16.mxu0 %v928
    %1030 = vmatpush1.bf16.msra.mxu0 %v927
    %1031 = vmatprep.subr.bf16.mxu0 %v932
    %1032 = vmatpush1.bf16.msra.mxu0 %v931
    %1033 = vmatprep.subr.bf16.mxu0 %v936
    %1034 = vmatpush1.bf16.msra.mxu0 %v935
    %1035 = vmatprep.mubr.bf16.mxu0 0
    %1036 = vmatmul.mubr.bf16.gmra.mrb[0].mxu0 %v682
    %v1037 = vpop.f32.mrb[0].mxu0
    %v1038 = vadd.f32 %v238, %v1037
    %v1039 = vpop.f32.mrb[0].mxu0
    %v1040 = vadd.f32 %v242, %v1039
    %v1041 = vpop.f32.mrb[0].mxu0
    %v1042 = vpop.f32.mrb[0].mxu0
    %1043 = vdwg.mxu0
    %1044 = vmatprep.subr.bf16.mxu0 %v878
    %1045 = vmatpush1.bf16.msra.mxu0 %v877
    %1046 = vmatprep.subr.bf16.mxu0 %v882
    %1047 = vmatpush1.bf16.msra.mxu0 %v881
    %1048 = vmatprep.subr.bf16.mxu0 %v886
    %1049 = vmatpush1.bf16.msra.mxu0 %v885
    %1050 = vmatprep.subr.bf16.mxu0 %v890
    %1051 = vmatpush1.bf16.msra.mxu0 %v889
    %1052 = vmatprep.subr.bf16.mxu0 %v894
    %1053 = vmatpush1.bf16.msra.mxu0 %v893
    %1054 = vmatprep.subr.bf16.mxu0 %v898
    %1055 = vmatpush1.bf16.msra.mxu0 %v897
    %1056 = vmatprep.subr.bf16.mxu0 %v902
    %1057 = vmatpush1.bf16.msra.mxu0 %v901
    %1058 = vmatprep.subr.bf16.mxu0 %v906
    %1059 = vmatpush1.bf16.msra.mxu0 %v905
    %1060 = vmatprep.subr.bf16.mxu0 %v910
    %1061 = vmatpush1.bf16.msra.mxu0 %v909
    %1062 = vmatprep.subr.bf16.mxu0 %v914
    %1063 = vmatpush1.bf16.msra.mxu0 %v913
    %1064 = vmatprep.subr.bf16.mxu0 %v918
    %1065 = vmatpush1.bf16.msra.mxu0 %v917
    %1066 = vmatprep.subr.bf16.mxu0 %v922
    %1067 = vmatpush1.bf16.msra.mxu0 %v921
    %1068 = vmatprep.subr.bf16.mxu0 %v926
    %1069 = vmatpush1.bf16.msra.mxu0 %v925
    %1070 = vmatprep.subr.bf16.mxu0 %v930
    %1071 = vmatpush1.bf16.msra.mxu0 %v929
    %1072 = vmatprep.subr.bf16.mxu0 %v934
    %1073 = vmatpush1.bf16.msra.mxu0 %v933
    %1074 = vmatprep.subr.bf16.mxu0 %v938
    %1075 = vmatpush1.bf16.msra.mxu0 %v937
    %1076 = vmatprep.mubr.bf16.mxu0 0
    %1077 = vmatmul.mubr.bf16.gmra.mrb[0].mxu0 %v682
    %v1078 = vpop.f32.mrb[0].mxu0
    %v1079 = vadd.f32 %v246, %v1078
    %v1080 = vpop.f32.mrb[0].mxu0
    %v1081 = vadd.f32 %v250, %v1080
    %v1082 = vpop.f32.mrb[0].mxu0
    %v1083 = vpop.f32.mrb[0].mxu0
    %1084 = vdwg.mxu0
    %v1085 = vxor.u32 %v1038, 2147483648
    %v1086 = vmul.f32 %v1085, 1.442695
    %v1087 = vpow.pop %v1086
    %v1088 = vadd.f32 %v1087, 1.0
    %v1089 = vrcp.pop %v1088
    %v1090 = vmul.f32 1.0, %v1089
    %v1091 = vxor.u32 %v1040, 2147483648
    %v1092 = vmul.f32 %v1091, 1.442695
    %v1093 = vpow.pop %v1092
    %v1094 = vadd.f32 %v1093, 1.0
    %v1095 = vrcp.pop %v1094
    %v1096 = vmul.f32 1.0, %v1095
    %v1097 = vtanh.pop %v1079
    %v1098 = vxor.u32 %v1081, 2147483648
    %v1099 = vmul.f32 %v1098, 1.442695
    %v1100 = vpow.pop %v1099
    %v1101 = vadd.f32 %v1100, 1.0
    %v1102 = vrcp.pop %v1101
    %v1103 = vmul.f32 1.0, %v1102
    %v1104 = vmul.f32 %v1096, 0.0
    %v1105 = vmul.f32 %v1090, %v1097
    %v1106 = vadd.f32 %v1104, %v1105
    %v1107 = vtanh.pop %v1106
    %v1108 = vmul.f32 %v1103, %v1107
    %s1109 = scalar_lea.vmem [#allocation2], 4
    %v1110 = vld [vmem:[%s1109] sm:$0xf]
    %1111 = vmatprep.subr.bf16.mxu0 %v449
    %1112 = vmatpush1.bf16.msra.mxu0 %v448
    %1113 = vmatprep.subr.bf16.mxu0 %v453
    %1114 = vmatpush1.bf16.msra.mxu0 %v452
    %1115 = vmatprep.subr.bf16.mxu0 %v457
    %1116 = vmatpush1.bf16.msra.mxu0 %v456
    %1117 = vmatprep.subr.bf16.mxu0 %v461
    %1118 = vmatpush1.bf16.msra.mxu0 %v460
    %1119 = vmatprep.subr.bf16.mxu0 %v465
    %1120 = vmatpush1.bf16.msra.mxu0 %v464
    %1121 = vmatprep.subr.bf16.mxu0 %v469
    %1122 = vmatpush1.bf16.msra.mxu0 %v468
    %1123 = vmatprep.subr.bf16.mxu0 %v473
    %1124 = vmatpush1.bf16.msra.mxu0 %v472
    %1125 = vmatprep.subr.bf16.mxu0 %v477
    %1126 = vmatpush1.bf16.msra.mxu0 %v476
    %1127 = vmatprep.subr.bf16.mxu0 %v481
    %1128 = vmatpush1.bf16.msra.mxu0 %v480
    %1129 = vmatprep.subr.bf16.mxu0 %v485
    %1130 = vmatpush1.bf16.msra.mxu0 %v484
    %1131 = vmatprep.subr.bf16.mxu0 %v489
    %1132 = vmatpush1.bf16.msra.mxu0 %v488
    %1133 = vmatprep.subr.bf16.mxu0 %v493
    %1134 = vmatpush1.bf16.msra.mxu0 %v492
    %1135 = vmatprep.subr.bf16.mxu0 %v497
    %1136 = vmatpush1.bf16.msra.mxu0 %v496
    %1137 = vmatprep.subr.bf16.mxu0 %v501
    %1138 = vmatpush1.bf16.msra.mxu0 %v500
    %1139 = vmatprep.subr.bf16.mxu0 %v505
    %1140 = vmatpush1.bf16.msra.mxu0 %v504
    %1141 = vmatprep.subr.bf16.mxu0 %v509
    %1142 = vmatpush1.bf16.msra.mxu0 %v508
    %1143 = vmatprep.mubr.bf16.mxu0 %v682
    %1144 = vmatmul.mubr.bf16.gmra.mrb[0].mxu0 %v1110
    %v1145 = vpop.f32.mrb[0].mxu0
    %v1146 = vadd.f32 %v216, %v1145
    %v1147 = vpop.f32.mrb[0].mxu0
    %v1148 = vadd.f32 %v220, %v1147
    %v1149 = vpop.f32.mrb[0].mxu0
    %v1150 = vpop.f32.mrb[0].mxu0
    %1151 = vdwg.mxu0
    %1152 = vmatprep.subr.bf16.mxu0 %v451
    %1153 = vmatpush1.bf16.msra.mxu0 %v450
    %1154 = vmatprep.subr.bf16.mxu0 %v455
    %1155 = vmatpush1.bf16.msra.mxu0 %v454
    %1156 = vmatprep.subr.bf16.mxu0 %v459
    %1157 = vmatpush1.bf16.msra.mxu0 %v458
    %1158 = vmatprep.subr.bf16.mxu0 %v463
    %1159 = vmatpush1.bf16.msra.mxu0 %v462
    %1160 = vmatprep.subr.bf16.mxu0 %v467
    %1161 = vmatpush1.bf16.msra.mxu0 %v466
    %1162 = vmatprep.subr.bf16.mxu0 %v471
    %1163 = vmatpush1.bf16.msra.mxu0 %v470
    %1164 = vmatprep.subr.bf16.mxu0 %v475
    %1165 = vmatpush1.bf16.msra.mxu0 %v474
    %1166 = vmatprep.subr.bf16.mxu0 %v479
    %1167 = vmatpush1.bf16.msra.mxu0 %v478
    %1168 = vmatprep.subr.bf16.mxu0 %v483
    %1169 = vmatpush1.bf16.msra.mxu0 %v482
    %1170 = vmatprep.subr.bf16.mxu0 %v487
    %1171 = vmatpush1.bf16.msra.mxu0 %v486
    %1172 = vmatprep.subr.bf16.mxu0 %v491
    %1173 = vmatpush1.bf16.msra.mxu0 %v490
    %1174 = vmatprep.subr.bf16.mxu0 %v495
    %1175 = vmatpush1.bf16.msra.mxu0 %v494
    %1176 = vmatprep.subr.bf16.mxu0 %v499
    %1177 = vmatpush1.bf16.msra.mxu0 %v498
    %1178 = vmatprep.subr.bf16.mxu0 %v503
    %1179 = vmatpush1.bf16.msra.mxu0 %v502
    %1180 = vmatprep.subr.bf16.mxu0 %v507
    %1181 = vmatpush1.bf16.msra.mxu0 %v506
    %1182 = vmatprep.subr.bf16.mxu0 %v511
    %1183 = vmatpush1.bf16.msra.mxu0 %v510
    %1184 = vmatprep.mubr.bf16.mxu0 %v682
    %1185 = vmatmul.mubr.bf16.gmra.mrb[0].mxu0 %v1110
    %v1186 = vpop.f32.mrb[0].mxu0
    %v1187 = vadd.f32 %v224, %v1186
    %v1188 = vpop.f32.mrb[0].mxu0
    %v1189 = vadd.f32 %v228, %v1188
    %v1190 = vpop.f32.mrb[0].mxu0
    %v1191 = vpop.f32.mrb[0].mxu0
    %1192 = vdwg.mxu0
    %v1193 = vxor.u32 %v1146, 2147483648
    %v1194 = vmul.f32 %v1193, 1.442695
    %v1195 = vpow.pop %v1194
    %v1196 = vadd.f32 %v1195, 1.0
    %v1197 = vrcp.pop %v1196
    %v1198 = vmul.f32 1.0, %v1197
    %v1199 = vxor.u32 %v1148, 2147483648
    %v1200 = vmul.f32 %v1199, 1.442695
    %v1201 = vpow.pop %v1200
    %v1202 = vadd.f32 %v1201, 1.0
    %v1203 = vrcp.pop %v1202
    %v1204 = vmul.f32 1.0, %v1203
    %v1205 = vtanh.pop %v1187
    %v1206 = vxor.u32 %v1189, 2147483648
    %v1207 = vmul.f32 %v1206, 1.442695
    %v1208 = vpow.pop %v1207
    %v1209 = vadd.f32 %v1208, 1.0
    %v1210 = vrcp.pop %v1209
    %v1211 = vmul.f32 1.0, %v1210
    %v1212 = vmul.f32 %v1204, %v679
    %v1213 = vmul.f32 %v1198, %v1205
    %v1214 = vadd.f32 %v1212, %v1213
    %v1215 = vtanh.pop %v1214
    %v1216 = vmul.f32 %v1211, %v1215
    %v1217 = vpack.c.bf16 %v1216, %v1216
    %v1218 = vpack.c.bf16 %v1108, %v1108
    %1219 = vmatprep.subr.bf16.mxu0 %v876
    %1220 = vmatpush1.bf16.msra.mxu0 %v875
    %1221 = vmatprep.subr.bf16.mxu0 %v880
    %1222 = vmatpush1.bf16.msra.mxu0 %v879
    %1223 = vmatprep.subr.bf16.mxu0 %v884
    %1224 = vmatpush1.bf16.msra.mxu0 %v883
    %1225 = vmatprep.subr.bf16.mxu0 %v888
    %1226 = vmatpush1.bf16.msra.mxu0 %v887
    %1227 = vmatprep.subr.bf16.mxu0 %v892
    %1228 = vmatpush1.bf16.msra.mxu0 %v891
    %1229 = vmatprep.subr.bf16.mxu0 %v896
    %1230 = vmatpush1.bf16.msra.mxu0 %v895
    %1231 = vmatprep.subr.bf16.mxu0 %v900
    %1232 = vmatpush1.bf16.msra.mxu0 %v899
    %1233 = vmatprep.subr.bf16.mxu0 %v904
    %1234 = vmatpush1.bf16.msra.mxu0 %v903
    %1235 = vmatprep.subr.bf16.mxu0 %v908
    %1236 = vmatpush1.bf16.msra.mxu0 %v907
    %1237 = vmatprep.subr.bf16.mxu0 %v912
    %1238 = vmatpush1.bf16.msra.mxu0 %v911
    %1239 = vmatprep.subr.bf16.mxu0 %v916
    %1240 = vmatpush1.bf16.msra.mxu0 %v915
    %1241 = vmatprep.subr.bf16.mxu0 %v920
    %1242 = vmatpush1.bf16.msra.mxu0 %v919
    %1243 = vmatprep.subr.bf16.mxu0 %v924
    %1244 = vmatpush1.bf16.msra.mxu0 %v923
    %1245 = vmatprep.subr.bf16.mxu0 %v928
    %1246 = vmatpush1.bf16.msra.mxu0 %v927
    %1247 = vmatprep.subr.bf16.mxu0 %v932
    %1248 = vmatpush1.bf16.msra.mxu0 %v931
    %1249 = vmatprep.subr.bf16.mxu0 %v936
    %1250 = vmatpush1.bf16.msra.mxu0 %v935
    %1251 = vmatprep.mubr.bf16.mxu0 %v1218
    %1252 = vmatmul.mubr.bf16.gmra.mrb[0].mxu0 %v1217
    %v1253 = vpop.f32.mrb[0].mxu0
    %v1254 = vadd.f32 %v238, %v1253
    %v1255 = vpop.f32.mrb[0].mxu0
    %v1256 = vadd.f32 %v242, %v1255
    %v1257 = vpop.f32.mrb[0].mxu0
    %v1258 = vpop.f32.mrb[0].mxu0
    %1259 = vdwg.mxu0
    %1260 = vmatprep.subr.bf16.mxu0 %v878
    %1261 = vmatpush1.bf16.msra.mxu0 %v877
    %1262 = vmatprep.subr.bf16.mxu0 %v882
    %1263 = vmatpush1.bf16.msra.mxu0 %v881
    %1264 = vmatprep.subr.bf16.mxu0 %v886
    %1265 = vmatpush1.bf16.msra.mxu0 %v885
    %1266 = vmatprep.subr.bf16.mxu0 %v890
    %1267 = vmatpush1.bf16.msra.mxu0 %v889
    %1268 = vmatprep.subr.bf16.mxu0 %v894
    %1269 = vmatpush1.bf16.msra.mxu0 %v893
    %1270 = vmatprep.subr.bf16.mxu0 %v898
    %1271 = vmatpush1.bf16.msra.mxu0 %v897
    %1272 = vmatprep.subr.bf16.mxu0 %v902
    %1273 = vmatpush1.bf16.msra.mxu0 %v901
    %1274 = vmatprep.subr.bf16.mxu0 %v906
    %1275 = vmatpush1.bf16.msra.mxu0 %v905
    %1276 = vmatprep.subr.bf16.mxu0 %v910
    %1277 = vmatpush1.bf16.msra.mxu0 %v909
    %1278 = vmatprep.subr.bf16.mxu0 %v914
    %1279 = vmatpush1.bf16.msra.mxu0 %v913
    %1280 = vmatprep.subr.bf16.mxu0 %v918
    %1281 = vmatpush1.bf16.msra.mxu0 %v917
    %1282 = vmatprep.subr.bf16.mxu0 %v922
    %1283 = vmatpush1.bf16.msra.mxu0 %v921
    %1284 = vmatprep.subr.bf16.mxu0 %v926
    %1285 = vmatpush1.bf16.msra.mxu0 %v925
    %1286 = vmatprep.subr.bf16.mxu0 %v930
    %1287 = vmatpush1.bf16.msra.mxu0 %v929
    %1288 = vmatprep.subr.bf16.mxu0 %v934
    %1289 = vmatpush1.bf16.msra.mxu0 %v933
    %1290 = vmatprep.subr.bf16.mxu0 %v938
    %1291 = vmatpush1.bf16.msra.mxu0 %v937
    %1292 = vmatprep.mubr.bf16.mxu0 %v1218
    %1293 = vmatmul.mubr.bf16.gmra.mrb[0].mxu0 %v1217
    %v1294 = vpop.f32.mrb[0].mxu0
    %v1295 = vadd.f32 %v246, %v1294
    %v1296 = vpop.f32.mrb[0].mxu0
    %v1297 = vadd.f32 %v250, %v1296
    %v1298 = vpop.f32.mrb[0].mxu0
    %v1299 = vpop.f32.mrb[0].mxu0
    %1300 = vdwg.mxu0
    %v1301 = vxor.u32 %v1254, 2147483648
    %v1302 = vmul.f32 %v1301, 1.442695
    %v1303 = vpow.pop %v1302
    %v1304 = vadd.f32 %v1303, 1.0
    %v1305 = vrcp.pop %v1304
    %v1306 = vmul.f32 1.0, %v1305
    %v1307 = vxor.u32 %v1256, 2147483648
    %v1308 = vmul.f32 %v1307, 1.442695
    %v1309 = vpow.pop %v1308
    %v1310 = vadd.f32 %v1309, 1.0
    %v1311 = vrcp.pop %v1310
    %v1312 = vmul.f32 1.0, %v1311
    %v1313 = vtanh.pop %v1295
    %v1314 = vxor.u32 %v1297, 2147483648
    %v1315 = vmul.f32 %v1314, 1.442695
    %v1316 = vpow.pop %v1315
    %v1317 = vadd.f32 %v1316, 1.0
    %v1318 = vrcp.pop %v1317
    %v1319 = vmul.f32 1.0, %v1318
    %v1320 = vmul.f32 %v1312, %v1106
    %v1321 = vmul.f32 %v1306, %v1313
    %v1322 = vadd.f32 %v1320, %v1321
    %v1323 = vtanh.pop %v1322
    %v1324 = vmul.f32 %v1319, %v1323
    %s1325 = scalar_lea.vmem [#allocation2], 8
    %v1326 = vld [vmem:[%s1325] sm:$0xf]
    %1327 = vmatprep.subr.bf16.mxu0 %v449
    %1328 = vmatpush1.bf16.msra.mxu0 %v448
    %1329 = vmatprep.subr.bf16.mxu0 %v453
    %1330 = vmatpush1.bf16.msra.mxu0 %v452
    %1331 = vmatprep.subr.bf16.mxu0 %v457
    %1332 = vmatpush1.bf16.msra.mxu0 %v456
    %1333 = vmatprep.subr.bf16.mxu0 %v461
    %1334 = vmatpush1.bf16.msra.mxu0 %v460
    %1335 = vmatprep.subr.bf16.mxu0 %v465
    %1336 = vmatpush1.bf16.msra.mxu0 %v464
    %1337 = vmatprep.subr.bf16.mxu0 %v469
    %1338 = vmatpush1.bf16.msra.mxu0 %v468
    %1339 = vmatprep.subr.bf16.mxu0 %v473
    %1340 = vmatpush1.bf16.msra.mxu0 %v472
    %1341 = vmatprep.subr.bf16.mxu0 %v477
    %1342 = vmatpush1.bf16.msra.mxu0 %v476
    %1343 = vmatprep.subr.bf16.mxu0 %v481
    %1344 = vmatpush1.bf16.msra.mxu0 %v480
    %1345 = vmatprep.subr.bf16.mxu0 %v485
    %1346 = vmatpush1.bf16.msra.mxu0 %v484
    %1347 = vmatprep.subr.bf16.mxu0 %v489
    %1348 = vmatpush1.bf16.msra.mxu0 %v488
    %1349 = vmatprep.subr.bf16.mxu0 %v493
    %1350 = vmatpush1.bf16.msra.mxu0 %v492
    %1351 = vmatprep.subr.bf16.mxu0 %v497
    %1352 = vmatpush1.bf16.msra.mxu0 %v496
    %1353 = vmatprep.subr.bf16.mxu0 %v501
    %1354 = vmatpush1.bf16.msra.mxu0 %v500
    %1355 = vmatprep.subr.bf16.mxu0 %v505
    %1356 = vmatpush1.bf16.msra.mxu0 %v504
    %1357 = vmatprep.subr.bf16.mxu0 %v509
    %1358 = vmatpush1.bf16.msra.mxu0 %v508
    %1359 = vmatprep.mubr.bf16.mxu0 %v1217
    %1360 = vmatmul.mubr.bf16.gmra.mrb[0].mxu0 %v1326
    %v1361 = vpop.f32.mrb[0].mxu0
    %v1362 = vadd.f32 %v216, %v1361
    %v1363 = vpop.f32.mrb[0].mxu0
    %v1364 = vadd.f32 %v220, %v1363
    %v1365 = vpop.f32.mrb[0].mxu0
    %v1366 = vpop.f32.mrb[0].mxu0
    %1367 = vdwg.mxu0
    %1368 = vmatprep.subr.bf16.mxu0 %v451
    %1369 = vmatpush1.bf16.msra.mxu0 %v450
    %1370 = vmatprep.subr.bf16.mxu0 %v455
    %1371 = vmatpush1.bf16.msra.mxu0 %v454
    %1372 = vmatprep.subr.bf16.mxu0 %v459
    %1373 = vmatpush1.bf16.msra.mxu0 %v458
    %1374 = vmatprep.subr.bf16.mxu0 %v463
    %1375 = vmatpush1.bf16.msra.mxu0 %v462
    %1376 = vmatprep.subr.bf16.mxu0 %v467
    %1377 = vmatpush1.bf16.msra.mxu0 %v466
    %1378 = vmatprep.subr.bf16.mxu0 %v471
    %1379 = vmatpush1.bf16.msra.mxu0 %v470
    %1380 = vmatprep.subr.bf16.mxu0 %v475
    %1381 = vmatpush1.bf16.msra.mxu0 %v474
    %1382 = vmatprep.subr.bf16.mxu0 %v479
    %1383 = vmatpush1.bf16.msra.mxu0 %v478
    %1384 = vmatprep.subr.bf16.mxu0 %v483
    %1385 = vmatpush1.bf16.msra.mxu0 %v482
    %1386 = vmatprep.subr.bf16.mxu0 %v487
    %1387 = vmatpush1.bf16.msra.mxu0 %v486
    %1388 = vmatprep.subr.bf16.mxu0 %v491
    %1389 = vmatpush1.bf16.msra.mxu0 %v490
    %1390 = vmatprep.subr.bf16.mxu0 %v495
    %1391 = vmatpush1.bf16.msra.mxu0 %v494
    %1392 = vmatprep.subr.bf16.mxu0 %v499
    %1393 = vmatpush1.bf16.msra.mxu0 %v498
    %1394 = vmatprep.subr.bf16.mxu0 %v503
    %1395 = vmatpush1.bf16.msra.mxu0 %v502
    %1396 = vmatprep.subr.bf16.mxu0 %v507
    %1397 = vmatpush1.bf16.msra.mxu0 %v506
    %1398 = vmatprep.subr.bf16.mxu0 %v511
    %1399 = vmatpush1.bf16.msra.mxu0 %v510
    %1400 = vmatprep.mubr.bf16.mxu0 %v1217
    %1401 = vmatmul.mubr.bf16.gmra.mrb[0].mxu0 %v1326
    %v1402 = vpop.f32.mrb[0].mxu0
    %v1403 = vadd.f32 %v224, %v1402
    %v1404 = vpop.f32.mrb[0].mxu0
    %v1405 = vadd.f32 %v228, %v1404
    %v1406 = vpop.f32.mrb[0].mxu0
    %v1407 = vpop.f32.mrb[0].mxu0
    %1408 = vdwg.mxu0
    %v1409 = vxor.u32 %v1362, 2147483648
    %v1410 = vmul.f32 %v1409, 1.442695
    %v1411 = vpow.pop %v1410
    %v1412 = vadd.f32 %v1411, 1.0
    %v1413 = vrcp.pop %v1412
    %v1414 = vmul.f32 1.0, %v1413
    %v1415 = vxor.u32 %v1364, 2147483648
    %v1416 = vmul.f32 %v1415, 1.442695
    %v1417 = vpow.pop %v1416
    %v1418 = vadd.f32 %v1417, 1.0
    %v1419 = vrcp.pop %v1418
    %v1420 = vmul.f32 1.0, %v1419
    %v1421 = vtanh.pop %v1403
    %v1422 = vxor.u32 %v1405, 2147483648
    %v1423 = vmul.f32 %v1422, 1.442695
    %v1424 = vpow.pop %v1423
    %v1425 = vadd.f32 %v1424, 1.0
    %v1426 = vrcp.pop %v1425
    %v1427 = vmul.f32 1.0, %v1426
    %v1428 = vmul.f32 %v1420, %v1214
    %v1429 = vmul.f32 %v1414, %v1421
    %v1430 = vadd.f32 %v1428, %v1429
    %v1431 = vtanh.pop %v1430
    %v1432 = vmul.f32 %v1427, %v1431
    %v1433 = vpack.c.bf16 %v1432, %v1432
    %v1434 = vpack.c.bf16 %v1324, %v1324
    %1435 = vmatprep.subr.bf16.mxu0 %v876
    %1436 = vmatpush1.bf16.msra.mxu0 %v875
    %1437 = vmatprep.subr.bf16.mxu0 %v880
    %1438 = vmatpush1.bf16.msra.mxu0 %v879
    %1439 = vmatprep.subr.bf16.mxu0 %v884
    %1440 = vmatpush1.bf16.msra.mxu0 %v883
    %1441 = vmatprep.subr.bf16.mxu0 %v888
    %1442 = vmatpush1.bf16.msra.mxu0 %v887
    %1443 = vmatprep.subr.bf16.mxu0 %v892
    %1444 = vmatpush1.bf16.msra.mxu0 %v891
    %1445 = vmatprep.subr.bf16.mxu0 %v896
    %1446 = vmatpush1.bf16.msra.mxu0 %v895
    %1447 = vmatprep.subr.bf16.mxu0 %v900
    %1448 = vmatpush1.bf16.msra.mxu0 %v899
    %1449 = vmatprep.subr.bf16.mxu0 %v904
    %1450 = vmatpush1.bf16.msra.mxu0 %v903
    %1451 = vmatprep.subr.bf16.mxu0 %v908
    %1452 = vmatpush1.bf16.msra.mxu0 %v907
    %1453 = vmatprep.subr.bf16.mxu0 %v912
    %1454 = vmatpush1.bf16.msra.mxu0 %v911
    %1455 = vmatprep.subr.bf16.mxu0 %v916
    %1456 = vmatpush1.bf16.msra.mxu0 %v915
    %1457 = vmatprep.subr.bf16.mxu0 %v920
    %1458 = vmatpush1.bf16.msra.mxu0 %v919
    %1459 = vmatprep.subr.bf16.mxu0 %v924
    %1460 = vmatpush1.bf16.msra.mxu0 %v923
    %1461 = vmatprep.subr.bf16.mxu0 %v928
    %1462 = vmatpush1.bf16.msra.mxu0 %v927
    %1463 = vmatprep.subr.bf16.mxu0 %v932
    %1464 = vmatpush1.bf16.msra.mxu0 %v931
    %1465 = vmatprep.subr.bf16.mxu0 %v936
    %1466 = vmatpush1.bf16.msra.mxu0 %v935
    %1467 = vmatprep.mubr.bf16.mxu0 %v1434
    %1468 = vmatmul.mubr.bf16.gmra.mrb[0].mxu0 %v1433
    %v1469 = vpop.f32.mrb[0].mxu0
    %v1470 = vadd.f32 %v238, %v1469
    %v1471 = vpop.f32.mrb[0].mxu0
    %v1472 = vadd.f32 %v242, %v1471
    %v1473 = vpop.f32.mrb[0].mxu0
    %v1474 = vpop.f32.mrb[0].mxu0
    %1475 = vdwg.mxu0
    %1476 = vmatprep.subr.bf16.mxu0 %v878
    %1477 = vmatpush1.bf16.msra.mxu0 %v877
    %1478 = vmatprep.subr.bf16.mxu0 %v882
    %1479 = vmatpush1.bf16.msra.mxu0 %v881
    %1480 = vmatprep.subr.bf16.mxu0 %v886
    %1481 = vmatpush1.bf16.msra.mxu0 %v885
    %1482 = vmatprep.subr.bf16.mxu0 %v890
    %1483 = vmatpush1.bf16.msra.mxu0 %v889
    %1484 = vmatprep.subr.bf16.mxu0 %v894
    %1485 = vmatpush1.bf16.msra.mxu0 %v893
    %1486 = vmatprep.subr.bf16.mxu0 %v898
    %1487 = vmatpush1.bf16.msra.mxu0 %v897
    %1488 = vmatprep.subr.bf16.mxu0 %v902
    %1489 = vmatpush1.bf16.msra.mxu0 %v901
    %1490 = vmatprep.subr.bf16.mxu0 %v906
    %1491 = vmatpush1.bf16.msra.mxu0 %v905
    %1492 = vmatprep.subr.bf16.mxu0 %v910
    %1493 = vmatpush1.bf16.msra.mxu0 %v909
    %1494 = vmatprep.subr.bf16.mxu0 %v914
    %1495 = vmatpush1.bf16.msra.mxu0 %v913
    %1496 = vmatprep.subr.bf16.mxu0 %v918
    %1497 = vmatpush1.bf16.msra.mxu0 %v917
    %1498 = vmatprep.subr.bf16.mxu0 %v922
    %1499 = vmatpush1.bf16.msra.mxu0 %v921
    %1500 = vmatprep.subr.bf16.mxu0 %v926
    %1501 = vmatpush1.bf16.msra.mxu0 %v925
    %1502 = vmatprep.subr.bf16.mxu0 %v930
    %1503 = vmatpush1.bf16.msra.mxu0 %v929
    %1504 = vmatprep.subr.bf16.mxu0 %v934
    %1505 = vmatpush1.bf16.msra.mxu0 %v933
    %1506 = vmatprep.subr.bf16.mxu0 %v938
    %1507 = vmatpush1.bf16.msra.mxu0 %v937
    %1508 = vmatprep.mubr.bf16.mxu0 %v1434
    %1509 = vmatmul.mubr.bf16.gmra.mrb[0].mxu0 %v1433
    %v1510 = vpop.f32.mrb[0].mxu0
    %v1511 = vadd.f32 %v246, %v1510
    %v1512 = vpop.f32.mrb[0].mxu0
    %v1513 = vadd.f32 %v250, %v1512
    %v1514 = vpop.f32.mrb[0].mxu0
    %v1515 = vpop.f32.mrb[0].mxu0
    %1516 = vdwg.mxu0
    %v1517 = vxor.u32 %v1470, 2147483648
    %v1518 = vmul.f32 %v1517, 1.442695
    %v1519 = vpow.pop %v1518
    %v1520 = vadd.f32 %v1519, 1.0
    %v1521 = vrcp.pop %v1520
    %v1522 = vmul.f32 1.0, %v1521
    %v1523 = vxor.u32 %v1472, 2147483648
    %v1524 = vmul.f32 %v1523, 1.442695
    %v1525 = vpow.pop %v1524
    %v1526 = vadd.f32 %v1525, 1.0
    %v1527 = vrcp.pop %v1526
    %v1528 = vmul.f32 1.0, %v1527
    %v1529 = vtanh.pop %v1511
    %v1530 = vxor.u32 %v1513, 2147483648
    %v1531 = vmul.f32 %v1530, 1.442695
    %v1532 = vpow.pop %v1531
    %v1533 = vadd.f32 %v1532, 1.0
    %v1534 = vrcp.pop %v1533
    %v1535 = vmul.f32 1.0, %v1534
    %v1536 = vmul.f32 %v1528, %v1322
    %v1537 = vmul.f32 %v1522, %v1529
    %v1538 = vadd.f32 %v1536, %v1537
    %v1539 = vtanh.pop %v1538
    %v1540 = vmul.f32 %v1535, %v1539
    %s1541 = scalar_lea.vmem [#allocation2], 12
    %v1542 = vld [vmem:[%s1541] sm:$0xf]
    %1543 = vmatprep.subr.bf16.mxu0 %v449
    %1544 = vmatpush1.bf16.msra.mxu0 %v448
    %1545 = vmatprep.subr.bf16.mxu0 %v453
    %1546 = vmatpush1.bf16.msra.mxu0 %v452
    %1547 = vmatprep.subr.bf16.mxu0 %v457
    %1548 = vmatpush1.bf16.msra.mxu0 %v456
    %1549 = vmatprep.subr.bf16.mxu0 %v461
    %1550 = vmatpush1.bf16.msra.mxu0 %v460
    %1551 = vmatprep.subr.bf16.mxu0 %v465
    %1552 = vmatpush1.bf16.msra.mxu0 %v464
    %1553 = vmatprep.subr.bf16.mxu0 %v469
    %1554 = vmatpush1.bf16.msra.mxu0 %v468
    %1555 = vmatprep.subr.bf16.mxu0 %v473
    %1556 = vmatpush1.bf16.msra.mxu0 %v472
    %1557 = vmatprep.subr.bf16.mxu0 %v477
    %1558 = vmatpush1.bf16.msra.mxu0 %v476
    %1559 = vmatprep.subr.bf16.mxu0 %v481
    %1560 = vmatpush1.bf16.msra.mxu0 %v480
    %1561 = vmatprep.subr.bf16.mxu0 %v485
    %1562 = vmatpush1.bf16.msra.mxu0 %v484
    %1563 = vmatprep.subr.bf16.mxu0 %v489
    %1564 = vmatpush1.bf16.msra.mxu0 %v488
    %1565 = vmatprep.subr.bf16.mxu0 %v493
    %1566 = vmatpush1.bf16.msra.mxu0 %v492
    %1567 = vmatprep.subr.bf16.mxu0 %v497
    %1568 = vmatpush1.bf16.msra.mxu0 %v496
    %1569 = vmatprep.subr.bf16.mxu0 %v501
    %1570 = vmatpush1.bf16.msra.mxu0 %v500
    %1571 = vmatprep.subr.bf16.mxu0 %v505
    %1572 = vmatpush1.bf16.msra.mxu0 %v504
    %1573 = vmatprep.subr.bf16.mxu0 %v509
    %1574 = vmatpush1.bf16.msra.mxu0 %v508
    %1575 = vmatprep.mubr.bf16.mxu0 %v1433
    %1576 = vmatmul.mubr.bf16.gmra.mrb[0].mxu0 %v1542
    %v1577 = vpop.f32.mrb[0].mxu0
    %v1578 = vadd.f32 %v216, %v1577
    %v1579 = vpop.f32.mrb[0].mxu0
    %v1580 = vadd.f32 %v220, %v1579
    %v1581 = vpop.f32.mrb[0].mxu0
    %v1582 = vpop.f32.mrb[0].mxu0
    %1583 = vdwg.mxu0
    %1584 = vmatprep.subr.bf16.mxu0 %v451
    %1585 = vmatpush1.bf16.msra.mxu0 %v450
    %1586 = vmatprep.subr.bf16.mxu0 %v455
    %1587 = vmatpush1.bf16.msra.mxu0 %v454
    %1588 = vmatprep.subr.bf16.mxu0 %v459
    %1589 = vmatpush1.bf16.msra.mxu0 %v458
    %1590 = vmatprep.subr.bf16.mxu0 %v463
    %1591 = vmatpush1.bf16.msra.mxu0 %v462
    %1592 = vmatprep.subr.bf16.mxu0 %v467
    %1593 = vmatpush1.bf16.msra.mxu0 %v466
    %1594 = vmatprep.subr.bf16.mxu0 %v471
    %1595 = vmatpush1.bf16.msra.mxu0 %v470
    %1596 = vmatprep.subr.bf16.mxu0 %v475
    %1597 = vmatpush1.bf16.msra.mxu0 %v474
    %1598 = vmatprep.subr.bf16.mxu0 %v479
    %1599 = vmatpush1.bf16.msra.mxu0 %v478
    %1600 = vmatprep.subr.bf16.mxu0 %v483
    %1601 = vmatpush1.bf16.msra.mxu0 %v482
    %1602 = vmatprep.subr.bf16.mxu0 %v487
    %1603 = vmatpush1.bf16.msra.mxu0 %v486
    %1604 = vmatprep.subr.bf16.mxu0 %v491
    %1605 = vmatpush1.bf16.msra.mxu0 %v490
    %1606 = vmatprep.subr.bf16.mxu0 %v495
    %1607 = vmatpush1.bf16.msra.mxu0 %v494
    %1608 = vmatprep.subr.bf16.mxu0 %v499
    %1609 = vmatpush1.bf16.msra.mxu0 %v498
    %1610 = vmatprep.subr.bf16.mxu0 %v503
    %1611 = vmatpush1.bf16.msra.mxu0 %v502
    %1612 = vmatprep.subr.bf16.mxu0 %v507
    %1613 = vmatpush1.bf16.msra.mxu0 %v506
    %1614 = vmatprep.subr.bf16.mxu0 %v511
    %1615 = vmatpush1.bf16.msra.mxu0 %v510
    %1616 = vmatprep.mubr.bf16.mxu0 %v1433
    %1617 = vmatmul.mubr.bf16.gmra.mrb[0].mxu0 %v1542
    %v1618 = vpop.f32.mrb[0].mxu0
    %v1619 = vadd.f32 %v224, %v1618
    %v1620 = vpop.f32.mrb[0].mxu0
    %v1621 = vadd.f32 %v228, %v1620
    %v1622 = vpop.f32.mrb[0].mxu0
    %v1623 = vpop.f32.mrb[0].mxu0
    %1624 = vdwg.mxu0
    %v1625 = vxor.u32 %v1578, 2147483648
    %v1626 = vmul.f32 %v1625, 1.442695
    %v1627 = vpow.pop %v1626
    %v1628 = vadd.f32 %v1627, 1.0
    %v1629 = vrcp.pop %v1628
    %v1630 = vmul.f32 1.0, %v1629
    %v1631 = vxor.u32 %v1580, 2147483648
    %v1632 = vmul.f32 %v1631, 1.442695
    %v1633 = vpow.pop %v1632
    %v1634 = vadd.f32 %v1633, 1.0
    %v1635 = vrcp.pop %v1634
    %v1636 = vmul.f32 1.0, %v1635
    %v1637 = vtanh.pop %v1619
    %v1638 = vxor.u32 %v1621, 2147483648
    %v1639 = vmul.f32 %v1638, 1.442695
    %v1640 = vpow.pop %v1639
    %v1641 = vadd.f32 %v1640, 1.0
    %v1642 = vrcp.pop %v1641
    %v1643 = vmul.f32 1.0, %v1642
    %v1644 = vmul.f32 %v1636, %v1430
    %v1645 = vmul.f32 %v1630, %v1637
    %v1646 = vadd.f32 %v1644, %v1645
    %v1647 = vtanh.pop %v1646
    %v1648 = vmul.f32 %v1643, %v1647
    %v1649 = vpack.c.bf16 %v1648, %v1648
    %v1650 = vpack.c.bf16 %v1540, %v1540
    %1651 = vmatprep.subr.bf16.mxu0 %v876
    %1652 = vmatpush1.bf16.msra.mxu0 %v875
    %1653 = vmatprep.subr.bf16.mxu0 %v880
    %1654 = vmatpush1.bf16.msra.mxu0 %v879
    %1655 = vmatprep.subr.bf16.mxu0 %v884
    %1656 = vmatpush1.bf16.msra.mxu0 %v883
    %1657 = vmatprep.subr.bf16.mxu0 %v888
    %1658 = vmatpush1.bf16.msra.mxu0 %v887
    %1659 = vmatprep.subr.bf16.mxu0 %v892
    %1660 = vmatpush1.bf16.msra.mxu0 %v891
    %1661 = vmatprep.subr.bf16.mxu0 %v896
    %1662 = vmatpush1.bf16.msra.mxu0 %v895
    %1663 = vmatprep.subr.bf16.mxu0 %v900
    %1664 = vmatpush1.bf16.msra.mxu0 %v899
    %1665 = vmatprep.subr.bf16.mxu0 %v904
    %1666 = vmatpush1.bf16.msra.mxu0 %v903
    %1667 = vmatprep.subr.bf16.mxu0 %v908
    %1668 = vmatpush1.bf16.msra.mxu0 %v907
    %1669 = vmatprep.subr.bf16.mxu0 %v912
    %1670 = vmatpush1.bf16.msra.mxu0 %v911
    %1671 = vmatprep.subr.bf16.mxu0 %v916
    %1672 = vmatpush1.bf16.msra.mxu0 %v915
    %1673 = vmatprep.subr.bf16.mxu0 %v920
    %1674 = vmatpush1.bf16.msra.mxu0 %v919
    %1675 = vmatprep.subr.bf16.mxu0 %v924
    %1676 = vmatpush1.bf16.msra.mxu0 %v923
    %1677 = vmatprep.subr.bf16.mxu0 %v928
    %1678 = vmatpush1.bf16.msra.mxu0 %v927
    %1679 = vmatprep.subr.bf16.mxu0 %v932
    %1680 = vmatpush1.bf16.msra.mxu0 %v931
    %1681 = vmatprep.subr.bf16.mxu0 %v936
    %1682 = vmatpush1.bf16.msra.mxu0 %v935
    %1683 = vmatprep.mubr.bf16.mxu0 %v1650
    %1684 = vmatmul.mubr.bf16.gmra.mrb[0].mxu0 %v1649
    %v1685 = vpop.f32.mrb[0].mxu0
    %v1686 = vadd.f32 %v238, %v1685
    %v1687 = vpop.f32.mrb[0].mxu0
    %v1688 = vadd.f32 %v242, %v1687
    %v1689 = vpop.f32.mrb[0].mxu0
    %v1690 = vpop.f32.mrb[0].mxu0
    %1691 = vdwg.mxu0
    %1692 = vmatprep.subr.bf16.mxu0 %v878
    %1693 = vmatpush1.bf16.msra.mxu0 %v877
    %1694 = vmatprep.subr.bf16.mxu0 %v882
    %1695 = vmatpush1.bf16.msra.mxu0 %v881
    %1696 = vmatprep.subr.bf16.mxu0 %v886
    %1697 = vmatpush1.bf16.msra.mxu0 %v885
    %1698 = vmatprep.subr.bf16.mxu0 %v890
    %1699 = vmatpush1.bf16.msra.mxu0 %v889
    %1700 = vmatprep.subr.bf16.mxu0 %v894
    %1701 = vmatpush1.bf16.msra.mxu0 %v893
    %1702 = vmatprep.subr.bf16.mxu0 %v898
    %1703 = vmatpush1.bf16.msra.mxu0 %v897
    %1704 = vmatprep.subr.bf16.mxu0 %v902
    %1705 = vmatpush1.bf16.msra.mxu0 %v901
    %1706 = vmatprep.subr.bf16.mxu0 %v906
    %1707 = vmatpush1.bf16.msra.mxu0 %v905
    %1708 = vmatprep.subr.bf16.mxu0 %v910
    %1709 = vmatpush1.bf16.msra.mxu0 %v909
    %1710 = vmatprep.subr.bf16.mxu0 %v914
    %1711 = vmatpush1.bf16.msra.mxu0 %v913
    %1712 = vmatprep.subr.bf16.mxu0 %v918
    %1713 = vmatpush1.bf16.msra.mxu0 %v917
    %1714 = vmatprep.subr.bf16.mxu0 %v922
    %1715 = vmatpush1.bf16.msra.mxu0 %v921
    %1716 = vmatprep.subr.bf16.mxu0 %v926
    %1717 = vmatpush1.bf16.msra.mxu0 %v925
    %1718 = vmatprep.subr.bf16.mxu0 %v930
    %1719 = vmatpush1.bf16.msra.mxu0 %v929
    %1720 = vmatprep.subr.bf16.mxu0 %v934
    %1721 = vmatpush1.bf16.msra.mxu0 %v933
    %1722 = vmatprep.subr.bf16.mxu0 %v938
    %1723 = vmatpush1.bf16.msra.mxu0 %v937
    %1724 = vmatprep.mubr.bf16.mxu0 %v1650
    %1725 = vmatmul.mubr.bf16.gmra.mrb[0].mxu0 %v1649
    %v1726 = vpop.f32.mrb[0].mxu0
    %v1727 = vadd.f32 %v246, %v1726
    %v1728 = vpop.f32.mrb[0].mxu0
    %v1729 = vadd.f32 %v250, %v1728
    %v1730 = vpop.f32.mrb[0].mxu0
    %v1731 = vpop.f32.mrb[0].mxu0
    %1732 = vdwg.mxu0
    %v1733 = vxor.u32 %v1686, 2147483648
    %v1734 = vmul.f32 %v1733, 1.442695
    %v1735 = vpow.pop %v1734
    %v1736 = vadd.f32 %v1735, 1.0
    %v1737 = vrcp.pop %v1736
    %v1738 = vmul.f32 1.0, %v1737
    %v1739 = vxor.u32 %v1688, 2147483648
    %v1740 = vmul.f32 %v1739, 1.442695
    %v1741 = vpow.pop %v1740
    %v1742 = vadd.f32 %v1741, 1.0
    %v1743 = vrcp.pop %v1742
    %v1744 = vmul.f32 1.0, %v1743
    %v1745 = vtanh.pop %v1727
    %v1746 = vxor.u32 %v1729, 2147483648
    %v1747 = vmul.f32 %v1746, 1.442695
    %v1748 = vpow.pop %v1747
    %v1749 = vadd.f32 %v1748, 1.0
    %v1750 = vrcp.pop %v1749
    %v1751 = vmul.f32 1.0, %v1750
    %v1752 = vmul.f32 %v1744, %v1538
    %v1753 = vmul.f32 %v1738, %v1745
    %v1754 = vadd.f32 %v1752, %v1753
    %v1755 = vtanh.pop %v1754
    %v1756 = vmul.f32 %v1751, %v1755
    %s1757 = scalar_lea.vmem [#allocation2], 16
    %v1758 = vld [vmem:[%s1757] sm:$0xf]
    %1759 = vmatprep.subr.bf16.mxu0 %v449
    %1760 = vmatpush1.bf16.msra.mxu0 %v448
    %1761 = vmatprep.subr.bf16.mxu0 %v453
    %1762 = vmatpush1.bf16.msra.mxu0 %v452
    %1763 = vmatprep.subr.bf16.mxu0 %v457
    %1764 = vmatpush1.bf16.msra.mxu0 %v456
    %1765 = vmatprep.subr.bf16.mxu0 %v461
    %1766 = vmatpush1.bf16.msra.mxu0 %v460
    %1767 = vmatprep.subr.bf16.mxu0 %v465
    %1768 = vmatpush1.bf16.msra.mxu0 %v464
    %1769 = vmatprep.subr.bf16.mxu0 %v469
    %1770 = vmatpush1.bf16.msra.mxu0 %v468
    %1771 = vmatprep.subr.bf16.mxu0 %v473
    %1772 = vmatpush1.bf16.msra.mxu0 %v472
    %1773 = vmatprep.subr.bf16.mxu0 %v477
    %1774 = vmatpush1.bf16.msra.mxu0 %v476
    %1775 = vmatprep.subr.bf16.mxu0 %v481
    %1776 = vmatpush1.bf16.msra.mxu0 %v480
    %1777 = vmatprep.subr.bf16.mxu0 %v485
    %1778 = vmatpush1.bf16.msra.mxu0 %v484
    %1779 = vmatprep.subr.bf16.mxu0 %v489
    %1780 = vmatpush1.bf16.msra.mxu0 %v488
    %1781 = vmatprep.subr.bf16.mxu0 %v493
    %1782 = vmatpush1.bf16.msra.mxu0 %v492
    %1783 = vmatprep.subr.bf16.mxu0 %v497
    %1784 = vmatpush1.bf16.msra.mxu0 %v496
    %1785 = vmatprep.subr.bf16.mxu0 %v501
    %1786 = vmatpush1.bf16.msra.mxu0 %v500
    %1787 = vmatprep.subr.bf16.mxu0 %v505
    %1788 = vmatpush1.bf16.msra.mxu0 %v504
    %1789 = vmatprep.subr.bf16.mxu0 %v509
    %1790 = vmatpush1.bf16.msra.mxu0 %v508
    %1791 = vmatprep.mubr.bf16.mxu0 %v1649
    %1792 = vmatmul.mubr.bf16.gmra.mrb[0].mxu0 %v1758
    %v1793 = vpop.f32.mrb[0].mxu0
    %v1794 = vadd.f32 %v216, %v1793
    %v1795 = vpop.f32.mrb[0].mxu0
    %v1796 = vadd.f32 %v220, %v1795
    %v1797 = vpop.f32.mrb[0].mxu0
    %v1798 = vpop.f32.mrb[0].mxu0
    %1799 = vdwg.mxu0
    %1800 = vmatprep.subr.bf16.mxu0 %v451
    %1801 = vmatpush1.bf16.msra.mxu0 %v450
    %1802 = vmatprep.subr.bf16.mxu0 %v455
    %1803 = vmatpush1.bf16.msra.mxu0 %v454
    %1804 = vmatprep.subr.bf16.mxu0 %v459
    %1805 = vmatpush1.bf16.msra.mxu0 %v458
    %1806 = vmatprep.subr.bf16.mxu0 %v463
    %1807 = vmatpush1.bf16.msra.mxu0 %v462
    %1808 = vmatprep.subr.bf16.mxu0 %v467
    %1809 = vmatpush1.bf16.msra.mxu0 %v466
    %1810 = vmatprep.subr.bf16.mxu0 %v471
    %1811 = vmatpush1.bf16.msra.mxu0 %v470
    %1812 = vmatprep.subr.bf16.mxu0 %v475
    %1813 = vmatpush1.bf16.msra.mxu0 %v474
    %1814 = vmatprep.subr.bf16.mxu0 %v479
    %1815 = vmatpush1.bf16.msra.mxu0 %v478
    %1816 = vmatprep.subr.bf16.mxu0 %v483
    %1817 = vmatpush1.bf16.msra.mxu0 %v482
    %1818 = vmatprep.subr.bf16.mxu0 %v487
    %1819 = vmatpush1.bf16.msra.mxu0 %v486
    %1820 = vmatprep.subr.bf16.mxu0 %v491
    %1821 = vmatpush1.bf16.msra.mxu0 %v490
    %1822 = vmatprep.subr.bf16.mxu0 %v495
    %1823 = vmatpush1.bf16.msra.mxu0 %v494
    %1824 = vmatprep.subr.bf16.mxu0 %v499
    %1825 = vmatpush1.bf16.msra.mxu0 %v498
    %1826 = vmatprep.subr.bf16.mxu0 %v503
    %1827 = vmatpush1.bf16.msra.mxu0 %v502
    %1828 = vmatprep.subr.bf16.mxu0 %v507
    %1829 = vmatpush1.bf16.msra.mxu0 %v506
    %1830 = vmatprep.subr.bf16.mxu0 %v511
    %1831 = vmatpush1.bf16.msra.mxu0 %v510
    %1832 = vmatprep.mubr.bf16.mxu0 %v1649
    %1833 = vmatmul.mubr.bf16.gmra.mrb[0].mxu0 %v1758
    %v1834 = vpop.f32.mrb[0].mxu0
    %v1835 = vadd.f32 %v224, %v1834
    %v1836 = vpop.f32.mrb[0].mxu0
    %v1837 = vadd.f32 %v228, %v1836
    %v1838 = vpop.f32.mrb[0].mxu0
    %v1839 = vpop.f32.mrb[0].mxu0
    %1840 = vdwg.mxu0
    %v1841 = vxor.u32 %v1794, 2147483648
    %v1842 = vmul.f32 %v1841, 1.442695
    %v1843 = vpow.pop %v1842
    %v1844 = vadd.f32 %v1843, 1.0
    %v1845 = vrcp.pop %v1844
    %v1846 = vmul.f32 1.0, %v1845
    %v1847 = vxor.u32 %v1796, 2147483648
    %v1848 = vmul.f32 %v1847, 1.442695
    %v1849 = vpow.pop %v1848
    %v1850 = vadd.f32 %v1849, 1.0
    %v1851 = vrcp.pop %v1850
    %v1852 = vmul.f32 1.0, %v1851
    %v1853 = vtanh.pop %v1835
    %v1854 = vxor.u32 %v1837, 2147483648
    %v1855 = vmul.f32 %v1854, 1.442695
    %v1856 = vpow.pop %v1855
    %v1857 = vadd.f32 %v1856, 1.0
    %v1858 = vrcp.pop %v1857
    %v1859 = vmul.f32 1.0, %v1858
    %v1860 = vmul.f32 %v1852, %v1646
    %v1861 = vmul.f32 %v1846, %v1853
    %v1862 = vadd.f32 %v1860, %v1861
    %v1863 = vtanh.pop %v1862
    %v1864 = vmul.f32 %v1859, %v1863
    %v1865 = vpack.c.bf16 %v1864, %v1864
    %v1866 = vpack.c.bf16 %v1756, %v1756
    %1867 = vmatprep.subr.bf16.mxu0 %v876
    %1868 = vmatpush1.bf16.msra.mxu0 %v875
    %1869 = vmatprep.subr.bf16.mxu0 %v880
    %1870 = vmatpush1.bf16.msra.mxu0 %v879
    %1871 = vmatprep.subr.bf16.mxu0 %v884
    %1872 = vmatpush1.bf16.msra.mxu0 %v883
    %1873 = vmatprep.subr.bf16.mxu0 %v888
    %1874 = vmatpush1.bf16.msra.mxu0 %v887
    %1875 = vmatprep.subr.bf16.mxu0 %v892
    %1876 = vmatpush1.bf16.msra.mxu0 %v891
    %1877 = vmatprep.subr.bf16.mxu0 %v896
    %1878 = vmatpush1.bf16.msra.mxu0 %v895
    %1879 = vmatprep.subr.bf16.mxu0 %v900
    %1880 = vmatpush1.bf16.msra.mxu0 %v899
    %1881 = vmatprep.subr.bf16.mxu0 %v904
    %1882 = vmatpush1.bf16.msra.mxu0 %v903
    %1883 = vmatprep.subr.bf16.mxu0 %v908
    %1884 = vmatpush1.bf16.msra.mxu0 %v907
    %1885 = vmatprep.subr.bf16.mxu0 %v912
    %1886 = vmatpush1.bf16.msra.mxu0 %v911
    %1887 = vmatprep.subr.bf16.mxu0 %v916
    %1888 = vmatpush1.bf16.msra.mxu0 %v915
    %1889 = vmatprep.subr.bf16.mxu0 %v920
    %1890 = vmatpush1.bf16.msra.mxu0 %v919
    %1891 = vmatprep.subr.bf16.mxu0 %v924
    %1892 = vmatpush1.bf16.msra.mxu0 %v923
    %1893 = vmatprep.subr.bf16.mxu0 %v928
    %1894 = vmatpush1.bf16.msra.mxu0 %v927
    %1895 = vmatprep.subr.bf16.mxu0 %v932
    %1896 = vmatpush1.bf16.msra.mxu0 %v931
    %1897 = vmatprep.subr.bf16.mxu0 %v936
    %1898 = vmatpush1.bf16.msra.mxu0 %v935
    %1899 = vmatprep.mubr.bf16.mxu0 %v1866
    %1900 = vmatmul.mubr.bf16.gmra.mrb[0].mxu0 %v1865
    %v1901 = vpop.f32.mrb[0].mxu0
    %v1902 = vadd.f32 %v238, %v1901
    %v1903 = vpop.f32.mrb[0].mxu0
    %v1904 = vadd.f32 %v242, %v1903
    %v1905 = vpop.f32.mrb[0].mxu0
    %v1906 = vpop.f32.mrb[0].mxu0
    %1907 = vdwg.mxu0
    %1908 = vmatprep.subr.bf16.mxu0 %v878
    %1909 = vmatpush1.bf16.msra.mxu0 %v877
    %1910 = vmatprep.subr.bf16.mxu0 %v882
    %1911 = vmatpush1.bf16.msra.mxu0 %v881
    %1912 = vmatprep.subr.bf16.mxu0 %v886
    %1913 = vmatpush1.bf16.msra.mxu0 %v885
    %1914 = vmatprep.subr.bf16.mxu0 %v890
    %1915 = vmatpush1.bf16.msra.mxu0 %v889
    %1916 = vmatprep.subr.bf16.mxu0 %v894
    %1917 = vmatpush1.bf16.msra.mxu0 %v893
    %1918 = vmatprep.subr.bf16.mxu0 %v898
    %1919 = vmatpush1.bf16.msra.mxu0 %v897
    %1920 = vmatprep.subr.bf16.mxu0 %v902
    %1921 = vmatpush1.bf16.msra.mxu0 %v901
    %1922 = vmatprep.subr.bf16.mxu0 %v906
    %1923 = vmatpush1.bf16.msra.mxu0 %v905
    %1924 = vmatprep.subr.bf16.mxu0 %v910
    %1925 = vmatpush1.bf16.msra.mxu0 %v909
    %1926 = vmatprep.subr.bf16.mxu0 %v914
    %1927 = vmatpush1.bf16.msra.mxu0 %v913
    %1928 = vmatprep.subr.bf16.mxu0 %v918
    %1929 = vmatpush1.bf16.msra.mxu0 %v917
    %1930 = vmatprep.subr.bf16.mxu0 %v922
    %1931 = vmatpush1.bf16.msra.mxu0 %v921
    %1932 = vmatprep.subr.bf16.mxu0 %v926
    %1933 = vmatpush1.bf16.msra.mxu0 %v925
    %1934 = vmatprep.subr.bf16.mxu0 %v930
    %1935 = vmatpush1.bf16.msra.mxu0 %v929
    %1936 = vmatprep.subr.bf16.mxu0 %v934
    %1937 = vmatpush1.bf16.msra.mxu0 %v933
    %1938 = vmatprep.subr.bf16.mxu0 %v938
    %1939 = vmatpush1.bf16.msra.mxu0 %v937
    %1940 = vmatprep.mubr.bf16.mxu0 %v1866
    %1941 = vmatmul.mubr.bf16.gmra.mrb[0].mxu0 %v1865
    %v1942 = vpop.f32.mrb[0].mxu0
    %v1943 = vadd.f32 %v246, %v1942
    %v1944 = vpop.f32.mrb[0].mxu0
    %v1945 = vadd.f32 %v250, %v1944
    %v1946 = vpop.f32.mrb[0].mxu0
    %v1947 = vpop.f32.mrb[0].mxu0
    %1948 = vdwg.mxu0
    %v1949 = vxor.u32 %v1902, 2147483648
    %v1950 = vmul.f32 %v1949, 1.442695
    %v1951 = vpow.pop %v1950
    %v1952 = vadd.f32 %v1951, 1.0
    %v1953 = vrcp.pop %v1952
    %v1954 = vmul.f32 1.0, %v1953
    %v1955 = vxor.u32 %v1904, 2147483648
    %v1956 = vmul.f32 %v1955, 1.442695
    %v1957 = vpow.pop %v1956
    %v1958 = vadd.f32 %v1957, 1.0
    %v1959 = vrcp.pop %v1958
    %v1960 = vmul.f32 1.0, %v1959
    %v1961 = vtanh.pop %v1943
    %v1962 = vxor.u32 %v1945, 2147483648
    %v1963 = vmul.f32 %v1962, 1.442695
    %v1964 = vpow.pop %v1963
    %v1965 = vadd.f32 %v1964, 1.0
    %v1966 = vrcp.pop %v1965
    %v1967 = vmul.f32 1.0, %v1966
    %v1968 = vmul.f32 %v1960, %v1754
    %v1969 = vmul.f32 %v1954, %v1961
    %v1970 = vadd.f32 %v1968, %v1969
    %v1971 = vtanh.pop %v1970
    %v1972 = vmul.f32 %v1967, %v1971
    %s1973 = scalar_lea.vmem [#allocation2], 20
    %v1974 = vld [vmem:[%s1973] sm:$0xf]
    %1975 = vmatprep.subr.bf16.mxu0 %v449
    %1976 = vmatpush1.bf16.msra.mxu0 %v448
    %1977 = vmatprep.subr.bf16.mxu0 %v453
    %1978 = vmatpush1.bf16.msra.mxu0 %v452
    %1979 = vmatprep.subr.bf16.mxu0 %v457
    %1980 = vmatpush1.bf16.msra.mxu0 %v456
    %1981 = vmatprep.subr.bf16.mxu0 %v461
    %1982 = vmatpush1.bf16.msra.mxu0 %v460
    %1983 = vmatprep.subr.bf16.mxu0 %v465
    %1984 = vmatpush1.bf16.msra.mxu0 %v464
    %1985 = vmatprep.subr.bf16.mxu0 %v469
    %1986 = vmatpush1.bf16.msra.mxu0 %v468
    %1987 = vmatprep.subr.bf16.mxu0 %v473
    %1988 = vmatpush1.bf16.msra.mxu0 %v472
    %1989 = vmatprep.subr.bf16.mxu0 %v477
    %1990 = vmatpush1.bf16.msra.mxu0 %v476
    %1991 = vmatprep.subr.bf16.mxu0 %v481
    %1992 = vmatpush1.bf16.msra.mxu0 %v480
    %1993 = vmatprep.subr.bf16.mxu0 %v485
    %1994 = vmatpush1.bf16.msra.mxu0 %v484
    %1995 = vmatprep.subr.bf16.mxu0 %v489
    %1996 = vmatpush1.bf16.msra.mxu0 %v488
    %1997 = vmatprep.subr.bf16.mxu0 %v493
    %1998 = vmatpush1.bf16.msra.mxu0 %v492
    %1999 = vmatprep.subr.bf16.mxu0 %v497
    %2000 = vmatpush1.bf16.msra.mxu0 %v496
    %2001 = vmatprep.subr.bf16.mxu0 %v501
    %2002 = vmatpush1.bf16.msra.mxu0 %v500
    %2003 = vmatprep.subr.bf16.mxu0 %v505
    %2004 = vmatpush1.bf16.msra.mxu0 %v504
    %2005 = vmatprep.subr.bf16.mxu0 %v509
    %2006 = vmatpush1.bf16.msra.mxu0 %v508
    %2007 = vmatprep.mubr.bf16.mxu0 %v1865
    %2008 = vmatmul.mubr.bf16.gmra.mrb[0].mxu0 %v1974
    %v2009 = vpop.f32.mrb[0].mxu0
    %v2010 = vadd.f32 %v216, %v2009
    %v2011 = vpop.f32.mrb[0].mxu0
    %v2012 = vadd.f32 %v220, %v2011
    %v2013 = vpop.f32.mrb[0].mxu0
    %v2014 = vpop.f32.mrb[0].mxu0
    %2015 = vdwg.mxu0
    %2016 = vmatprep.subr.bf16.mxu0 %v451
    %2017 = vmatpush1.bf16.msra.mxu0 %v450
    %2018 = vmatprep.subr.bf16.mxu0 %v455
    %2019 = vmatpush1.bf16.msra.mxu0 %v454
    %2020 = vmatprep.subr.bf16.mxu0 %v459
    %2021 = vmatpush1.bf16.msra.mxu0 %v458
    %2022 = vmatprep.subr.bf16.mxu0 %v463
    %2023 = vmatpush1.bf16.msra.mxu0 %v462
    %2024 = vmatprep.subr.bf16.mxu0 %v467
    %2025 = vmatpush1.bf16.msra.mxu0 %v466
    %2026 = vmatprep.subr.bf16.mxu0 %v471
    %2027 = vmatpush1.bf16.msra.mxu0 %v470
    %2028 = vmatprep.subr.bf16.mxu0 %v475
    %2029 = vmatpush1.bf16.msra.mxu0 %v474
    %2030 = vmatprep.subr.bf16.mxu0 %v479
    %2031 = vmatpush1.bf16.msra.mxu0 %v478
    %2032 = vmatprep.subr.bf16.mxu0 %v483
    %2033 = vmatpush1.bf16.msra.mxu0 %v482
    %2034 = vmatprep.subr.bf16.mxu0 %v487
    %2035 = vmatpush1.bf16.msra.mxu0 %v486
    %2036 = vmatprep.subr.bf16.mxu0 %v491
    %2037 = vmatpush1.bf16.msra.mxu0 %v490
    %2038 = vmatprep.subr.bf16.mxu0 %v495
    %2039 = vmatpush1.bf16.msra.mxu0 %v494
    %2040 = vmatprep.subr.bf16.mxu0 %v499
    %2041 = vmatpush1.bf16.msra.mxu0 %v498
    %2042 = vmatprep.subr.bf16.mxu0 %v503
    %2043 = vmatpush1.bf16.msra.mxu0 %v502
    %2044 = vmatprep.subr.bf16.mxu0 %v507
    %2045 = vmatpush1.bf16.msra.mxu0 %v506
    %2046 = vmatprep.subr.bf16.mxu0 %v511
    %2047 = vmatpush1.bf16.msra.mxu0 %v510
    %2048 = vmatprep.mubr.bf16.mxu0 %v1865
    %2049 = vmatmul.mubr.bf16.gmra.mrb[0].mxu0 %v1974
    %v2050 = vpop.f32.mrb[0].mxu0
    %v2051 = vadd.f32 %v224, %v2050
    %v2052 = vpop.f32.mrb[0].mxu0
    %v2053 = vadd.f32 %v228, %v2052
    %v2054 = vpop.f32.mrb[0].mxu0
    %v2055 = vpop.f32.mrb[0].mxu0
    %2056 = vdwg.mxu0
    %v2057 = vxor.u32 %v2010, 2147483648
    %v2058 = vmul.f32 %v2057, 1.442695
    %v2059 = vpow.pop %v2058
    %v2060 = vadd.f32 %v2059, 1.0
    %v2061 = vrcp.pop %v2060
    %v2062 = vmul.f32 1.0, %v2061
    %v2063 = vxor.u32 %v2012, 2147483648
    %v2064 = vmul.f32 %v2063, 1.442695
    %v2065 = vpow.pop %v2064
    %v2066 = vadd.f32 %v2065, 1.0
    %v2067 = vrcp.pop %v2066
    %v2068 = vmul.f32 1.0, %v2067
    %v2069 = vtanh.pop %v2051
    %v2070 = vxor.u32 %v2053, 2147483648
    %v2071 = vmul.f32 %v2070, 1.442695
    %v2072 = vpow.pop %v2071
    %v2073 = vadd.f32 %v2072, 1.0
    %v2074 = vrcp.pop %v2073
    %v2075 = vmul.f32 1.0, %v2074
    %v2076 = vmul.f32 %v2068, %v1862
    %v2077 = vmul.f32 %v2062, %v2069
    %v2078 = vadd.f32 %v2076, %v2077
    %v2079 = vtanh.pop %v2078
    %v2080 = vmul.f32 %v2075, %v2079
    %v2081 = vpack.c.bf16 %v2080, %v2080
    %v2082 = vpack.c.bf16 %v1972, %v1972
    %2083 = vmatprep.subr.bf16.mxu0 %v876
    %2084 = vmatpush1.bf16.msra.mxu0 %v875
    %2085 = vmatprep.subr.bf16.mxu0 %v880
    %2086 = vmatpush1.bf16.msra.mxu0 %v879
    %2087 = vmatprep.subr.bf16.mxu0 %v884
    %2088 = vmatpush1.bf16.msra.mxu0 %v883
    %2089 = vmatprep.subr.bf16.mxu0 %v888
    %2090 = vmatpush1.bf16.msra.mxu0 %v887
    %2091 = vmatprep.subr.bf16.mxu0 %v892
    %2092 = vmatpush1.bf16.msra.mxu0 %v891
    %2093 = vmatprep.subr.bf16.mxu0 %v896
    %2094 = vmatpush1.bf16.msra.mxu0 %v895
    %2095 = vmatprep.subr.bf16.mxu0 %v900
    %2096 = vmatpush1.bf16.msra.mxu0 %v899
    %2097 = vmatprep.subr.bf16.mxu0 %v904
    %2098 = vmatpush1.bf16.msra.mxu0 %v903
    %2099 = vmatprep.subr.bf16.mxu0 %v908
    %2100 = vmatpush1.bf16.msra.mxu0 %v907
    %2101 = vmatprep.subr.bf16.mxu0 %v912
    %2102 = vmatpush1.bf16.msra.mxu0 %v911
    %2103 = vmatprep.subr.bf16.mxu0 %v916
    %2104 = vmatpush1.bf16.msra.mxu0 %v915
    %2105 = vmatprep.subr.bf16.mxu0 %v920
    %2106 = vmatpush1.bf16.msra.mxu0 %v919
    %2107 = vmatprep.subr.bf16.mxu0 %v924
    %2108 = vmatpush1.bf16.msra.mxu0 %v923
    %2109 = vmatprep.subr.bf16.mxu0 %v928
    %2110 = vmatpush1.bf16.msra.mxu0 %v927
    %2111 = vmatprep.subr.bf16.mxu0 %v932
    %2112 = vmatpush1.bf16.msra.mxu0 %v931
    %2113 = vmatprep.subr.bf16.mxu0 %v936
    %2114 = vmatpush1.bf16.msra.mxu0 %v935
    %2115 = vmatprep.mubr.bf16.mxu0 %v2082
    %2116 = vmatmul.mubr.bf16.gmra.mrb[0].mxu0 %v2081
    %v2117 = vpop.f32.mrb[0].mxu0
    %v2118 = vadd.f32 %v238, %v2117
    %v2119 = vpop.f32.mrb[0].mxu0
    %v2120 = vadd.f32 %v242, %v2119
    %v2121 = vpop.f32.mrb[0].mxu0
    %v2122 = vpop.f32.mrb[0].mxu0
    %2123 = vdwg.mxu0
    %2124 = vmatprep.subr.bf16.mxu0 %v878
    %2125 = vmatpush1.bf16.msra.mxu0 %v877
    %2126 = vmatprep.subr.bf16.mxu0 %v882
    %2127 = vmatpush1.bf16.msra.mxu0 %v881
    %2128 = vmatprep.subr.bf16.mxu0 %v886
    %2129 = vmatpush1.bf16.msra.mxu0 %v885
    %2130 = vmatprep.subr.bf16.mxu0 %v890
    %2131 = vmatpush1.bf16.msra.mxu0 %v889
    %2132 = vmatprep.subr.bf16.mxu0 %v894
    %2133 = vmatpush1.bf16.msra.mxu0 %v893
    %2134 = vmatprep.subr.bf16.mxu0 %v898
    %2135 = vmatpush1.bf16.msra.mxu0 %v897
    %2136 = vmatprep.subr.bf16.mxu0 %v902
    %2137 = vmatpush1.bf16.msra.mxu0 %v901
    %2138 = vmatprep.subr.bf16.mxu0 %v906
    %2139 = vmatpush1.bf16.msra.mxu0 %v905
    %2140 = vmatprep.subr.bf16.mxu0 %v910
    %2141 = vmatpush1.bf16.msra.mxu0 %v909
    %2142 = vmatprep.subr.bf16.mxu0 %v914
    %2143 = vmatpush1.bf16.msra.mxu0 %v913
    %2144 = vmatprep.subr.bf16.mxu0 %v918
    %2145 = vmatpush1.bf16.msra.mxu0 %v917
    %2146 = vmatprep.subr.bf16.mxu0 %v922
    %2147 = vmatpush1.bf16.msra.mxu0 %v921
    %2148 = vmatprep.subr.bf16.mxu0 %v926
    %2149 = vmatpush1.bf16.msra.mxu0 %v925
    %2150 = vmatprep.subr.bf16.mxu0 %v930
    %2151 = vmatpush1.bf16.msra.mxu0 %v929
    %2152 = vmatprep.subr.bf16.mxu0 %v934
    %2153 = vmatpush1.bf16.msra.mxu0 %v933
    %2154 = vmatprep.subr.bf16.mxu0 %v938
    %2155 = vmatpush1.bf16.msra.mxu0 %v937
    %2156 = vmatprep.mubr.bf16.mxu0 %v2082
    %2157 = vmatmul.mubr.bf16.gmra.mrb[0].mxu0 %v2081
    %v2158 = vpop.f32.mrb[0].mxu0
    %v2159 = vadd.f32 %v246, %v2158
    %v2160 = vpop.f32.mrb[0].mxu0
    %v2161 = vadd.f32 %v250, %v2160
    %v2162 = vpop.f32.mrb[0].mxu0
    %v2163 = vpop.f32.mrb[0].mxu0
    %2164 = vdwg.mxu0
    %v2165 = vxor.u32 %v2118, 2147483648
    %v2166 = vmul.f32 %v2165, 1.442695
    %v2167 = vpow.pop %v2166
    %v2168 = vadd.f32 %v2167, 1.0
    %v2169 = vrcp.pop %v2168
    %v2170 = vmul.f32 1.0, %v2169
    %v2171 = vxor.u32 %v2120, 2147483648
    %v2172 = vmul.f32 %v2171, 1.442695
    %v2173 = vpow.pop %v2172
    %v2174 = vadd.f32 %v2173, 1.0
    %v2175 = vrcp.pop %v2174
    %v2176 = vmul.f32 1.0, %v2175
    %v2177 = vtanh.pop %v2159
    %v2178 = vxor.u32 %v2161, 2147483648
    %v2179 = vmul.f32 %v2178, 1.442695
    %v2180 = vpow.pop %v2179
    %v2181 = vadd.f32 %v2180, 1.0
    %v2182 = vrcp.pop %v2181
    %v2183 = vmul.f32 1.0, %v2182
    %v2184 = vmul.f32 %v2176, %v1970
    %v2185 = vmul.f32 %v2170, %v2177
    %v2186 = vadd.f32 %v2184, %v2185
    %v2187 = vtanh.pop %v2186
    %v2188 = vmul.f32 %v2183, %v2187
    %s2189 = scalar_lea.vmem [#allocation2], 24
    %v2190 = vld [vmem:[%s2189] sm:$0xf]
    %2191 = vmatprep.subr.bf16.mxu0 %v449
    %2192 = vmatpush1.bf16.msra.mxu0 %v448
    %2193 = vmatprep.subr.bf16.mxu0 %v453
    %2194 = vmatpush1.bf16.msra.mxu0 %v452
    %2195 = vmatprep.subr.bf16.mxu0 %v457
    %2196 = vmatpush1.bf16.msra.mxu0 %v456
    %2197 = vmatprep.subr.bf16.mxu0 %v461
    %2198 = vmatpush1.bf16.msra.mxu0 %v460
    %2199 = vmatprep.subr.bf16.mxu0 %v465
    %2200 = vmatpush1.bf16.msra.mxu0 %v464
    %2201 = vmatprep.subr.bf16.mxu0 %v469
    %2202 = vmatpush1.bf16.msra.mxu0 %v468
    %2203 = vmatprep.subr.bf16.mxu0 %v473
    %2204 = vmatpush1.bf16.msra.mxu0 %v472
    %2205 = vmatprep.subr.bf16.mxu0 %v477
    %2206 = vmatpush1.bf16.msra.mxu0 %v476
    %2207 = vmatprep.subr.bf16.mxu0 %v481
    %2208 = vmatpush1.bf16.msra.mxu0 %v480
    %2209 = vmatprep.subr.bf16.mxu0 %v485
    %2210 = vmatpush1.bf16.msra.mxu0 %v484
    %2211 = vmatprep.subr.bf16.mxu0 %v489
    %2212 = vmatpush1.bf16.msra.mxu0 %v488
    %2213 = vmatprep.subr.bf16.mxu0 %v493
    %2214 = vmatpush1.bf16.msra.mxu0 %v492
    %2215 = vmatprep.subr.bf16.mxu0 %v497
    %2216 = vmatpush1.bf16.msra.mxu0 %v496
    %2217 = vmatprep.subr.bf16.mxu0 %v501
    %2218 = vmatpush1.bf16.msra.mxu0 %v500
    %2219 = vmatprep.subr.bf16.mxu0 %v505
    %2220 = vmatpush1.bf16.msra.mxu0 %v504
    %2221 = vmatprep.subr.bf16.mxu0 %v509
    %2222 = vmatpush1.bf16.msra.mxu0 %v508
    %2223 = vmatprep.mubr.bf16.mxu0 %v2081
    %2224 = vmatmul.mubr.bf16.gmra.mrb[0].mxu0 %v2190
    %v2225 = vpop.f32.mrb[0].mxu0
    %v2226 = vadd.f32 %v216, %v2225
    %v2227 = vpop.f32.mrb[0].mxu0
    %v2228 = vadd.f32 %v220, %v2227
    %v2229 = vpop.f32.mrb[0].mxu0
    %v2230 = vpop.f32.mrb[0].mxu0
    %2231 = vdwg.mxu0
    %2232 = vmatprep.subr.bf16.mxu0 %v451
    %2233 = vmatpush1.bf16.msra.mxu0 %v450
    %2234 = vmatprep.subr.bf16.mxu0 %v455
    %2235 = vmatpush1.bf16.msra.mxu0 %v454
    %2236 = vmatprep.subr.bf16.mxu0 %v459
    %2237 = vmatpush1.bf16.msra.mxu0 %v458
    %2238 = vmatprep.subr.bf16.mxu0 %v463
    %2239 = vmatpush1.bf16.msra.mxu0 %v462
    %2240 = vmatprep.subr.bf16.mxu0 %v467
    %2241 = vmatpush1.bf16.msra.mxu0 %v466
    %2242 = vmatprep.subr.bf16.mxu0 %v471
    %2243 = vmatpush1.bf16.msra.mxu0 %v470
    %2244 = vmatprep.subr.bf16.mxu0 %v475
    %2245 = vmatpush1.bf16.msra.mxu0 %v474
    %2246 = vmatprep.subr.bf16.mxu0 %v479
    %2247 = vmatpush1.bf16.msra.mxu0 %v478
    %2248 = vmatprep.subr.bf16.mxu0 %v483
    %2249 = vmatpush1.bf16.msra.mxu0 %v482
    %2250 = vmatprep.subr.bf16.mxu0 %v487
    %2251 = vmatpush1.bf16.msra.mxu0 %v486
    %2252 = vmatprep.subr.bf16.mxu0 %v491
    %2253 = vmatpush1.bf16.msra.mxu0 %v490
    %2254 = vmatprep.subr.bf16.mxu0 %v495
    %2255 = vmatpush1.bf16.msra.mxu0 %v494
    %2256 = vmatprep.subr.bf16.mxu0 %v499
    %2257 = vmatpush1.bf16.msra.mxu0 %v498
    %2258 = vmatprep.subr.bf16.mxu0 %v503
    %2259 = vmatpush1.bf16.msra.mxu0 %v502
    %2260 = vmatprep.subr.bf16.mxu0 %v507
    %2261 = vmatpush1.bf16.msra.mxu0 %v506
    %2262 = vmatprep.subr.bf16.mxu0 %v511
    %2263 = vmatpush1.bf16.msra.mxu0 %v510
    %2264 = vmatprep.mubr.bf16.mxu0 %v2081
    %2265 = vmatmul.mubr.bf16.gmra.mrb[0].mxu0 %v2190
    %v2266 = vpop.f32.mrb[0].mxu0
    %v2267 = vadd.f32 %v224, %v2266
    %v2268 = vpop.f32.mrb[0].mxu0
    %v2269 = vadd.f32 %v228, %v2268
    %v2270 = vpop.f32.mrb[0].mxu0
    %v2271 = vpop.f32.mrb[0].mxu0
    %2272 = vdwg.mxu0
    %v2273 = vxor.u32 %v2226, 2147483648
    %v2274 = vmul.f32 %v2273, 1.442695
    %v2275 = vpow.pop %v2274
    %v2276 = vadd.f32 %v2275, 1.0
    %v2277 = vrcp.pop %v2276
    %v2278 = vmul.f32 1.0, %v2277
    %v2279 = vxor.u32 %v2228, 2147483648
    %v2280 = vmul.f32 %v2279, 1.442695
    %v2281 = vpow.pop %v2280
    %v2282 = vadd.f32 %v2281, 1.0
    %v2283 = vrcp.pop %v2282
    %v2284 = vmul.f32 1.0, %v2283
    %v2285 = vtanh.pop %v2267
    %v2286 = vxor.u32 %v2269, 2147483648
    %v2287 = vmul.f32 %v2286, 1.442695
    %v2288 = vpow.pop %v2287
    %v2289 = vadd.f32 %v2288, 1.0
    %v2290 = vrcp.pop %v2289
    %v2291 = vmul.f32 1.0, %v2290
    %v2292 = vmul.f32 %v2284, %v2078
    %v2293 = vmul.f32 %v2278, %v2285
    %v2294 = vadd.f32 %v2292, %v2293
    %v2295 = vtanh.pop %v2294
    %v2296 = vmul.f32 %v2291, %v2295
    %v2297 = vpack.c.bf16 %v2296, %v2296
    %v2298 = vpack.c.bf16 %v2188, %v2188
    %2299 = vmatprep.subr.bf16.mxu0 %v876
    %2300 = vmatpush1.bf16.msra.mxu0 %v875
    %2301 = vmatprep.subr.bf16.mxu0 %v880
    %2302 = vmatpush1.bf16.msra.mxu0 %v879
    %2303 = vmatprep.subr.bf16.mxu0 %v884
    %2304 = vmatpush1.bf16.msra.mxu0 %v883
    %2305 = vmatprep.subr.bf16.mxu0 %v888
    %2306 = vmatpush1.bf16.msra.mxu0 %v887
    %2307 = vmatprep.subr.bf16.mxu0 %v892
    %2308 = vmatpush1.bf16.msra.mxu0 %v891
    %2309 = vmatprep.subr.bf16.mxu0 %v896
    %2310 = vmatpush1.bf16.msra.mxu0 %v895
    %2311 = vmatprep.subr.bf16.mxu0 %v900
    %2312 = vmatpush1.bf16.msra.mxu0 %v899
    %2313 = vmatprep.subr.bf16.mxu0 %v904
    %2314 = vmatpush1.bf16.msra.mxu0 %v903
    %2315 = vmatprep.subr.bf16.mxu0 %v908
    %2316 = vmatpush1.bf16.msra.mxu0 %v907
    %2317 = vmatprep.subr.bf16.mxu0 %v912
    %2318 = vmatpush1.bf16.msra.mxu0 %v911
    %2319 = vmatprep.subr.bf16.mxu0 %v916
    %2320 = vmatpush1.bf16.msra.mxu0 %v915
    %2321 = vmatprep.subr.bf16.mxu0 %v920
    %2322 = vmatpush1.bf16.msra.mxu0 %v919
    %2323 = vmatprep.subr.bf16.mxu0 %v924
    %2324 = vmatpush1.bf16.msra.mxu0 %v923
    %2325 = vmatprep.subr.bf16.mxu0 %v928
    %2326 = vmatpush1.bf16.msra.mxu0 %v927
    %2327 = vmatprep.subr.bf16.mxu0 %v932
    %2328 = vmatpush1.bf16.msra.mxu0 %v931
    %2329 = vmatprep.subr.bf16.mxu0 %v936
    %2330 = vmatpush1.bf16.msra.mxu0 %v935
    %2331 = vmatprep.mubr.bf16.mxu0 %v2298
    %2332 = vmatmul.mubr.bf16.gmra.mrb[0].mxu0 %v2297
    %v2333 = vpop.f32.mrb[0].mxu0
    %v2334 = vadd.f32 %v238, %v2333
    %v2335 = vpop.f32.mrb[0].mxu0
    %v2336 = vadd.f32 %v242, %v2335
    %v2337 = vpop.f32.mrb[0].mxu0
    %v2338 = vpop.f32.mrb[0].mxu0
    %2339 = vdwg.mxu0
    %2340 = vmatprep.subr.bf16.mxu0 %v878
    %2341 = vmatpush1.bf16.msra.mxu0 %v877
    %2342 = vmatprep.subr.bf16.mxu0 %v882
    %2343 = vmatpush1.bf16.msra.mxu0 %v881
    %2344 = vmatprep.subr.bf16.mxu0 %v886
    %2345 = vmatpush1.bf16.msra.mxu0 %v885
    %2346 = vmatprep.subr.bf16.mxu0 %v890
    %2347 = vmatpush1.bf16.msra.mxu0 %v889
    %2348 = vmatprep.subr.bf16.mxu0 %v894
    %2349 = vmatpush1.bf16.msra.mxu0 %v893
    %2350 = vmatprep.subr.bf16.mxu0 %v898
    %2351 = vmatpush1.bf16.msra.mxu0 %v897
    %2352 = vmatprep.subr.bf16.mxu0 %v902
    %2353 = vmatpush1.bf16.msra.mxu0 %v901
    %2354 = vmatprep.subr.bf16.mxu0 %v906
    %2355 = vmatpush1.bf16.msra.mxu0 %v905
    %2356 = vmatprep.subr.bf16.mxu0 %v910
    %2357 = vmatpush1.bf16.msra.mxu0 %v909
    %2358 = vmatprep.subr.bf16.mxu0 %v914
    %2359 = vmatpush1.bf16.msra.mxu0 %v913
    %2360 = vmatprep.subr.bf16.mxu0 %v918
    %2361 = vmatpush1.bf16.msra.mxu0 %v917
    %2362 = vmatprep.subr.bf16.mxu0 %v922
    %2363 = vmatpush1.bf16.msra.mxu0 %v921
    %2364 = vmatprep.subr.bf16.mxu0 %v926
    %2365 = vmatpush1.bf16.msra.mxu0 %v925
    %2366 = vmatprep.subr.bf16.mxu0 %v930
    %2367 = vmatpush1.bf16.msra.mxu0 %v929
    %2368 = vmatprep.subr.bf16.mxu0 %v934
    %2369 = vmatpush1.bf16.msra.mxu0 %v933
    %2370 = vmatprep.subr.bf16.mxu0 %v938
    %2371 = vmatpush1.bf16.msra.mxu0 %v937
    %2372 = vmatprep.mubr.bf16.mxu0 %v2298
    %2373 = vmatmul.mubr.bf16.gmra.mrb[0].mxu0 %v2297
    %v2374 = vpop.f32.mrb[0].mxu0
    %v2375 = vadd.f32 %v246, %v2374
    %v2376 = vpop.f32.mrb[0].mxu0
    %v2377 = vadd.f32 %v250, %v2376
    %v2378 = vpop.f32.mrb[0].mxu0
    %v2379 = vpop.f32.mrb[0].mxu0
    %2380 = vdwg.mxu0
    %v2381 = vxor.u32 %v2334, 2147483648
    %v2382 = vmul.f32 %v2381, 1.442695
    %v2383 = vpow.pop %v2382
    %v2384 = vadd.f32 %v2383, 1.0
    %v2385 = vrcp.pop %v2384
    %v2386 = vmul.f32 1.0, %v2385
    %v2387 = vxor.u32 %v2336, 2147483648
    %v2388 = vmul.f32 %v2387, 1.442695
    %v2389 = vpow.pop %v2388
    %v2390 = vadd.f32 %v2389, 1.0
    %v2391 = vrcp.pop %v2390
    %v2392 = vmul.f32 1.0, %v2391
    %v2393 = vtanh.pop %v2375
    %v2394 = vxor.u32 %v2377, 2147483648
    %v2395 = vmul.f32 %v2394, 1.442695
    %v2396 = vpow.pop %v2395
    %v2397 = vadd.f32 %v2396, 1.0
    %v2398 = vrcp.pop %v2397
    %v2399 = vmul.f32 1.0, %v2398
    %v2400 = vmul.f32 %v2392, %v2186
    %v2401 = vmul.f32 %v2386, %v2393
    %v2402 = vadd.f32 %v2400, %v2401
    %v2403 = vtanh.pop %v2402
    %v2404 = vmul.f32 %v2399, %v2403
    %s2405 = scalar_lea.vmem [#allocation2], 28
    %v2406 = vld [vmem:[%s2405] sm:$0xf]
    %2407 = vmatprep.subr.bf16.mxu0 %v449
    %2408 = vmatpush1.bf16.msra.mxu0 %v448
    %2409 = vmatprep.subr.bf16.mxu0 %v453
    %2410 = vmatpush1.bf16.msra.mxu0 %v452
    %2411 = vmatprep.subr.bf16.mxu0 %v457
    %2412 = vmatpush1.bf16.msra.mxu0 %v456
    %2413 = vmatprep.subr.bf16.mxu0 %v461
    %2414 = vmatpush1.bf16.msra.mxu0 %v460
    %2415 = vmatprep.subr.bf16.mxu0 %v465
    %2416 = vmatpush1.bf16.msra.mxu0 %v464
    %2417 = vmatprep.subr.bf16.mxu0 %v469
    %2418 = vmatpush1.bf16.msra.mxu0 %v468
    %2419 = vmatprep.subr.bf16.mxu0 %v473
    %2420 = vmatpush1.bf16.msra.mxu0 %v472
    %2421 = vmatprep.subr.bf16.mxu0 %v477
    %2422 = vmatpush1.bf16.msra.mxu0 %v476
    %2423 = vmatprep.subr.bf16.mxu0 %v481
    %2424 = vmatpush1.bf16.msra.mxu0 %v480
    %2425 = vmatprep.subr.bf16.mxu0 %v485
    %2426 = vmatpush1.bf16.msra.mxu0 %v484
    %2427 = vmatprep.subr.bf16.mxu0 %v489
    %2428 = vmatpush1.bf16.msra.mxu0 %v488
    %2429 = vmatprep.subr.bf16.mxu0 %v493
    %2430 = vmatpush1.bf16.msra.mxu0 %v492
    %2431 = vmatprep.subr.bf16.mxu0 %v497
    %2432 = vmatpush1.bf16.msra.mxu0 %v496
    %2433 = vmatprep.subr.bf16.mxu0 %v501
    %2434 = vmatpush1.bf16.msra.mxu0 %v500
    %2435 = vmatprep.subr.bf16.mxu0 %v505
    %2436 = vmatpush1.bf16.msra.mxu0 %v504
    %2437 = vmatprep.subr.bf16.mxu0 %v509
    %2438 = vmatpush1.bf16.msra.mxu0 %v508
    %2439 = vmatprep.mubr.bf16.mxu0 %v2297
    %2440 = vmatmul.mubr.bf16.gmra.mrb[0].mxu0 %v2406
    %v2441 = vpop.f32.mrb[0].mxu0
    %v2442 = vadd.f32 %v216, %v2441
    %v2443 = vpop.f32.mrb[0].mxu0
    %v2444 = vadd.f32 %v220, %v2443
    %v2445 = vpop.f32.mrb[0].mxu0
    %v2446 = vpop.f32.mrb[0].mxu0
    %2447 = vdwg.mxu0
    %2448 = vmatprep.subr.bf16.mxu0 %v451
    %2449 = vmatpush1.bf16.msra.mxu0 %v450
    %2450 = vmatprep.subr.bf16.mxu0 %v455
    %2451 = vmatpush1.bf16.msra.mxu0 %v454
    %2452 = vmatprep.subr.bf16.mxu0 %v459
    %2453 = vmatpush1.bf16.msra.mxu0 %v458
    %2454 = vmatprep.subr.bf16.mxu0 %v463
    %2455 = vmatpush1.bf16.msra.mxu0 %v462
    %2456 = vmatprep.subr.bf16.mxu0 %v467
    %2457 = vmatpush1.bf16.msra.mxu0 %v466
    %2458 = vmatprep.subr.bf16.mxu0 %v471
    %2459 = vmatpush1.bf16.msra.mxu0 %v470
    %2460 = vmatprep.subr.bf16.mxu0 %v475
    %2461 = vmatpush1.bf16.msra.mxu0 %v474
    %2462 = vmatprep.subr.bf16.mxu0 %v479
    %2463 = vmatpush1.bf16.msra.mxu0 %v478
    %2464 = vmatprep.subr.bf16.mxu0 %v483
    %2465 = vmatpush1.bf16.msra.mxu0 %v482
    %2466 = vmatprep.subr.bf16.mxu0 %v487
    %2467 = vmatpush1.bf16.msra.mxu0 %v486
    %2468 = vmatprep.subr.bf16.mxu0 %v491
    %2469 = vmatpush1.bf16.msra.mxu0 %v490
    %2470 = vmatprep.subr.bf16.mxu0 %v495
    %2471 = vmatpush1.bf16.msra.mxu0 %v494
    %2472 = vmatprep.subr.bf16.mxu0 %v499
    %2473 = vmatpush1.bf16.msra.mxu0 %v498
    %2474 = vmatprep.subr.bf16.mxu0 %v503
    %2475 = vmatpush1.bf16.msra.mxu0 %v502
    %2476 = vmatprep.subr.bf16.mxu0 %v507
    %2477 = vmatpush1.bf16.msra.mxu0 %v506
    %2478 = vmatprep.subr.bf16.mxu0 %v511
    %2479 = vmatpush1.bf16.msra.mxu0 %v510
    %2480 = vmatprep.mubr.bf16.mxu0 %v2297
    %2481 = vmatmul.mubr.bf16.gmra.mrb[0].mxu0 %v2406
    %v2482 = vpop.f32.mrb[0].mxu0
    %v2483 = vadd.f32 %v224, %v2482
    %v2484 = vpop.f32.mrb[0].mxu0
    %v2485 = vadd.f32 %v228, %v2484
    %v2486 = vpop.f32.mrb[0].mxu0
    %v2487 = vpop.f32.mrb[0].mxu0
    %2488 = vdwg.mxu0
    %v2489 = vxor.u32 %v2442, 2147483648
    %v2490 = vmul.f32 %v2489, 1.442695
    %v2491 = vpow.pop %v2490
    %v2492 = vadd.f32 %v2491, 1.0
    %v2493 = vrcp.pop %v2492
    %v2494 = vmul.f32 1.0, %v2493
    %v2495 = vxor.u32 %v2444, 2147483648
    %v2496 = vmul.f32 %v2495, 1.442695
    %v2497 = vpow.pop %v2496
    %v2498 = vadd.f32 %v2497, 1.0
    %v2499 = vrcp.pop %v2498
    %v2500 = vmul.f32 1.0, %v2499
    %v2501 = vtanh.pop %v2483
    %v2502 = vxor.u32 %v2485, 2147483648
    %v2503 = vmul.f32 %v2502, 1.442695
    %v2504 = vpow.pop %v2503
    %v2505 = vadd.f32 %v2504, 1.0
    %v2506 = vrcp.pop %v2505
    %v2507 = vmul.f32 1.0, %v2506
    %v2508 = vmul.f32 %v2500, %v2294
    %v2509 = vmul.f32 %v2494, %v2501
    %v2510 = vadd.f32 %v2508, %v2509
    %v2511 = vtanh.pop %v2510
    %v2512 = vmul.f32 %v2507, %v2511
    %v2513 = vpack.c.bf16 %v2512, %v2512
    %v2514 = vpack.c.bf16 %v2404, %v2404
    %2515 = vmatprep.subr.bf16.mxu0 %v876
    %2516 = vmatpush1.bf16.msra.mxu0 %v875
    %2517 = vmatprep.subr.bf16.mxu0 %v880
    %2518 = vmatpush1.bf16.msra.mxu0 %v879
    %2519 = vmatprep.subr.bf16.mxu0 %v884
    %2520 = vmatpush1.bf16.msra.mxu0 %v883
    %2521 = vmatprep.subr.bf16.mxu0 %v888
    %2522 = vmatpush1.bf16.msra.mxu0 %v887
    %2523 = vmatprep.subr.bf16.mxu0 %v892
    %2524 = vmatpush1.bf16.msra.mxu0 %v891
    %2525 = vmatprep.subr.bf16.mxu0 %v896
    %2526 = vmatpush1.bf16.msra.mxu0 %v895
    %2527 = vmatprep.subr.bf16.mxu0 %v900
    %2528 = vmatpush1.bf16.msra.mxu0 %v899
    %2529 = vmatprep.subr.bf16.mxu0 %v904
    %2530 = vmatpush1.bf16.msra.mxu0 %v903
    %2531 = vmatprep.subr.bf16.mxu0 %v908
    %2532 = vmatpush1.bf16.msra.mxu0 %v907
    %2533 = vmatprep.subr.bf16.mxu0 %v912
    %2534 = vmatpush1.bf16.msra.mxu0 %v911
    %2535 = vmatprep.subr.bf16.mxu0 %v916
    %2536 = vmatpush1.bf16.msra.mxu0 %v915
    %2537 = vmatprep.subr.bf16.mxu0 %v920
    %2538 = vmatpush1.bf16.msra.mxu0 %v919
    %2539 = vmatprep.subr.bf16.mxu0 %v924
    %2540 = vmatpush1.bf16.msra.mxu0 %v923
    %2541 = vmatprep.subr.bf16.mxu0 %v928
    %2542 = vmatpush1.bf16.msra.mxu0 %v927
    %2543 = vmatprep.subr.bf16.mxu0 %v932
    %2544 = vmatpush1.bf16.msra.mxu0 %v931
    %2545 = vmatprep.subr.bf16.mxu0 %v936
    %2546 = vmatpush1.bf16.msra.mxu0 %v935
    %2547 = vmatprep.mubr.bf16.mxu0 %v2514
    %2548 = vmatmul.mubr.bf16.gmra.mrb[0].mxu0 %v2513
    %v2549 = vpop.f32.mrb[0].mxu0
    %v2550 = vadd.f32 %v238, %v2549
    %v2551 = vpop.f32.mrb[0].mxu0
    %v2552 = vadd.f32 %v242, %v2551
    %v2553 = vpop.f32.mrb[0].mxu0
    %v2554 = vpop.f32.mrb[0].mxu0
    %2555 = vdwg.mxu0
    %2556 = vmatprep.subr.bf16.mxu0 %v878
    %2557 = vmatpush1.bf16.msra.mxu0 %v877
    %2558 = vmatprep.subr.bf16.mxu0 %v882
    %2559 = vmatpush1.bf16.msra.mxu0 %v881
    %2560 = vmatprep.subr.bf16.mxu0 %v886
    %2561 = vmatpush1.bf16.msra.mxu0 %v885
    %2562 = vmatprep.subr.bf16.mxu0 %v890
    %2563 = vmatpush1.bf16.msra.mxu0 %v889
    %2564 = vmatprep.subr.bf16.mxu0 %v894
    %2565 = vmatpush1.bf16.msra.mxu0 %v893
    %2566 = vmatprep.subr.bf16.mxu0 %v898
    %2567 = vmatpush1.bf16.msra.mxu0 %v897
    %2568 = vmatprep.subr.bf16.mxu0 %v902
    %2569 = vmatpush1.bf16.msra.mxu0 %v901
    %2570 = vmatprep.subr.bf16.mxu0 %v906
    %2571 = vmatpush1.bf16.msra.mxu0 %v905
    %2572 = vmatprep.subr.bf16.mxu0 %v910
    %2573 = vmatpush1.bf16.msra.mxu0 %v909
    %2574 = vmatprep.subr.bf16.mxu0 %v914
    %2575 = vmatpush1.bf16.msra.mxu0 %v913
    %2576 = vmatprep.subr.bf16.mxu0 %v918
    %2577 = vmatpush1.bf16.msra.mxu0 %v917
    %2578 = vmatprep.subr.bf16.mxu0 %v922
    %2579 = vmatpush1.bf16.msra.mxu0 %v921
    %2580 = vmatprep.subr.bf16.mxu0 %v926
    %2581 = vmatpush1.bf16.msra.mxu0 %v925
    %2582 = vmatprep.subr.bf16.mxu0 %v930
    %2583 = vmatpush1.bf16.msra.mxu0 %v929
    %2584 = vmatprep.subr.bf16.mxu0 %v934
    %2585 = vmatpush1.bf16.msra.mxu0 %v933
    %2586 = vmatprep.subr.bf16.mxu0 %v938
    %2587 = vmatpush1.bf16.msra.mxu0 %v937
    %2588 = vmatprep.mubr.bf16.mxu0 %v2514
    %2589 = vmatmul.mubr.bf16.gmra.mrb[0].mxu0 %v2513
    %v2590 = vpop.f32.mrb[0].mxu0
    %v2591 = vadd.f32 %v246, %v2590
    %v2592 = vpop.f32.mrb[0].mxu0
    %v2593 = vadd.f32 %v250, %v2592
    %v2594 = vpop.f32.mrb[0].mxu0
    %v2595 = vpop.f32.mrb[0].mxu0
    %2596 = vdwg.mxu0
    %v2597 = vxor.u32 %v2550, 2147483648
    %v2598 = vmul.f32 %v2597, 1.442695
    %v2599 = vpow.pop %v2598
    %v2600 = vadd.f32 %v2599, 1.0
    %v2601 = vrcp.pop %v2600
    %v2602 = vmul.f32 1.0, %v2601
    %v2603 = vxor.u32 %v2552, 2147483648
    %v2604 = vmul.f32 %v2603, 1.442695
    %v2605 = vpow.pop %v2604
    %v2606 = vadd.f32 %v2605, 1.0
    %v2607 = vrcp.pop %v2606
    %v2608 = vmul.f32 1.0, %v2607
    %v2609 = vtanh.pop %v2591
    %v2610 = vxor.u32 %v2593, 2147483648
    %v2611 = vmul.f32 %v2610, 1.442695
    %v2612 = vpow.pop %v2611
    %v2613 = vadd.f32 %v2612, 1.0
    %v2614 = vrcp.pop %v2613
    %v2615 = vmul.f32 1.0, %v2614
    %v2616 = vmul.f32 %v2608, %v2402
    %v2617 = vmul.f32 %v2602, %v2609
    %v2618 = vadd.f32 %v2616, %v2617
    %v2619 = vtanh.pop %v2618
    %v2620 = vmul.f32 %v2615, %v2619
    %v2621 = vpack.c.bf16 %v2620, %v2620
    %v2622 = vld [vmem:[#allocation8] sm:$0xf]
    %v2623 = vld [vmem:[#allocation8 + $0x4] sm:$0xf]
    %v2624 = vld [vmem:[#allocation8 + $0x8] sm:$0xf]
    %v2625 = vld [vmem:[#allocation8 + $0xc] sm:$0xf]
    %v2626 = vld [vmem:[#allocation8 + $0x10] sm:$0xf]
    %v2627 = vld [vmem:[#allocation8 + $0x14] sm:$0xf]
    %v2628 = vld [vmem:[#allocation8 + $0x18] sm:$0xf]
    %v2629 = vld [vmem:[#allocation8 + $0x1c] sm:$0xf]
    %v2630 = vld [vmem:[#allocation8 + $0x20] sm:$0xf]
    %v2631 = vld [vmem:[#allocation8 + $0x24] sm:$0xf]
    %v2632 = vld [vmem:[#allocation8 + $0x28] sm:$0xf]
    %v2633 = vld [vmem:[#allocation8 + $0x2c] sm:$0xf]
    %v2634 = vld [vmem:[#allocation8 + $0x30] sm:$0xf]
    %v2635 = vld [vmem:[#allocation8 + $0x34] sm:$0xf]
    %v2636 = vld [vmem:[#allocation8 + $0x38] sm:$0xf]
    %v2637 = vld [vmem:[#allocation8 + $0x3c] sm:$0xf]
    %v2638 = vld [vmem:[%s6] sm:$0x1]
    %v2640 = vlaneseq
    %v2641 = vshrl.u32 %v2640, 7
    %v2642 = vsub.s32 0, %v2641
    %v2643 = vrot.slane %v2638, %v2642
    %v2661 = vunpack.c.l.b16 %v2622
    %v2662 = vunpack.c.l.b16 %v2623
    %v2663 = vunpack.c.l.b16 %v2624
    %v2664 = vunpack.c.l.b16 %v2625
    %v2665 = vunpack.c.l.b16 %v2626
    %v2666 = vunpack.c.l.b16 %v2627
    %v2667 = vunpack.c.l.b16 %v2628
    %v2668 = vunpack.c.l.b16 %v2629
    %v2669 = vunpack.c.l.b16 %v2630
    %v2670 = vunpack.c.l.b16 %v2631
    %v2671 = vunpack.c.l.b16 %v2632
    %v2672 = vunpack.c.l.b16 %v2633
    %v2673 = vunpack.c.l.b16 %v2634
    %v2674 = vunpack.c.l.b16 %v2635
    %v2675 = vunpack.c.l.b16 %v2636
    %v2676 = vunpack.c.l.b16 %v2637
    %v2677 = vpack.c.b16 %v2662, %v2661
    %v2678 = vpack.c.b16 %v2664, %v2663
    %v2679 = vpack.c.b16 %v2666, %v2665
    %v2680 = vpack.c.b16 %v2668, %v2667
    %v2681 = vpack.c.b16 %v2670, %v2669
    %v2682 = vpack.c.b16 %v2672, %v2671
    %v2683 = vpack.c.b16 %v2674, %v2673
    %v2684 = vpack.c.b16 %v2676, %v2675
    %2693 = vmatprep.subr.bf16.mxu0 0
    %2694 = vmatpush1.bf16.msra.mxu0 %v2677
    %2695 = vmatprep.subr.bf16.mxu0 0
    %2696 = vmatpush1.bf16.msra.mxu0 %v2678
    %2697 = vmatprep.subr.bf16.mxu0 0
    %2698 = vmatpush1.bf16.msra.mxu0 %v2679
    %2699 = vmatprep.subr.bf16.mxu0 0
    %2700 = vmatpush1.bf16.msra.mxu0 %v2680
    %2701 = vmatprep.subr.bf16.mxu0 0
    %2702 = vmatpush1.bf16.msra.mxu0 %v2681
    %2703 = vmatprep.subr.bf16.mxu0 0
    %2704 = vmatpush1.bf16.msra.mxu0 %v2682
    %2705 = vmatprep.subr.bf16.mxu0 0
    %2706 = vmatpush1.bf16.msra.mxu0 %v2683
    %2707 = vmatprep.subr.bf16.mxu0 0
    %2708 = vmatpush1.bf16.msra.mxu0 %v2684
    %2709 = vmatprep.subr.bf16.mxu0 0
    %2710 = vmatpush1.bf16.msra.mxu0 0
    %2711 = vmatprep.subr.bf16.mxu0 0
    %2712 = vmatpush1.bf16.msra.mxu0 0
    %2713 = vmatprep.subr.bf16.mxu0 0
    %2714 = vmatpush1.bf16.msra.mxu0 0
    %2715 = vmatprep.subr.bf16.mxu0 0
    %2716 = vmatpush1.bf16.msra.mxu0 0
    %2717 = vmatprep.subr.bf16.mxu0 0
    %2718 = vmatpush1.bf16.msra.mxu0 0
    %2719 = vmatprep.subr.bf16.mxu0 0
    %2720 = vmatpush1.bf16.msra.mxu0 0
    %2721 = vmatprep.subr.bf16.mxu0 0
    %2722 = vmatpush1.bf16.msra.mxu0 0
    %2723 = vmatprep.subr.bf16.mxu0 0
    %2724 = vmatpush1.bf16.msra.mxu0 0
    %2725 = vmatprep.mubr.bf16.mxu0 0
    %2726 = vmatmul.mubr.bf16.gmra.mrb[0].mxu0 %v2621
    %v2727 = vpop.f32.mrb[0].mxu0
    %v2728 = vadd.f32 %v2643, %v2727
    %v2729 = vpop.f32.mrb[0].mxu0
    %v2730 = vpop.f32.mrb[0].mxu0
    %v2731 = vpop.f32.mrb[0].mxu0
    %2732 = vdwg.mxu0
    %2733 = vst [vmem:[#allocation10] sm:$0xff] %v2728
    // Predicated region
    $region46: #{tpu_custom_call.1} parent=1 // pred_check
      _
    $region47: #{tpu_custom_call.1} parent=1 // pred_check_branch
      %2735 = sbr.rel (0) target = $region49
    $region48: #{tpu_custom_call.1} parent=1 // pred_region
      %s2737 = ssub.s32 128, 128
      %2738 = vsyncadd [#allocation4], %s2737
      %s2740 = sshll.u32 [#allocation10], 4
      %s2741 = int_to_ptr.vmem [resolvable:$true] %s2740
      %2743 = dma.vmem_to_hbm [thread:$0]  %s2741, 128, %s7, [#allocation4]
    $region49: #{tpu_custom_call.1} parent=1 // pred_fallthru
      _
    // Predicated region
    $region50: #{tpu_custom_call.1} parent=1 // pred_check
      _
    $region51: #{tpu_custom_call.1} parent=1 // pred_check_branch
      %2745 = sbr.rel (0) target = $region53
    $region52: #{tpu_custom_call.1} parent=1 // pred_region
      %2746 = dma.done [#allocation4], 128
    $region53: #{tpu_custom_call.1} parent=1 // pred_fallthru
      _
    %2747 = vsyncpa [#allocation3], 1
    %2748 = vsyncpa [#allocation6], 1
    %2749 = vsyncpa [#allocation9], 1
    %2750 = vsyncpa [#allocation4], 1

</llo_original>
